<compile_context>
chip_gen: v7x
topology: tpu7x:2x2x1
jax: 0.10.0
libtpu: 0.0.40
codegen_flags: <defaults>
</compile_context>

<pallas_src>
import functools

import jax
import jax.numpy as jnp
from jax.experimental import pallas as pl
from jax.experimental.pallas import tpu as pltpu


def _rdb_conv_kernel(x_ref, top_ref, bot_ref, w_ref, b_ref, o_ref, *,
                     W, Cin, G, TH, compute_dtype):
    """One (TH, W) row tile of: out = concat([x, relu(conv3x3(x) + b)], channel-last).

    x_ref  : (TH, W, Cin)    current row tile (storage dtype)
    top_ref: (1, W, Cin)     row above the tile (clamped at the image border)
    bot_ref: (1, W, Cin)     row below the tile (clamped at the image border)
    w_ref  : (9, Cin, G)     conv weight, tap-major (kh*3+kw), compute dtype
    b_ref  : (1, G)          bias, float32
    o_ref  : (TH, W, Cin+G)  fused output tile (storage dtype)
    """
    h = pl.program_id(1)
    nh = pl.num_programs(1)

    core = x_ref[...]                                            # (TH, W, Cin)
    top = top_ref[...]
    bot = bot_ref[...]
    # Halo rows arrive via the BlockSpec pipeline; zero them at the image borders to
    # realize the conv's zero padding (no unaligned in-kernel halo loads).
    top = jnp.where(h > 0, top, jnp.zeros_like(top))
    bot = jnp.where(h < nh - 1, bot, jnp.zeros_like(bot))

    # (TH+2, W+2, Cin) zero-padded tile built in VMEM (no jnp.pad round trip in HBM).
    rows = jnp.concatenate([top, core, bot], axis=0).astype(compute_dtype)
    zpad = jnp.zeros((TH + 2, 1, Cin), dtype=compute_dtype)
    xp = jnp.concatenate([zpad, rows, zpad], axis=1)             # (TH+2, W+2, Cin)

    # 3x3 conv as 9 tap-wise accumulating MXU matmuls into a single f32 accumulator
    # (no materialized (TH*W, 9*Cin) im2col patch buffer).
    acc = jnp.zeros((TH * W, G), dtype=jnp.float32)
    for kh in range(3):
        for kw in range(3):
            a = xp[kh:kh + TH, kw:kw + W, :].reshape(TH * W, Cin)
            acc = acc + jnp.dot(a, w_ref[kh * 3 + kw],
                                preferred_element_type=jnp.float32)

    y = jnp.maximum(acc + b_ref[...], 0.0)                       # f32 bias + ReLU (v5e-safe)

    # Fused channel concat: passthrough stored untouched (no dtype round trip, no
    # relayout on passthrough data); only the conv half is reshaped/cast.
    o_ref[:, :, :Cin] = core
    o_ref[:, :, Cin:] = y.reshape(TH, W, G).astype(o_ref.dtype)


def _pick_tile_h(H, tile_h):
    """Largest divisor of H that is <= tile_h, preferring multiples of 8."""
    cap = max(1, min(tile_h, H))
    fallback = None
    for th in range(cap, 0, -1):
        if H % th == 0:
            if th % 8 == 0:
                return th
            if fallback is None:
                fallback = th
    return fallback if fallback is not None else H


def _vmem_estimate(TH, W, Cin, G, x_bytes, c_bytes):
    """Rough per-grid-step VMEM footprint: double-buffered blocks + in-kernel temps."""
    Cout = Cin + G
    blocks = (TH + 2) * W * Cin * x_bytes + TH * W * Cout * x_bytes
    temps = ((TH + 2) * (W + 2) * Cin + 2 * TH * W * Cin) * c_bytes + TH * W * G * 4
    weights = 9 * Cin * G * c_bytes + 4 * 128
    return 2 * blocks + temps + weights


def rdb_conv_nhwc(x_nhwc, weight_hwio, bias, *, tile_h=32,
                  compute_dtype=jnp.bfloat16):
    """NHWC RDB_Conv: returns concat([x, relu(conv3x3(x) + b)], axis=-1).

    compute_dtype controls only the MXU operand dtype (bf16 by default, f32 accumulation
    and f32 epilogue always); the output and the x passthrough keep x's dtype so the
    skip connection is exact, matching the PyTorch module.
    """
    N, H, W, Cin = x_nhwc.shape
    kh, kw, wc, G = weight_hwio.shape
    assert (kh, kw) == (3, 3) and wc == Cin, "kernel implemented for kSize=3"
    Cout = Cin + G
    out_dtype = x_nhwc.dtype

    x_bytes = jnp.dtype(out_dtype).itemsize
    c_bytes = jnp.dtype(compute_dtype).itemsize

    # Row tile: big enough to amortize the ~0.35us per-step overhead, small enough that
    # per-step VMEM stays bounded (v7x has only 64 MiB physical VMEM).
    TH = _pick_tile_h(H, tile_h)
    while TH > 8 and _vmem_estimate(TH, W, Cin, G, x_bytes, c_bytes) > 24 * 2**20:
        nxt = _pick_tile_h(H, max(8, TH // 2))
        if nxt >= TH:
            break
        TH = nxt
    nh = H // TH

    w9 = weight_hwio.reshape(9, Cin, G).astype(compute_dtype)    # tap-major weight
    b2 = bias.reshape(1, G).astype(jnp.float32)

    kernel = functools.partial(_rdb_conv_kernel, W=W, Cin=Cin, G=G, TH=TH,
                               compute_dtype=compute_dtype)

    est = _vmem_estimate(TH, W, Cin, G, x_bytes, c_bytes)
    vmem_limit = int(min(64 * 2**20, max(32 * 2**20, 2 * est)))

    cost = pl.CostEstimate(
        flops=2 * N * H * W * 9 * Cin * G,
        transcendentals=0,
        bytes_accessed=int(N * H * W * Cin * x_bytes + 9 * Cin * G * c_bytes
                           + G * 4 + N * H * W * Cout * x_bytes),
    )

    out = pl.pallas_call(
        kernel,
        out_shape=jax.ShapeDtypeStruct((N, H, W, Cout), out_dtype),
        grid_spec=pltpu.PrefetchScalarGridSpec(
            num_scalar_prefetch=0,
            grid=(N, nh),
            in_specs=[
                # current row tile
                pl.BlockSpec((None, TH, W, Cin), lambda n, h: (n, h, 0, 0)),
                # 1-row halos above / below, clamped at the image border
                pl.BlockSpec((None, 1, W, Cin),
                             lambda n, h: (n, jnp.maximum(h * TH - 1, 0), 0, 0)),
                pl.BlockSpec((None, 1, W, Cin),
                             lambda n, h: (n, jnp.minimum((h + 1) * TH, H - 1), 0, 0)),
                # conv weight + bias: constant index_map -> resident across the grid
                pl.BlockSpec((9, Cin, G), lambda n, h: (0, 0, 0)),
                pl.BlockSpec((1, G), lambda n, h: (0, 0)),
            ],
            out_specs=pl.BlockSpec((None, TH, W, Cout), lambda n, h: (n, h, 0, 0)),
        ),
        compiler_params=pltpu.CompilerParams(
            dimension_semantics=("parallel", "parallel"),
            vmem_limit_bytes=vmem_limit),
        cost_estimate=cost,
    )(x_nhwc, x_nhwc, x_nhwc, w9, b2)

    return out


def rdb_conv_forward(x_nchw, weight_hwio, bias, *, ksize=3, tile_h=32,
                     compute_dtype=jnp.bfloat16):
    """NCHW wrapper matching the PyTorch RDB_Conv forward: torch.cat((x, conv(x)), 1).

    A full RDN should call rdb_conv_nhwc directly and stay NHWC end-to-end; these two
    transposes exist only for parity with the NCHW PyTorch interface.
    """
    assert ksize == 3, "kernel implemented for kSize=3"
    x_nhwc = jnp.transpose(x_nchw, (0, 2, 3, 1))
    out_nhwc = rdb_conv_nhwc(x_nhwc, weight_hwio, bias,
                             tile_h=tile_h, compute_dtype=compute_dtype)
    return jnp.transpose(out_nhwc, (0, 3, 1, 2))


def _reference(x_nchw, weight_hwio, bias):
    # pure-JAX reference (lax conv) for correctness check
    w_oihw = jnp.transpose(weight_hwio, (3, 2, 0, 1))  # HWIO -> OIHW
    out = jax.lax.conv_general_dilated(
        x_nchw, w_oihw, window_strides=(1, 1), padding="SAME",
        dimension_numbers=("NCHW", "OIHW", "NCHW"))
    out = out + bias[None, :, None, None]
    out = jnp.maximum(out, 0.0)
    return jnp.concatenate([x_nchw, out], axis=1)


if __name__ == "__main__":
    key = jax.random.PRNGKey(0)
    k_x, k_w, k_b = jax.random.split(key, 3)

    # small shapes consistent with the module: Cin=4, growRate G=8, kSize=3
    N, Cin, H, W = 2, 4, 16, 16
    G, kSize = 8, 3

    x = jax.random.normal(k_x, (N, Cin, H, W), dtype=jnp.float32)
    fan_in = Cin * kSize * kSize
    bound = 1.0 / (fan_in ** 0.5)
    weight = jax.random.uniform(k_w, (kSize, kSize, Cin, G),
                                minval=-bound, maxval=bound, dtype=jnp.float32)
    bias = jax.random.uniform(k_b, (G,), minval=-bound, maxval=bound,
                              dtype=jnp.float32)

    ref = _reference(x, weight, bias)

    # exact-precision path
    out_f32 = jax.block_until_ready(
        rdb_conv_forward(x, weight, bias, compute_dtype=jnp.float32))
    assert out_f32.shape == (N, Cin + G, H, W), out_f32.shape
    assert jnp.allclose(out_f32, ref, atol=1e-5, rtol=1e-5), "f32 mismatch vs reference"

    # default path: bf16 MXU operands, f32 accumulation + epilogue, exact f32 passthrough
    out_def = jax.block_until_ready(rdb_conv_forward(x, weight, bias))
    assert out_def.dtype == x.dtype
    assert bool(jnp.all(out_def[:, :Cin] == x)), "x passthrough must be bit-exact"
    assert jnp.allclose(out_def, ref, atol=5e-2, rtol=5e-2), "bf16 mismatch vs reference"

    print("KERNEL_OK")
</pallas_src>

<mosaic_0001>
module attributes {stable_mosaic.version = 11 : i64} {
  func.func @_rdb_conv_kernel(%arg0: i32, %arg1: i32, %arg2: memref<1x16x16x4xf32, #tpu.memory_space<vmem>>, %arg3: memref<1x1x16x4xf32, #tpu.memory_space<vmem>>, %arg4: memref<1x1x16x4xf32, #tpu.memory_space<vmem>>, %arg5: memref<9x4x8xf32, #tpu.memory_space<vmem>>, %arg6: memref<1x8xf32, #tpu.memory_space<vmem>>, %arg7: memref<1x16x16x12xf32, #tpu.memory_space<vmem>>) attributes {dimension_semantics = [#tpu.dimension_semantics<parallel>, #tpu.dimension_semantics<parallel>], iteration_bounds = array<i64: 2, 1>, scalar_prefetch = 0 : i64, scratch_operands = 0 : i64, tpu.core_type = #tpu.core_type<tc>, window_params = [{transform_indices = @transform_0, window_bounds = array<i64: 1, 16, 16, 4>}, {transform_indices = @transform_1, window_bounds = array<i64: 1, 1, 16, 4>}, {transform_indices = @transform_2, window_bounds = array<i64: 1, 1, 16, 4>}, {pipeline_mode = #tpu.pipeline_mode<synchronous>, transform_indices = @transform_3, window_bounds = array<i64: 9, 4, 8>}, {pipeline_mode = #tpu.pipeline_mode<synchronous>, transform_indices = @transform_4, window_bounds = array<i64: 1, 8>}, {transform_indices = @transform_5, window_bounds = array<i64: 1, 16, 16, 12>}]} {
    %c0 = arith.constant 0 : index
    %c0_0 = arith.constant 0 : index
    %c0_1 = arith.constant 0 : index
    %c0_2 = arith.constant 0 : index
    %0 = vector.load %arg2[%c0, %c0_0, %c0_1, %c0_2] : memref<1x16x16x4xf32, #tpu.memory_space<vmem>>, vector<1x16x16x4xf32>
    %1 = vector.shape_cast %0 : vector<1x16x16x4xf32> to vector<16x16x4xf32>
    %c0_3 = arith.constant 0 : index
    %c0_4 = arith.constant 0 : index
    %c0_5 = arith.constant 0 : index
    %c0_6 = arith.constant 0 : index
    %2 = vector.load %arg3[%c0_3, %c0_4, %c0_5, %c0_6] : memref<1x1x16x4xf32, #tpu.memory_space<vmem>>, vector<1x1x16x4xf32>
    %3 = vector.shape_cast %2 : vector<1x1x16x4xf32> to vector<1x16x4xf32>
    %c0_7 = arith.constant 0 : index
    %c0_8 = arith.constant 0 : index
    %c0_9 = arith.constant 0 : index
    %c0_10 = arith.constant 0 : index
    %4 = vector.load %arg4[%c0_7, %c0_8, %c0_9, %c0_10] : memref<1x1x16x4xf32, #tpu.memory_space<vmem>>, vector<1x1x16x4xf32>
    %5 = vector.shape_cast %4 : vector<1x1x16x4xf32> to vector<1x16x4xf32>
    %c0_i32 = arith.constant 0 : i32
    %6 = arith.cmpi sgt, %arg1, %c0_i32 : i32
    %cst = arith.constant 0.000000e+00 : f32
    %7 = vector.broadcast %cst : f32 to vector<1x16x4xf32>
    %8 = arith.select %6, %3, %7 : vector<1x16x4xf32>
    %c0_i32_11 = arith.constant 0 : i32
    %9 = arith.cmpi slt, %arg1, %c0_i32_11 : i32
    %cst_12 = arith.constant 0.000000e+00 : f32
    %10 = vector.broadcast %cst_12 : f32 to vector<1x16x4xf32>
    %11 = arith.select %9, %5, %10 : vector<1x16x4xf32>
    %12 = tpu.concatenate %8, %1, %11 in 0 : vector<1x16x4xf32>, vector<16x16x4xf32>, vector<1x16x4xf32> -> vector<18x16x4xf32>
    %cst_13 = arith.constant 0.000000e+00 : f32
    %13 = vector.broadcast %cst_13 : f32 to vector<18x1x4xf32>
    %14 = tpu.concatenate %13, %12, %13 in 1 : vector<18x1x4xf32>, vector<18x16x4xf32>, vector<18x1x4xf32> -> vector<18x18x4xf32>
    %cst_14 = arith.constant 0.000000e+00 : f32
    %15 = vector.broadcast %cst_14 : f32 to vector<256x8xf32>
    %16 = vector.extract_strided_slice %14 {offsets = [0, 0, 0], sizes = [16, 16, 4], strides = [1, 1, 1]} : vector<18x18x4xf32> to vector<16x16x4xf32>
    %17 = vector.shape_cast %16 : vector<16x16x4xf32> to vector<256x4xf32>
    %c0_15 = arith.constant 0 : index
    %c0_16 = arith.constant 0 : index
    %c0_17 = arith.constant 0 : index
    %18 = vector.load %arg5[%c0_15, %c0_16, %c0_17] : memref<9x4x8xf32, #tpu.memory_space<vmem>>, vector<1x4x8xf32>
    %19 = vector.shape_cast %18 : vector<1x4x8xf32> to vector<4x8xf32>
    %cst_18 = arith.constant dense<0.000000e+00> : vector<256x8xf32>
    %20 = tpu.matmul %17, %19, %cst_18 {dimension_numbers = #tpu.dot_dimension_numbers<[1], [0], [0], [1], [0, 0, 1, 1], [], []>} : vector<256x4xf32>, vector<4x8xf32>, vector<256x8xf32> -> vector<256x8xf32>
    %21 = arith.addf %15, %20 : vector<256x8xf32>
    %22 = vector.extract_strided_slice %14 {offsets = [0, 1, 0], sizes = [16, 16, 4], strides = [1, 1, 1]} : vector<18x18x4xf32> to vector<16x16x4xf32>
    %23 = vector.shape_cast %22 : vector<16x16x4xf32> to vector<256x4xf32>
    %c1 = arith.constant 1 : index
    %c0_19 = arith.constant 0 : index
    %c0_20 = arith.constant 0 : index
    %24 = vector.load %arg5[%c1, %c0_19, %c0_20] : memref<9x4x8xf32, #tpu.memory_space<vmem>>, vector<1x4x8xf32>
    %25 = vector.shape_cast %24 : vector<1x4x8xf32> to vector<4x8xf32>
    %cst_21 = arith.constant dense<0.000000e+00> : vector<256x8xf32>
    %26 = tpu.matmul %23, %25, %cst_21 {dimension_numbers = #tpu.dot_dimension_numbers<[1], [0], [0], [1], [0, 0, 1, 1], [], []>} : vector<256x4xf32>, vector<4x8xf32>, vector<256x8xf32> -> vector<256x8xf32>
    %27 = arith.addf %21, %26 : vector<256x8xf32>
    %28 = vector.extract_strided_slice %14 {offsets = [0, 2, 0], sizes = [16, 16, 4], strides = [1, 1, 1]} : vector<18x18x4xf32> to vector<16x16x4xf32>
    %29 = vector.shape_cast %28 : vector<16x16x4xf32> to vector<256x4xf32>
    %c2 = arith.constant 2 : index
    %c0_22 = arith.constant 0 : index
    %c0_23 = arith.constant 0 : index
    %30 = vector.load %arg5[%c2, %c0_22, %c0_23] : memref<9x4x8xf32, #tpu.memory_space<vmem>>, vector<1x4x8xf32>
    %31 = vector.shape_cast %30 : vector<1x4x8xf32> to vector<4x8xf32>
    %cst_24 = arith.constant dense<0.000000e+00> : vector<256x8xf32>
    %32 = tpu.matmul %29, %31, %cst_24 {dimension_numbers = #tpu.dot_dimension_numbers<[1], [0], [0], [1], [0, 0, 1, 1], [], []>} : vector<256x4xf32>, vector<4x8xf32>, vector<256x8xf32> -> vector<256x8xf32>
    %33 = arith.addf %27, %32 : vector<256x8xf32>
    %34 = vector.extract_strided_slice %14 {offsets = [1, 0, 0], sizes = [16, 16, 4], strides = [1, 1, 1]} : vector<18x18x4xf32> to vector<16x16x4xf32>
    %35 = vector.shape_cast %34 : vector<16x16x4xf32> to vector<256x4xf32>
    %c3 = arith.constant 3 : index
    %c0_25 = arith.constant 0 : index
    %c0_26 = arith.constant 0 : index
    %36 = vector.load %arg5[%c3, %c0_25, %c0_26] : memref<9x4x8xf32, #tpu.memory_space<vmem>>, vector<1x4x8xf32>
    %37 = vector.shape_cast %36 : vector<1x4x8xf32> to vector<4x8xf32>
    %cst_27 = arith.constant dense<0.000000e+00> : vector<256x8xf32>
    %38 = tpu.matmul %35, %37, %cst_27 {dimension_numbers = #tpu.dot_dimension_numbers<[1], [0], [0], [1], [0, 0, 1, 1], [], []>} : vector<256x4xf32>, vector<4x8xf32>, vector<256x8xf32> -> vector<256x8xf32>
    %39 = arith.addf %33, %38 : vector<256x8xf32>
    %40 = vector.extract_strided_slice %14 {offsets = [1, 1, 0], sizes = [16, 16, 4], strides = [1, 1, 1]} : vector<18x18x4xf32> to vector<16x16x4xf32>
    %41 = vector.shape_cast %40 : vector<16x16x4xf32> to vector<256x4xf32>
    %c4 = arith.constant 4 : index
    %c0_28 = arith.constant 0 : index
    %c0_29 = arith.constant 0 : index
    %42 = vector.load %arg5[%c4, %c0_28, %c0_29] : memref<9x4x8xf32, #tpu.memory_space<vmem>>, vector<1x4x8xf32>
    %43 = vector.shape_cast %42 : vector<1x4x8xf32> to vector<4x8xf32>
    %cst_30 = arith.constant dense<0.000000e+00> : vector<256x8xf32>
    %44 = tpu.matmul %41, %43, %cst_30 {dimension_numbers = #tpu.dot_dimension_numbers<[1], [0], [0], [1], [0, 0, 1, 1], [], []>} : vector<256x4xf32>, vector<4x8xf32>, vector<256x8xf32> -> vector<256x8xf32>
    %45 = arith.addf %39, %44 : vector<256x8xf32>
    %46 = vector.extract_strided_slice %14 {offsets = [1, 2, 0], sizes = [16, 16, 4], strides = [1, 1, 1]} : vector<18x18x4xf32> to vector<16x16x4xf32>
    %47 = vector.shape_cast %46 : vector<16x16x4xf32> to vector<256x4xf32>
    %c5 = arith.constant 5 : index
    %c0_31 = arith.constant 0 : index
    %c0_32 = arith.constant 0 : index
    %48 = vector.load %arg5[%c5, %c0_31, %c0_32] : memref<9x4x8xf32, #tpu.memory_space<vmem>>, vector<1x4x8xf32>
    %49 = vector.shape_cast %48 : vector<1x4x8xf32> to vector<4x8xf32>
    %cst_33 = arith.constant dense<0.000000e+00> : vector<256x8xf32>
    %50 = tpu.matmul %47, %49, %cst_33 {dimension_numbers = #tpu.dot_dimension_numbers<[1], [0], [0], [1], [0, 0, 1, 1], [], []>} : vector<256x4xf32>, vector<4x8xf32>, vector<256x8xf32> -> vector<256x8xf32>
    %51 = arith.addf %45, %50 : vector<256x8xf32>
    %52 = vector.extract_strided_slice %14 {offsets = [2, 0, 0], sizes = [16, 16, 4], strides = [1, 1, 1]} : vector<18x18x4xf32> to vector<16x16x4xf32>
    %53 = vector.shape_cast %52 : vector<16x16x4xf32> to vector<256x4xf32>
    %c6 = arith.constant 6 : index
    %c0_34 = arith.constant 0 : index
    %c0_35 = arith.constant 0 : index
    %54 = vector.load %arg5[%c6, %c0_34, %c0_35] : memref<9x4x8xf32, #tpu.memory_space<vmem>>, vector<1x4x8xf32>
    %55 = vector.shape_cast %54 : vector<1x4x8xf32> to vector<4x8xf32>
    %cst_36 = arith.constant dense<0.000000e+00> : vector<256x8xf32>
    %56 = tpu.matmul %53, %55, %cst_36 {dimension_numbers = #tpu.dot_dimension_numbers<[1], [0], [0], [1], [0, 0, 1, 1], [], []>} : vector<256x4xf32>, vector<4x8xf32>, vector<256x8xf32> -> vector<256x8xf32>
    %57 = arith.addf %51, %56 : vector<256x8xf32>
    %58 = vector.extract_strided_slice %14 {offsets = [2, 1, 0], sizes = [16, 16, 4], strides = [1, 1, 1]} : vector<18x18x4xf32> to vector<16x16x4xf32>
    %59 = vector.shape_cast %58 : vector<16x16x4xf32> to vector<256x4xf32>
    %c7 = arith.constant 7 : index
    %c0_37 = arith.constant 0 : index
    %c0_38 = arith.constant 0 : index
    %60 = vector.load %arg5[%c7, %c0_37, %c0_38] : memref<9x4x8xf32, #tpu.memory_space<vmem>>, vector<1x4x8xf32>
    %61 = vector.shape_cast %60 : vector<1x4x8xf32> to vector<4x8xf32>
    %cst_39 = arith.constant dense<0.000000e+00> : vector<256x8xf32>
    %62 = tpu.matmul %59, %61, %cst_39 {dimension_numbers = #tpu.dot_dimension_numbers<[1], [0], [0], [1], [0, 0, 1, 1], [], []>} : vector<256x4xf32>, vector<4x8xf32>, vector<256x8xf32> -> vector<256x8xf32>
    %63 = arith.addf %57, %62 : vector<256x8xf32>
    %64 = vector.extract_strided_slice %14 {offsets = [2, 2, 0], sizes = [16, 16, 4], strides = [1, 1, 1]} : vector<18x18x4xf32> to vector<16x16x4xf32>
    %65 = vector.shape_cast %64 : vector<16x16x4xf32> to vector<256x4xf32>
    %c8 = arith.constant 8 : index
    %c0_40 = arith.constant 0 : index
    %c0_41 = arith.constant 0 : index
    %66 = vector.load %arg5[%c8, %c0_40, %c0_41] : memref<9x4x8xf32, #tpu.memory_space<vmem>>, vector<1x4x8xf32>
    %67 = vector.shape_cast %66 : vector<1x4x8xf32> to vector<4x8xf32>
    %cst_42 = arith.constant dense<0.000000e+00> : vector<256x8xf32>
    %68 = tpu.matmul %65, %67, %cst_42 {dimension_numbers = #tpu.dot_dimension_numbers<[1], [0], [0], [1], [0, 0, 1, 1], [], []>} : vector<256x4xf32>, vector<4x8xf32>, vector<256x8xf32> -> vector<256x8xf32>
    %69 = arith.addf %63, %68 : vector<256x8xf32>
    %c0_43 = arith.constant 0 : index
    %c0_44 = arith.constant 0 : index
    %70 = vector.load %arg6[%c0_43, %c0_44] : memref<1x8xf32, #tpu.memory_space<vmem>>, vector<1x8xf32>
    %71 = vector.broadcast %70 : vector<1x8xf32> to vector<256x8xf32>
    %72 = arith.addf %69, %71 : vector<256x8xf32>
    %cst_45 = arith.constant 0.000000e+00 : f32
    %73 = vector.broadcast %cst_45 : f32 to vector<256x8xf32>
    %74 = arith.maximumf %72, %73 : vector<256x8xf32>
    %c0_46 = arith.constant 0 : index
    %c0_47 = arith.constant 0 : index
    %c0_48 = arith.constant 0 : index
    %c0_49 = arith.constant 0 : index
    %75 = vector.load %arg7[%c0_46, %c0_47, %c0_48, %c0_49] : memref<1x16x16x12xf32, #tpu.memory_space<vmem>>, vector<1x16x16x4xf32>
    %76 = vector.shape_cast %75 : vector<1x16x16x4xf32> to vector<16x16x4xf32>
    %77 = vector.shape_cast %1 : vector<16x16x4xf32> to vector<1x16x16x4xf32>
    tpu.vector_store %arg7[%c0_46, %c0_47, %c0_48, %c0_49], %77 {strides = array<i32>} : memref<1x16x16x12xf32, #tpu.memory_space<vmem>>, vector<1x16x16x4xf32>,
    %78 = vector.shape_cast %74 : vector<256x8xf32> to vector<16x16x8xf32>
    %c0_50 = arith.constant 0 : index
    %c0_51 = arith.constant 0 : index
    %c0_52 = arith.constant 0 : index
    %c4_53 = arith.constant 4 : index
    %79 = vector.load %arg7[%c0_50, %c0_51, %c0_52, %c4_53] : memref<1x16x16x12xf32, #tpu.memory_space<vmem>>, vector<1x16x16x8xf32>
    %80 = vector.shape_cast %79 : vector<1x16x16x8xf32> to vector<16x16x8xf32>
    %81 = vector.shape_cast %78 : vector<16x16x8xf32> to vector<1x16x16x8xf32>
    tpu.vector_store %arg7[%c0_50, %c0_51, %c0_52, %c4_53], %81 {strides = array<i32>} : memref<1x16x16x12xf32, #tpu.memory_space<vmem>>, vector<1x16x16x8xf32>,
    return
  }
  func.func @transform_0(%arg0: i32, %arg1: i32) -> (i32, i32, i32, i32) {
    %c0_i32 = arith.constant 0 : i32
    %c0_i32_0 = arith.constant 0 : i32
    %c0_i32_1 = arith.constant 0 : i32
    return %arg0, %arg1, %c0_i32, %c0_i32_0 : i32, i32, i32, i32
  }
  func.func @transform_1(%arg0: i32, %arg1: i32) -> (i32, i32, i32, i32) {
    %c16_i32 = arith.constant 16 : i32
    %0 = arith.muli %arg1, %c16_i32 : i32
    %c1_i32 = arith.constant 1 : i32
    %1 = arith.subi %0, %c1_i32 : i32
    %c0_i32 = arith.constant 0 : i32
    %2 = arith.maxsi %1, %c0_i32 : i32
    %c0_i32_0 = arith.constant 0 : i32
    %c0_i32_1 = arith.constant 0 : i32
    %c0_i32_2 = arith.constant 0 : i32
    return %arg0, %2, %c0_i32_0, %c0_i32_1 : i32, i32, i32, i32
  }
  func.func @transform_2(%arg0: i32, %arg1: i32) -> (i32, i32, i32, i32) {
    %c1_i32 = arith.constant 1 : i32
    %0 = arith.addi %arg1, %c1_i32 : i32
    %c16_i32 = arith.constant 16 : i32
    %1 = arith.muli %0, %c16_i32 : i32
    %c15_i32 = arith.constant 15 : i32
    %2 = arith.minsi %1, %c15_i32 : i32
    %c0_i32 = arith.constant 0 : i32
    %c0_i32_0 = arith.constant 0 : i32
    %c0_i32_1 = arith.constant 0 : i32
    return %arg0, %2, %c0_i32, %c0_i32_0 : i32, i32, i32, i32
  }
  func.func @transform_3(%arg0: i32, %arg1: i32) -> (i32, i32, i32) {
    %c0_i32 = arith.constant 0 : i32
    %c0_i32_0 = arith.constant 0 : i32
    %c0_i32_1 = arith.constant 0 : i32
    %c0_i32_2 = arith.constant 0 : i32
    return %c0_i32, %c0_i32_0, %c0_i32_1 : i32, i32, i32
  }
  func.func @transform_4(%arg0: i32, %arg1: i32) -> (i32, i32) {
    %c0_i32 = arith.constant 0 : i32
    %c0_i32_0 = arith.constant 0 : i32
    %c0_i32_1 = arith.constant 0 : i32
    return %c0_i32, %c0_i32_0 : i32, i32
  }
  func.func @transform_5(%arg0: i32, %arg1: i32) -> (i32, i32, i32, i32) {
    %c0_i32 = arith.constant 0 : i32
    %c0_i32_0 = arith.constant 0 : i32
    %c0_i32_1 = arith.constant 0 : i32
    return %arg0, %arg1, %c0_i32, %c0_i32_0 : i32, i32, i32, i32
  }
}

</mosaic_0001>

<llo_original>
// kernel: tpu_custom_call.1
$region0: #{tpu_custom_call.1}
  #allocation0 [shape = 'u32[]', space=smem, size = 0x4, offset = 0x4, fixed_abs, tag = 'smem constant byte address 0x4 - core index']
  #allocation1 [shape = 'u32[144,128]{1,0:T(1,128)}', space=vmem, size = 0x12000, scoped, tag = 'internal scratch']
  %s0 = inlined_call_operand.vmem [shape: f32[2,16,16,4], index: 0, kind: input, shape index: {}]
  %s1 = inlined_call_operand.vmem [shape: f32[2,16,16,4], index: 1, kind: input, shape index: {}]
  %s2 = inlined_call_operand.vmem [shape: f32[2,16,16,4], index: 2, kind: input, shape index: {}]
  %s3 = inlined_call_operand.vmem [shape: f32[9,4,8], index: 3, kind: input, shape index: {}]
  %s4 = inlined_call_operand.vmem [shape: f32[1,8], index: 4, kind: input, shape index: {}]
  %s5 = inlined_call_operand.vmem [shape: f32[2,16,16,12], index: 5, kind: output, shape index: {}]
  %s6 = sld [smem:[#allocation0]]
  $region53: #{tpu_custom_call.1} parent=0
    _
  %s8 = ssub.s32 1, %s6
  %s9 = scalar_select 0, %s8, %s6
  loop: start=0, step=1, limit=4
  $region2: #{tpu_custom_call.1} parent=0 // loop_pre_header
    _
  $region3: #{tpu_custom_call.1} parent=0 // loop_header
    %s11 = sphi 0, %s15
    %p12 = scmp.ge.s32.totalorder %s11, 4
    %s18 = sphi 0, %s30
    %s19 = sphi 0, %s26
    %s20 = sphi 0, %s18
    %s21 = sphi 0, %s19
    %s22 = sphi 0, %s20
    %s23 = sphi 0, %s21
    %s35 = sphi 0, %s37
    %s38 = sphi 0, %s35
    %s39 = sphi 0, %s38
    %s55 = sphi 0, %s39
    %s71 = sphi 0, %s73
    %s74 = sphi 0, %s71
    %s75 = sphi 0, %s74
    %s91 = sphi 0, %s75
    %s107 = sphi 0, %s109
    %s110 = sphi 0, %s107
    %s111 = sphi 0, %s110
    %s127 = sphi 0, %s111
    %s131 = sphi 0, %s131
    %s133 = sphi 0, %s131
    %s134 = sphi 0, %s133
    %s148 = sphi 0, %s134
    %s152 = sphi 0, %s152
    %s154 = sphi 0, %s152
    %s155 = sphi 0, %s154
    %s169 = sphi 0, %s155
    %s177 = sphi 0, %s179
    %s180 = sphi 0, %s177
    %s181 = sphi 0, %s180
    %s197 = sphi 0, %s181
  $region4: #{tpu_custom_call.1} parent=0 // loop_header_branch
    %14 = sbr.rel (%p12) target = $region8
  $region5: #{tpu_custom_call.1} parent=0 // loop_body
    %s16 = ssub.s32 %s11, 1
    %s17 = ssub.s32 %s11, 2
    %s24 = sadd.s32 1, %s19
    %p25 = scmp.ge.s32.totalorder %s24, 1
    %s26 = scalar_select %p25, 0, %s24
    %s27 = sadd.s32 1, %s18
    %s28 = scalar_select %p25, %s27, %s18
    %p29 = scmp.ge.s32.totalorder %s28, 2
    %s30 = scalar_select %p29, 0, %s28
    %s31 = ssub.s32 %s18, %s30
    %s32 = ssub.s32 %s19, %s26
    %s33 = sor.u32 %s31, %s32
    %p34 = scmp.eq.s32.totalorder %s33, 0
    %s36 = sadd.s32 %s35, 1
    %s37 = scalar_select %p34, %s35, %s36
    %p40 = pneg %p34
    %p41 = scmp.eq.s32.totalorder %s11, 1
    %p42 = por %p40, %p41
    %p43 = scmp.ne.s32.totalorder %s35, %s38
    %p44 = scmp.eq.s32.totalorder %s11, 0
    %p45 = por %p43, %p44
    %p46 = scmp.ne.s32.totalorder %s35, %s38
    %p47 = scmp.eq.s32.totalorder %s16, 1
    %p48 = por %p46, %p47
    %p49 = scmp.ne.s32.totalorder %s38, %s39
    %p50 = scmp.eq.s32.totalorder %s16, 0
    %p51 = por %p49, %p50
    %p52 = scmp.ne.s32.totalorder %s38, %s39
    %p53 = scmp.eq.s32.totalorder %s17, 1
    %p54 = por %p52, %p53
    %p56 = scmp.ne.s32.totalorder %s39, %s55
    %p57 = scmp.eq.s32.totalorder %s17, 0
    %p58 = por %p56, %p57
    %s59 = smul.u32 %s19, 16
    %s60 = ssub.s32 %s59, 1
    %p61 = scmp.gt.s32.totalorder %s60, 0
    %s62 = scalar_select %p61, %s60, 0
    %s63 = smul.u32 %s26, 16
    %s64 = ssub.s32 %s63, 1
    %p65 = scmp.gt.s32.totalorder %s64, 0
    %s66 = scalar_select %p65, %s64, 0
    %s67 = ssub.s32 %s18, %s30
    %s68 = ssub.s32 %s62, %s66
    %s69 = sor.u32 %s67, %s68
    %p70 = scmp.eq.s32.totalorder %s69, 0
    %s72 = sadd.s32 %s71, 1
    %s73 = scalar_select %p70, %s71, %s72
    %p76 = pneg %p70
    %p77 = scmp.eq.s32.totalorder %s11, 1
    %p78 = por %p76, %p77
    %p79 = scmp.ne.s32.totalorder %s71, %s74
    %p80 = scmp.eq.s32.totalorder %s11, 0
    %p81 = por %p79, %p80
    %p82 = scmp.ne.s32.totalorder %s71, %s74
    %p83 = scmp.eq.s32.totalorder %s16, 1
    %p84 = por %p82, %p83
    %p85 = scmp.ne.s32.totalorder %s74, %s75
    %p86 = scmp.eq.s32.totalorder %s16, 0
    %p87 = por %p85, %p86
    %p88 = scmp.ne.s32.totalorder %s74, %s75
    %p89 = scmp.eq.s32.totalorder %s17, 1
    %p90 = por %p88, %p89
    %p92 = scmp.ne.s32.totalorder %s75, %s91
    %p93 = scmp.eq.s32.totalorder %s17, 0
    %p94 = por %p92, %p93
    %s95 = sadd.s32 %s19, 1
    %s96 = smul.u32 %s95, 16
    %p97 = scmp.lt.s32.totalorder %s96, 15
    %s98 = scalar_select %p97, %s96, 15
    %s99 = sadd.s32 %s26, 1
    %s100 = smul.u32 %s99, 16
    %p101 = scmp.lt.s32.totalorder %s100, 15
    %s102 = scalar_select %p101, %s100, 15
    %s103 = ssub.s32 %s18, %s30
    %s104 = ssub.s32 %s98, %s102
    %s105 = sor.u32 %s103, %s104
    %p106 = scmp.eq.s32.totalorder %s105, 0
    %s108 = sadd.s32 %s107, 1
    %s109 = scalar_select %p106, %s107, %s108
    %p112 = pneg %p106
    %p113 = scmp.eq.s32.totalorder %s11, 1
    %p114 = por %p112, %p113
    %p115 = scmp.ne.s32.totalorder %s107, %s110
    %p116 = scmp.eq.s32.totalorder %s11, 0
    %p117 = por %p115, %p116
    %p118 = scmp.ne.s32.totalorder %s107, %s110
    %p119 = scmp.eq.s32.totalorder %s16, 1
    %p120 = por %p118, %p119
    %p121 = scmp.ne.s32.totalorder %s110, %s111
    %p122 = scmp.eq.s32.totalorder %s16, 0
    %p123 = por %p121, %p122
    %p124 = scmp.ne.s32.totalorder %s110, %s111
    %p125 = scmp.eq.s32.totalorder %s17, 1
    %p126 = por %p124, %p125
    %p128 = scmp.ne.s32.totalorder %s111, %s127
    %p129 = scmp.eq.s32.totalorder %s17, 0
    %p130 = por %p128, %p129
    %s132 = sadd.s32 %s131, 1
    %p135 = scmp.eq.s32.totalorder %s11, 1
    %p136 = scmp.ne.s32.totalorder %s131, %s133
    %p137 = scmp.eq.s32.totalorder %s11, 0
    %p138 = por %p136, %p137
    %p139 = scmp.ne.s32.totalorder %s131, %s133
    %p140 = scmp.eq.s32.totalorder %s16, 1
    %p141 = por %p139, %p140
    %p142 = scmp.ne.s32.totalorder %s133, %s134
    %p143 = scmp.eq.s32.totalorder %s16, 0
    %p144 = por %p142, %p143
    %p145 = scmp.ne.s32.totalorder %s133, %s134
    %p146 = scmp.eq.s32.totalorder %s17, 1
    %p147 = por %p145, %p146
    %p149 = scmp.ne.s32.totalorder %s134, %s148
    %p150 = scmp.eq.s32.totalorder %s17, 0
    %p151 = por %p149, %p150
    %s153 = sadd.s32 %s152, 1
    %p156 = scmp.eq.s32.totalorder %s11, 1
    %p157 = scmp.ne.s32.totalorder %s152, %s154
    %p158 = scmp.eq.s32.totalorder %s11, 0
    %p159 = por %p157, %p158
    %p160 = scmp.ne.s32.totalorder %s152, %s154
    %p161 = scmp.eq.s32.totalorder %s16, 1
    %p162 = por %p160, %p161
    %p163 = scmp.ne.s32.totalorder %s154, %s155
    %p164 = scmp.eq.s32.totalorder %s16, 0
    %p165 = por %p163, %p164
    %p166 = scmp.ne.s32.totalorder %s154, %s155
    %p167 = scmp.eq.s32.totalorder %s17, 1
    %p168 = por %p166, %p167
    %p170 = scmp.ne.s32.totalorder %s155, %s169
    %p171 = scmp.eq.s32.totalorder %s17, 0
    %p172 = por %p170, %p171
    %s173 = ssub.s32 %s18, %s30
    %s174 = ssub.s32 %s19, %s26
    %s175 = sor.u32 %s173, %s174
    %p176 = scmp.eq.s32.totalorder %s175, 0
    %s178 = sadd.s32 %s177, 1
    %s179 = scalar_select %p176, %s177, %s178
    %p182 = pneg %p176
    %p183 = scmp.eq.s32.totalorder %s11, 1
    %p184 = por %p182, %p183
    %p185 = scmp.ne.s32.totalorder %s177, %s180
    %p186 = scmp.eq.s32.totalorder %s11, 0
    %p187 = por %p185, %p186
    %p188 = scmp.ne.s32.totalorder %s177, %s180
    %p189 = scmp.eq.s32.totalorder %s16, 1
    %p190 = por %p188, %p189
    %p191 = scmp.ne.s32.totalorder %s180, %s181
    %p192 = scmp.eq.s32.totalorder %s16, 0
    %p193 = por %p191, %p192
    %p194 = scmp.ne.s32.totalorder %s180, %s181
    %p195 = scmp.eq.s32.totalorder %s17, 1
    %p196 = por %p194, %p195
    %p198 = scmp.ne.s32.totalorder %s181, %s197
    %p199 = scmp.eq.s32.totalorder %s17, 0
    %p200 = por %p198, %p199
    %p201 = scmp.le.s32.totalorder 1, %s11
    %p202 = scmp.lt.s32.totalorder %s11, 3
    %p203 = pnand %p201, %p202
    %p204 = pneg %p203
    // Predicated region
    $region9: #{tpu_custom_call.1} parent=5 // pred_check
      _
    $region10: #{tpu_custom_call.1} parent=5 // pred_check_branch
      %206 = sbr.rel (%p203) target = $region12
    $region11: #{tpu_custom_call.1} parent=5 // pred_region
      %s207 = ssub.s32 %s11, 1
      // Predicated region
      $region13: #{tpu_custom_call.1} parent=11 // pred_check
        %p208 = pneg %p144
      $region14: #{tpu_custom_call.1} parent=11 // pred_check_branch
        %210 = sbr.rel (%p208) target = $region16
      $region15: #{tpu_custom_call.1} parent=11 // pred_region
        _
      $region16: #{tpu_custom_call.1} parent=11 // pred_fallthru
        _
      // Predicated region
      $region17: #{tpu_custom_call.1} parent=11 // pred_check
        %p211 = pneg %p165
      $region18: #{tpu_custom_call.1} parent=11 // pred_check_branch
        %213 = sbr.rel (%p211) target = $region20
      $region19: #{tpu_custom_call.1} parent=11 // pred_region
        _
      $region20: #{tpu_custom_call.1} parent=11 // pred_fallthru
        _
    $region12: #{tpu_custom_call.1} parent=5 // pred_fallthru
      _
    %p214 = scmp.lt.s32.totalorder %s11, 2
    // Predicated region
    $region21: #{tpu_custom_call.1} parent=5 // pred_check
      %p215 = pneg %p214
    $region22: #{tpu_custom_call.1} parent=5 // pred_check_branch
      %217 = sbr.rel (%p215) target = $region24
    $region23: #{tpu_custom_call.1} parent=5 // pred_region
      // Predicated region
      $region25: #{tpu_custom_call.1} parent=23 // pred_check
        %p218 = pneg %p45
      $region26: #{tpu_custom_call.1} parent=23 // pred_check_branch
        %220 = sbr.rel (%p218) target = $region28
      $region27: #{tpu_custom_call.1} parent=23 // pred_region
        %s221 = smul.u32 16, %s19
        %p222 = scmp.lt.s32.totalorder %s18, 1
        %s223 = scalar_select %p222, %s18, 1
        %p224 = scmp.lt.s32.totalorder %s221, 15
        %s225 = scalar_select %p224, %s221, 15
        %s226 = smul.addr %s225, 2
        %s227 = smul.addr %s223, 32
        %s228 = sadd.s32 %s226, %s227
        %s229 = smul.addr %s228, 8
        %s230 = scalar_lea.vmem %s0, %s229
        %s231 = smul.u32 16, %s19
      $region28: #{tpu_custom_call.1} parent=23 // pred_fallthru
        _
      // Predicated region
      $region29: #{tpu_custom_call.1} parent=23 // pred_check
        %p232 = pneg %p81
      $region30: #{tpu_custom_call.1} parent=23 // pred_check_branch
        %234 = sbr.rel (%p232) target = $region32
      $region31: #{tpu_custom_call.1} parent=23 // pred_region
        %s235 = smul.u32 %s19, 16
        %s236 = ssub.s32 %s235, 1
        %p237 = scmp.gt.s32.totalorder %s236, 0
        %s238 = scalar_select %p237, %s236, 0
        %p239 = scmp.lt.s32.totalorder %s18, 1
        %s240 = scalar_select %p239, %s18, 1
        %p241 = scmp.lt.s32.totalorder %s238, 15
        %s242 = scalar_select %p241, %s238, 15
        %s243 = smul.addr %s242, 2
        %s244 = smul.addr %s240, 32
        %s245 = sadd.s32 %s243, %s244
        %s246 = smul.addr %s245, 8
        %s247 = scalar_lea.vmem %s1, %s246
        %s248 = smul.u32 %s19, 16
        %s249 = ssub.s32 %s248, 1
        %p250 = scmp.gt.s32.totalorder %s249, 0
        %s251 = scalar_select %p250, %s249, 0
      $region32: #{tpu_custom_call.1} parent=23 // pred_fallthru
        _
      // Predicated region
      $region33: #{tpu_custom_call.1} parent=23 // pred_check
        %p252 = pneg %p117
      $region34: #{tpu_custom_call.1} parent=23 // pred_check_branch
        %254 = sbr.rel (%p252) target = $region36
      $region35: #{tpu_custom_call.1} parent=23 // pred_region
        %s255 = sadd.s32 %s19, 1
        %s256 = smul.u32 %s255, 16
        %p257 = scmp.lt.s32.totalorder %s256, 15
        %s258 = scalar_select %p257, %s256, 15
        %p259 = scmp.lt.s32.totalorder %s18, 1
        %s260 = scalar_select %p259, %s18, 1
        %p261 = scmp.lt.s32.totalorder %s258, 15
        %s262 = scalar_select %p261, %s258, 15
        %s263 = smul.addr %s262, 2
        %s264 = smul.addr %s260, 32
        %s265 = sadd.s32 %s263, %s264
        %s266 = smul.addr %s265, 8
        %s267 = scalar_lea.vmem %s2, %s266
        %s268 = sadd.s32 %s19, 1
        %s269 = smul.u32 %s268, 16
        %p270 = scmp.lt.s32.totalorder %s269, 15
        %s271 = scalar_select %p270, %s269, 15
      $region36: #{tpu_custom_call.1} parent=23 // pred_fallthru
        _
    $region24: #{tpu_custom_call.1} parent=5 // pred_fallthru
      _
    %p272 = scmp.le.s32.totalorder 1, %s11
    %p273 = scmp.lt.s32.totalorder %s11, 3
    %p274 = pnand %p272, %p273
    %p275 = pneg %p274
    // Predicated region
    $region37: #{tpu_custom_call.1} parent=5 // pred_check
      _
    $region38: #{tpu_custom_call.1} parent=5 // pred_check_branch
      %277 = sbr.rel (%p274) target = $region40
    $region39: #{tpu_custom_call.1} parent=5 // pred_region
      %s278 = ssub.s32 %s11, 1
      %s279 = smul.u32 16, %s21
      %p280 = scmp.lt.s32.totalorder %s20, 1
      %s281 = scalar_select %p280, %s20, 1
      %p282 = scmp.lt.s32.totalorder %s279, 15
      %s283 = scalar_select %p282, %s279, 15
      %s284 = smul.addr %s283, 2
      %s285 = smul.addr %s281, 32
      %s286 = sadd.s32 %s284, %s285
      %s287 = smul.addr %s286, 8
      %s288 = scalar_lea.vmem %s0, %s287
      %p289 = pneg %p51
      %p290 = pneg %p48
      %s291 = smul.u32 %s21, 16
      %s292 = ssub.s32 %s291, 1
      %p293 = scmp.gt.s32.totalorder %s292, 0
      %s294 = scalar_select %p293, %s292, 0
      %p295 = scmp.lt.s32.totalorder %s20, 1
      %s296 = scalar_select %p295, %s20, 1
      %p297 = scmp.lt.s32.totalorder %s294, 15
      %s298 = scalar_select %p297, %s294, 15
      %s299 = smul.addr %s298, 2
      %s300 = smul.addr %s296, 32
      %s301 = sadd.s32 %s299, %s300
      %s302 = smul.addr %s301, 8
      %s303 = scalar_lea.vmem %s1, %s302
      %p304 = pneg %p87
      %p305 = pneg %p84
      %s306 = sadd.s32 %s21, 1
      %s307 = smul.u32 %s306, 16
      %p308 = scmp.lt.s32.totalorder %s307, 15
      %s309 = scalar_select %p308, %s307, 15
      %p310 = scmp.lt.s32.totalorder %s20, 1
      %s311 = scalar_select %p310, %s20, 1
      %p312 = scmp.lt.s32.totalorder %s309, 15
      %s313 = scalar_select %p312, %s309, 15
      %s314 = smul.addr %s313, 2
      %s315 = smul.addr %s311, 32
      %s316 = sadd.s32 %s314, %s315
      %s317 = smul.addr %s316, 8
      %s318 = scalar_lea.vmem %s2, %s317
      %p319 = pneg %p123
      %p320 = pneg %p120
      %p321 = pneg %p144
      %p322 = pneg %p141
      %p323 = pneg %p165
      %p324 = pneg %p162
      %p325 = pneg %p193
      %p326 = pneg %p190
      %s327 = smul.u32 16, %s21
      %p328 = scmp.lt.s32.totalorder %s20, 1
      %s329 = scalar_select %p328, %s20, 1
      %p330 = scmp.lt.s32.totalorder %s327, 15
      %s331 = scalar_select %p330, %s327, 15
      %s332 = smul.addr %s331, 2
      %s333 = smul.addr %s329, 32
      %s334 = sadd.s32 %s332, %s333
      %s335 = smul.addr %s334, 8
      %s336 = scalar_lea.vmem %s5, %s335
      %s337 = smul.u32 16, %s21
      %p338 = scmp.lt.s32.totalorder %s20, 1
      %s339 = scalar_select %p338, %s20, 1
      %p340 = scmp.lt.s32.totalorder %s337, 15
      %s341 = scalar_select %p340, %s337, 15
      %s342 = smul.addr %s341, 2
      %s343 = smul.addr %s339, 32
      %s344 = sadd.s32 %s342, %s343
      %s345 = smul.addr %s344, 8
      %s346 = scalar_lea.vmem %s0, %s345
      %s347 = smul.u32 16, %s21
      %s348 = smul.u32 %s21, 16
      %s349 = ssub.s32 %s348, 1
      %p350 = scmp.gt.s32.totalorder %s349, 0
      %s351 = scalar_select %p350, %s349, 0
      %p352 = scmp.lt.s32.totalorder %s20, 1
      %s353 = scalar_select %p352, %s20, 1
      %p354 = scmp.lt.s32.totalorder %s351, 15
      %s355 = scalar_select %p354, %s351, 15
      %s356 = smul.addr %s355, 2
      %s357 = smul.addr %s353, 32
      %s358 = sadd.s32 %s356, %s357
      %s359 = smul.addr %s358, 8
      %s360 = scalar_lea.vmem %s1, %s359
      %s361 = smul.u32 %s21, 16
      %s362 = ssub.s32 %s361, 1
      %p363 = scmp.gt.s32.totalorder %s362, 0
      %s364 = scalar_select %p363, %s362, 0
      %s365 = sadd.s32 %s21, 1
      %s366 = smul.u32 %s365, 16
      %p367 = scmp.lt.s32.totalorder %s366, 15
      %s368 = scalar_select %p367, %s366, 15
      %p369 = scmp.lt.s32.totalorder %s20, 1
      %s370 = scalar_select %p369, %s20, 1
      %p371 = scmp.lt.s32.totalorder %s368, 15
      %s372 = scalar_select %p371, %s368, 15
      %s373 = smul.addr %s372, 2
      %s374 = smul.addr %s370, 32
      %s375 = sadd.s32 %s373, %s374
      %s376 = smul.addr %s375, 8
      %s377 = scalar_lea.vmem %s2, %s376
      %s378 = sadd.s32 %s21, 1
      %s379 = smul.u32 %s378, 16
      %p380 = scmp.lt.s32.totalorder %s379, 15
      %s381 = scalar_select %p380, %s379, 15
      %s382 = smul.u32 16, %s21
      %p383 = scmp.lt.s32.totalorder %s20, 1
      %s384 = scalar_select %p383, %s20, 1
      %p385 = scmp.lt.s32.totalorder %s382, 15
      %s386 = scalar_select %p385, %s382, 15
      %s387 = smul.addr %s386, 2
      %s388 = smul.addr %s384, 32
      %s389 = sadd.s32 %s387, %s388
      %s390 = smul.addr %s389, 8
      %s391 = scalar_lea.vmem %s5, %s390
      %s392 = smul.u32 16, %s21
      %v393 = vld [vmem:[%s346] sm:$0xff]
      %v394 = vld [vmem:[%s346 + $0x8] sm:$0xff]
      %v395 = vld [vmem:[%s346 + $0x10] sm:$0xff]
      %v396 = vld [vmem:[%s346 + $0x18] sm:$0xff]
      %v397 = vld [vmem:[%s346 + $0x20] sm:$0xff]
      %v398 = vld [vmem:[%s346 + $0x28] sm:$0xff]
      %v399 = vld [vmem:[%s346 + $0x30] sm:$0xff]
      %v400 = vld [vmem:[%s346 + $0x38] sm:$0xff]
      %v401 = vld [vmem:[%s346 + $0x40] sm:$0xff]
      %v402 = vld [vmem:[%s346 + $0x48] sm:$0xff]
      %v403 = vld [vmem:[%s346 + $0x50] sm:$0xff]
      %v404 = vld [vmem:[%s346 + $0x58] sm:$0xff]
      %v405 = vld [vmem:[%s346 + $0x60] sm:$0xff]
      %v406 = vld [vmem:[%s346 + $0x68] sm:$0xff]
      %v407 = vld [vmem:[%s346 + $0x70] sm:$0xff]
      %v408 = vld [vmem:[%s346 + $0x78] sm:$0xff]
      %v409 = vld [vmem:[%s346 + $0x80] sm:$0xff]
      %v410 = vld [vmem:[%s346 + $0x88] sm:$0xff]
      %v411 = vld [vmem:[%s346 + $0x90] sm:$0xff]
      %v412 = vld [vmem:[%s346 + $0x98] sm:$0xff]
      %v413 = vld [vmem:[%s346 + $0xa0] sm:$0xff]
      %v414 = vld [vmem:[%s346 + $0xa8] sm:$0xff]
      %v415 = vld [vmem:[%s346 + $0xb0] sm:$0xff]
      %v416 = vld [vmem:[%s346 + $0xb8] sm:$0xff]
      %v417 = vld [vmem:[%s346 + $0xc0] sm:$0xff]
      %v418 = vld [vmem:[%s346 + $0xc8] sm:$0xff]
      %v419 = vld [vmem:[%s346 + $0xd0] sm:$0xff]
      %v420 = vld [vmem:[%s346 + $0xd8] sm:$0xff]
      %v421 = vld [vmem:[%s346 + $0xe0] sm:$0xff]
      %v422 = vld [vmem:[%s346 + $0xe8] sm:$0xff]
      %v423 = vld [vmem:[%s346 + $0xf0] sm:$0xff]
      %v424 = vld [vmem:[%s346 + $0xf8] sm:$0xff]
      %v425 = vld [vmem:[%s360] sm:$0xff]
      %v426 = vld [vmem:[%s360 + $0x8] sm:$0xff]
      %v427 = vld [vmem:[%s377] sm:$0xff]
      %v428 = vld [vmem:[%s377 + $0x8] sm:$0xff]
      %p429 = scmp.gt.s32.totalorder %s21, 0
      %s430 = scalar_select %p429, 1, 0
      %v431 = vstv %s430
      %vm432 = vcmp.eq.s32.totalorder %v431, 1
      %v433 = vsel %vm432, %v425, 0.0
      %v434 = vsel %vm432, %v426, 0.0
      %p435 = scmp.lt.s32.totalorder %s21, 0
      %s436 = scalar_select %p435, 1, 0
      %v437 = vstv %s436
      %vm438 = vcmp.eq.s32.totalorder %v437, 1
      %v439 = vsel %vm438, %v427, 0.0
      %v440 = vsel %vm438, %v428, 0.0
      %vm477 = vcmask 1040384
      %v478 = vrot.slane %v433, 7
      %v479 = vrot.slane %v434, 7
      %v480 = vsel %vm477, %v478, %v479
      %v481 = vrot.slane %v393, 7
      %v482 = vrot.slane %v394, 7
      %v483 = vsel %vm477, %v481, %v482
      %v484 = vrot.slane %v395, 7
      %v485 = vrot.slane %v396, 7
      %v486 = vsel %vm477, %v484, %v485
      %v487 = vrot.slane %v397, 7
      %v488 = vrot.slane %v398, 7
      %v489 = vsel %vm477, %v487, %v488
      %v490 = vrot.slane %v399, 7
      %v491 = vrot.slane %v400, 7
      %v492 = vsel %vm477, %v490, %v491
      %v493 = vrot.slane %v401, 7
      %v494 = vrot.slane %v402, 7
      %v495 = vsel %vm477, %v493, %v494
      %v496 = vrot.slane %v403, 7
      %v497 = vrot.slane %v404, 7
      %v498 = vsel %vm477, %v496, %v497
      %v499 = vrot.slane %v405, 7
      %v500 = vrot.slane %v406, 7
      %v501 = vsel %vm477, %v499, %v500
      %v502 = vrot.slane %v407, 7
      %v503 = vrot.slane %v408, 7
      %v504 = vsel %vm477, %v502, %v503
      %v505 = vrot.slane %v409, 7
      %v506 = vrot.slane %v410, 7
      %v507 = vsel %vm477, %v505, %v506
      %v508 = vrot.slane %v411, 7
      %v509 = vrot.slane %v412, 7
      %v510 = vsel %vm477, %v508, %v509
      %v511 = vrot.slane %v413, 7
      %v512 = vrot.slane %v414, 7
      %v513 = vsel %vm477, %v511, %v512
      %v514 = vrot.slane %v415, 7
      %v515 = vrot.slane %v416, 7
      %v516 = vsel %vm477, %v514, %v515
      %v517 = vrot.slane %v417, 7
      %v518 = vrot.slane %v418, 7
      %v519 = vsel %vm477, %v517, %v518
      %v520 = vrot.slane %v419, 7
      %v521 = vrot.slane %v420, 7
      %v522 = vsel %vm477, %v520, %v521
      %v523 = vrot.slane %v421, 7
      %v524 = vrot.slane %v422, 7
      %v525 = vsel %vm477, %v523, %v524
      %v526 = vrot.slane %v423, 7
      %v527 = vrot.slane %v424, 7
      %v528 = vsel %vm477, %v526, %v527
      %v529 = vrot.slane %v439, 7
      %v530 = vrot.slane %v440, 7
      %v531 = vsel %vm477, %v529, %v530
      %v568 = vsel %vm477, 0.0, %v478
      %v569 = vsel %vm477, 0.0, %v481
      %v570 = vsel %vm477, 0.0, %v484
      %v571 = vsel %vm477, 0.0, %v487
      %v572 = vsel %vm477, 0.0, %v490
      %v573 = vsel %vm477, 0.0, %v493
      %v574 = vsel %vm477, 0.0, %v496
      %v575 = vsel %vm477, 0.0, %v499
      %v576 = vsel %vm477, 0.0, %v502
      %v577 = vsel %vm477, 0.0, %v505
      %v578 = vsel %vm477, 0.0, %v508
      %v579 = vsel %vm477, 0.0, %v511
      %v580 = vsel %vm477, 0.0, %v514
      %v581 = vsel %vm477, 0.0, %v517
      %v582 = vsel %vm477, 0.0, %v520
      %v583 = vsel %vm477, 0.0, %v523
      %v584 = vsel %vm477, 0.0, %v526
      %v585 = vsel %vm477, 0.0, %v529
      %v586 = vsel %vm477, %v479, 0.0
      %v587 = vsel %vm477, %v482, 0.0
      %v588 = vsel %vm477, %v485, 0.0
      %v589 = vsel %vm477, %v488, 0.0
      %v590 = vsel %vm477, %v491, 0.0
      %v591 = vsel %vm477, %v494, 0.0
      %v592 = vsel %vm477, %v497, 0.0
      %v593 = vsel %vm477, %v500, 0.0
      %v594 = vsel %vm477, %v503, 0.0
      %v595 = vsel %vm477, %v506, 0.0
      %v596 = vsel %vm477, %v509, 0.0
      %v597 = vsel %vm477, %v512, 0.0
      %v598 = vsel %vm477, %v515, 0.0
      %v599 = vsel %vm477, %v518, 0.0
      %v600 = vsel %vm477, %v521, 0.0
      %v601 = vsel %vm477, %v524, 0.0
      %v602 = vsel %vm477, %v527, 0.0
      %v603 = vsel %vm477, %v530, 0.0
      %v604 = vld [vmem:[%s3] sm:$0xf]
      %vm637 = vcmask 1046528
      %v638 = vrot.slane %v568, 1
      %v639 = vrot.slane %v480, 1
      %v640 = vsel %vm637, %v638, %v639
      %v641 = vrot.slane %v586, 1
      %v642 = vsel %vm637, %v639, %v641
      %v643 = vrot.slane %v569, 1
      %v644 = vrot.slane %v483, 1
      %v645 = vsel %vm637, %v643, %v644
      %v646 = vrot.slane %v587, 1
      %v647 = vsel %vm637, %v644, %v646
      %v648 = vrot.slane %v570, 1
      %v649 = vrot.slane %v486, 1
      %v650 = vsel %vm637, %v648, %v649
      %v651 = vrot.slane %v588, 1
      %v652 = vsel %vm637, %v649, %v651
      %v653 = vrot.slane %v571, 1
      %v654 = vrot.slane %v489, 1
      %v655 = vsel %vm637, %v653, %v654
      %v656 = vrot.slane %v589, 1
      %v657 = vsel %vm637, %v654, %v656
      %v658 = vrot.slane %v572, 1
      %v659 = vrot.slane %v492, 1
      %v660 = vsel %vm637, %v658, %v659
      %v661 = vrot.slane %v590, 1
      %v662 = vsel %vm637, %v659, %v661
      %v663 = vrot.slane %v573, 1
      %v664 = vrot.slane %v495, 1
      %v665 = vsel %vm637, %v663, %v664
      %v666 = vrot.slane %v591, 1
      %v667 = vsel %vm637, %v664, %v666
      %v668 = vrot.slane %v574, 1
      %v669 = vrot.slane %v498, 1
      %v670 = vsel %vm637, %v668, %v669
      %v671 = vrot.slane %v592, 1
      %v672 = vsel %vm637, %v669, %v671
      %v673 = vrot.slane %v575, 1
      %v674 = vrot.slane %v501, 1
      %v675 = vsel %vm637, %v673, %v674
      %v676 = vrot.slane %v593, 1
      %v677 = vsel %vm637, %v674, %v676
      %v678 = vrot.slane %v576, 1
      %v679 = vrot.slane %v504, 1
      %v680 = vsel %vm637, %v678, %v679
      %v681 = vrot.slane %v594, 1
      %v682 = vsel %vm637, %v679, %v681
      %v683 = vrot.slane %v577, 1
      %v684 = vrot.slane %v507, 1
      %v685 = vsel %vm637, %v683, %v684
      %v686 = vrot.slane %v595, 1
      %v687 = vsel %vm637, %v684, %v686
      %v688 = vrot.slane %v578, 1
      %v689 = vrot.slane %v510, 1
      %v690 = vsel %vm637, %v688, %v689
      %v691 = vrot.slane %v596, 1
      %v692 = vsel %vm637, %v689, %v691
      %v693 = vrot.slane %v579, 1
      %v694 = vrot.slane %v513, 1
      %v695 = vsel %vm637, %v693, %v694
      %v696 = vrot.slane %v597, 1
      %v697 = vsel %vm637, %v694, %v696
      %v698 = vrot.slane %v580, 1
      %v699 = vrot.slane %v516, 1
      %v700 = vsel %vm637, %v698, %v699
      %v701 = vrot.slane %v598, 1
      %v702 = vsel %vm637, %v699, %v701
      %v703 = vrot.slane %v581, 1
      %v704 = vrot.slane %v519, 1
      %v705 = vsel %vm637, %v703, %v704
      %v706 = vrot.slane %v599, 1
      %v707 = vsel %vm637, %v704, %v706
      %v708 = vrot.slane %v582, 1
      %v709 = vrot.slane %v522, 1
      %v710 = vsel %vm637, %v708, %v709
      %v711 = vrot.slane %v600, 1
      %v712 = vsel %vm637, %v709, %v711
      %v713 = vrot.slane %v583, 1
      %v714 = vrot.slane %v525, 1
      %v715 = vsel %vm637, %v713, %v714
      %v716 = vrot.slane %v601, 1
      %v717 = vsel %vm637, %v714, %v716
      %s718 = scalar_lea.vmem %s3, 4
      %v719 = vld [vmem:[%s718] sm:$0xf]
      %vm720 = vcmask 31744
      %v721 = vsel %vm720, %v640, 0
      %v723 = vsel %vm720, %v642, 0
      %v725 = vsel %vm720, %v645, 0
      %v727 = vsel %vm720, %v647, 0
      %v729 = vsel %vm720, %v650, 0
      %v731 = vsel %vm720, %v652, 0
      %v733 = vsel %vm720, %v655, 0
      %v735 = vsel %vm720, %v657, 0
      %v737 = vsel %vm720, %v660, 0
      %v739 = vsel %vm720, %v662, 0
      %v741 = vsel %vm720, %v665, 0
      %v743 = vsel %vm720, %v667, 0
      %v745 = vsel %vm720, %v670, 0
      %v747 = vsel %vm720, %v672, 0
      %v749 = vsel %vm720, %v675, 0
      %v751 = vsel %vm720, %v677, 0
      %v753 = vsel %vm720, %v680, 0
      %v755 = vsel %vm720, %v682, 0
      %v757 = vsel %vm720, %v685, 0
      %v759 = vsel %vm720, %v687, 0
      %v761 = vsel %vm720, %v690, 0
      %v763 = vsel %vm720, %v692, 0
      %v765 = vsel %vm720, %v695, 0
      %v767 = vsel %vm720, %v697, 0
      %v769 = vsel %vm720, %v700, 0
      %v771 = vsel %vm720, %v702, 0
      %v773 = vsel %vm720, %v705, 0
      %v775 = vsel %vm720, %v707, 0
      %v777 = vsel %vm720, %v710, 0
      %v779 = vsel %vm720, %v712, 0
      %v781 = vsel %vm720, %v715, 0
      %v783 = vsel %vm720, %v717, 0
      %vm785 = vcmask 1043456
      %v787 = vsel %vm785, %v719, 0
      %789 = vmatprep.subr.mxu0 0.0
      %790 = vmatpush1.msra.mxu0 %v787
      %791 = vmatprep.subr.mxu0 0.0
      %792 = vmatpush1.msra.mxu0 0.0
      %793 = vmatprep.subr.mxu0 0.0
      %794 = vmatpush1.msra.mxu0 0.0
      %795 = vmatprep.subr.mxu0 0.0
      %796 = vmatpush1.msra.mxu0 0.0
      %797 = vmatprep.subr.mxu0 0.0
      %798 = vmatpush1.msra.mxu0 0.0
      %799 = vmatprep.subr.mxu0 0.0
      %800 = vmatpush1.msra.mxu0 0.0
      %801 = vmatprep.subr.mxu0 0.0
      %802 = vmatpush1.msra.mxu0 0.0
      %803 = vmatprep.subr.mxu0 0.0
      %804 = vmatpush1.msra.mxu0 0.0
      %805 = vmatprep.subr.mxu0 0.0
      %806 = vmatpush1.msra.mxu0 0.0
      %807 = vmatprep.subr.mxu0 0.0
      %808 = vmatpush1.msra.mxu0 0.0
      %809 = vmatprep.subr.mxu0 0.0
      %810 = vmatpush1.msra.mxu0 0.0
      %811 = vmatprep.subr.mxu0 0.0
      %812 = vmatpush1.msra.mxu0 0.0
      %813 = vmatprep.subr.mxu0 0.0
      %814 = vmatpush1.msra.mxu0 0.0
      %815 = vmatprep.subr.mxu0 0.0
      %816 = vmatpush1.msra.mxu0 0.0
      %817 = vmatprep.subr.mxu0 0.0
      %818 = vmatpush1.msra.mxu0 0.0
      %819 = vmatprep.subr.mxu0 0.0
      %820 = vmatpush1.msra.mxu0 0.0
      %821 = vmatprep.subr.mxu0 0.0
      %822 = vmatpush1.msra.mxu0 0.0
      %823 = vmatprep.subr.mxu0 0.0
      %824 = vmatpush1.msra.mxu0 0.0
      %825 = vmatprep.subr.mxu0 0.0
      %826 = vmatpush1.msra.mxu0 0.0
      %827 = vmatprep.subr.mxu0 0.0
      %828 = vmatpush1.msra.mxu0 0.0
      %829 = vmatprep.subr.mxu0 0.0
      %830 = vmatpush1.msra.mxu0 0.0
      %831 = vmatprep.subr.mxu0 0.0
      %832 = vmatpush1.msra.mxu0 0.0
      %833 = vmatprep.subr.mxu0 0.0
      %834 = vmatpush1.msra.mxu0 0.0
      %835 = vmatprep.subr.mxu0 0.0
      %836 = vmatpush1.msra.mxu0 0.0
      %837 = vmatprep.subr.mxu0 0.0
      %838 = vmatpush1.msra.mxu0 0.0
      %839 = vmatprep.subr.mxu0 0.0
      %840 = vmatpush1.msra.mxu0 0.0
      %841 = vmatprep.subr.mxu0 0.0
      %842 = vmatpush1.msra.mxu0 0.0
      %843 = vmatprep.subr.mxu0 0.0
      %844 = vmatpush1.msra.mxu0 0.0
      %845 = vmatprep.subr.mxu0 0.0
      %846 = vmatpush1.msra.mxu0 0.0
      %847 = vmatprep.subr.mxu0 0.0
      %848 = vmatpush1.msra.mxu0 0.0
      %849 = vmatprep.subr.mxu0 0.0
      %850 = vmatpush1.msra.mxu0 0.0
      %851 = vmatprep.subr.mxu0 0.0
      %852 = vmatpush1.msra.mxu0 0.0
      %853 = vmatprep.mubr.f32.mxu0 0.0
      %854 = vmatmul.mubr.f32.gmra.mrb[0].mxu0 %v721
      %v855 = vpop.f32.mrb[0].mxu0
      %v856 = vadd.f32 0.0, %v855
      %v857 = vpop.f32.mrb[0].mxu0
      %858 = vmatprep.mubr.f32.mxu0 0.0
      %859 = vmatmul.mubr.f32.gmra.mrb[0].mxu0 %v723
      %v860 = vpop.f32.mrb[0].mxu0
      %v861 = vadd.f32 0.0, %v860
      %v862 = vpop.f32.mrb[0].mxu0
      %863 = vmatprep.mubr.f32.mxu0 0.0
      %864 = vmatmul.mubr.f32.gmra.mrb[0].mxu0 %v725
      %v865 = vpop.f32.mrb[0].mxu0
      %v866 = vadd.f32 0.0, %v865
      %v867 = vpop.f32.mrb[0].mxu0
      %868 = vmatprep.mubr.f32.mxu0 0.0
      %869 = vmatmul.mubr.f32.gmra.mrb[0].mxu0 %v727
      %v870 = vpop.f32.mrb[0].mxu0
      %v871 = vadd.f32 0.0, %v870
      %v872 = vpop.f32.mrb[0].mxu0
      %873 = vmatprep.mubr.f32.mxu0 0.0
      %874 = vmatmul.mubr.f32.gmra.mrb[0].mxu0 %v729
      %v875 = vpop.f32.mrb[0].mxu0
      %v876 = vadd.f32 0.0, %v875
      %v877 = vpop.f32.mrb[0].mxu0
      %878 = vmatprep.mubr.f32.mxu0 0.0
      %879 = vmatmul.mubr.f32.gmra.mrb[0].mxu0 %v731
      %v880 = vpop.f32.mrb[0].mxu0
      %v881 = vadd.f32 0.0, %v880
      %v882 = vpop.f32.mrb[0].mxu0
      %883 = vmatprep.mubr.f32.mxu0 0.0
      %884 = vmatmul.mubr.f32.gmra.mrb[0].mxu0 %v733
      %v885 = vpop.f32.mrb[0].mxu0
      %v886 = vadd.f32 0.0, %v885
      %v887 = vpop.f32.mrb[0].mxu0
      %888 = vmatprep.mubr.f32.mxu0 0.0
      %889 = vmatmul.mubr.f32.gmra.mrb[0].mxu0 %v735
      %v890 = vpop.f32.mrb[0].mxu0
      %v891 = vadd.f32 0.0, %v890
      %v892 = vpop.f32.mrb[0].mxu0
      %893 = vmatprep.mubr.f32.mxu0 0.0
      %894 = vmatmul.mubr.f32.gmra.mrb[0].mxu0 %v737
      %v895 = vpop.f32.mrb[0].mxu0
      %v896 = vadd.f32 0.0, %v895
      %v897 = vpop.f32.mrb[0].mxu0
      %898 = vmatprep.mubr.f32.mxu0 0.0
      %899 = vmatmul.mubr.f32.gmra.mrb[0].mxu0 %v739
      %v900 = vpop.f32.mrb[0].mxu0
      %v901 = vadd.f32 0.0, %v900
      %v902 = vpop.f32.mrb[0].mxu0
      %903 = vmatprep.mubr.f32.mxu0 0.0
      %904 = vmatmul.mubr.f32.gmra.mrb[0].mxu0 %v741
      %v905 = vpop.f32.mrb[0].mxu0
      %v906 = vadd.f32 0.0, %v905
      %v907 = vpop.f32.mrb[0].mxu0
      %908 = vmatprep.mubr.f32.mxu0 0.0
      %909 = vmatmul.mubr.f32.gmra.mrb[0].mxu0 %v743
      %v910 = vpop.f32.mrb[0].mxu0
      %v911 = vadd.f32 0.0, %v910
      %v912 = vpop.f32.mrb[0].mxu0
      %913 = vmatprep.mubr.f32.mxu0 0.0
      %914 = vmatmul.mubr.f32.gmra.mrb[0].mxu0 %v745
      %v915 = vpop.f32.mrb[0].mxu0
      %v916 = vadd.f32 0.0, %v915
      %v917 = vpop.f32.mrb[0].mxu0
      %918 = vmatprep.mubr.f32.mxu0 0.0
      %919 = vmatmul.mubr.f32.gmra.mrb[0].mxu0 %v747
      %v920 = vpop.f32.mrb[0].mxu0
      %v921 = vadd.f32 0.0, %v920
      %v922 = vpop.f32.mrb[0].mxu0
      %923 = vmatprep.mubr.f32.mxu0 0.0
      %924 = vmatmul.mubr.f32.gmra.mrb[0].mxu0 %v749
      %v925 = vpop.f32.mrb[0].mxu0
      %v926 = vadd.f32 0.0, %v925
      %v927 = vpop.f32.mrb[0].mxu0
      %928 = vmatprep.mubr.f32.mxu0 0.0
      %929 = vmatmul.mubr.f32.gmra.mrb[0].mxu0 %v751
      %v930 = vpop.f32.mrb[0].mxu0
      %v931 = vadd.f32 0.0, %v930
      %v932 = vpop.f32.mrb[0].mxu0
      %933 = vmatprep.mubr.f32.mxu0 0.0
      %934 = vmatmul.mubr.f32.gmra.mrb[0].mxu0 %v753
      %v935 = vpop.f32.mrb[0].mxu0
      %v936 = vadd.f32 0.0, %v935
      %v937 = vpop.f32.mrb[0].mxu0
      %938 = vmatprep.mubr.f32.mxu0 0.0
      %939 = vmatmul.mubr.f32.gmra.mrb[0].mxu0 %v755
      %v940 = vpop.f32.mrb[0].mxu0
      %v941 = vadd.f32 0.0, %v940
      %v942 = vpop.f32.mrb[0].mxu0
      %943 = vmatprep.mubr.f32.mxu0 0.0
      %944 = vmatmul.mubr.f32.gmra.mrb[0].mxu0 %v757
      %v945 = vpop.f32.mrb[0].mxu0
      %v946 = vadd.f32 0.0, %v945
      %v947 = vpop.f32.mrb[0].mxu0
      %948 = vmatprep.mubr.f32.mxu0 0.0
      %949 = vmatmul.mubr.f32.gmra.mrb[0].mxu0 %v759
      %v950 = vpop.f32.mrb[0].mxu0
      %v951 = vadd.f32 0.0, %v950
      %v952 = vpop.f32.mrb[0].mxu0
      %953 = vmatprep.mubr.f32.mxu0 0.0
      %954 = vmatmul.mubr.f32.gmra.mrb[0].mxu0 %v761
      %v955 = vpop.f32.mrb[0].mxu0
      %v956 = vadd.f32 0.0, %v955
      %v957 = vpop.f32.mrb[0].mxu0
      %958 = vmatprep.mubr.f32.mxu0 0.0
      %959 = vmatmul.mubr.f32.gmra.mrb[0].mxu0 %v763
      %v960 = vpop.f32.mrb[0].mxu0
      %v961 = vadd.f32 0.0, %v960
      %v962 = vpop.f32.mrb[0].mxu0
      %963 = vmatprep.mubr.f32.mxu0 0.0
      %964 = vmatmul.mubr.f32.gmra.mrb[0].mxu0 %v765
      %v965 = vpop.f32.mrb[0].mxu0
      %v966 = vadd.f32 0.0, %v965
      %v967 = vpop.f32.mrb[0].mxu0
      %968 = vmatprep.mubr.f32.mxu0 0.0
      %969 = vmatmul.mubr.f32.gmra.mrb[0].mxu0 %v767
      %v970 = vpop.f32.mrb[0].mxu0
      %v971 = vadd.f32 0.0, %v970
      %v972 = vpop.f32.mrb[0].mxu0
      %973 = vmatprep.mubr.f32.mxu0 0.0
      %974 = vmatmul.mubr.f32.gmra.mrb[0].mxu0 %v769
      %v975 = vpop.f32.mrb[0].mxu0
      %v976 = vadd.f32 0.0, %v975
      %v977 = vpop.f32.mrb[0].mxu0
      %978 = vmatprep.mubr.f32.mxu0 0.0
      %979 = vmatmul.mubr.f32.gmra.mrb[0].mxu0 %v771
      %v980 = vpop.f32.mrb[0].mxu0
      %v981 = vadd.f32 0.0, %v980
      %v982 = vpop.f32.mrb[0].mxu0
      %983 = vmatprep.mubr.f32.mxu0 0.0
      %984 = vmatmul.mubr.f32.gmra.mrb[0].mxu0 %v773
      %v985 = vpop.f32.mrb[0].mxu0
      %v986 = vadd.f32 0.0, %v985
      %v987 = vpop.f32.mrb[0].mxu0
      %988 = vmatprep.mubr.f32.mxu0 0.0
      %989 = vmatmul.mubr.f32.gmra.mrb[0].mxu0 %v775
      %v990 = vpop.f32.mrb[0].mxu0
      %v991 = vadd.f32 0.0, %v990
      %v992 = vpop.f32.mrb[0].mxu0
      %993 = vmatprep.mubr.f32.mxu0 0.0
      %994 = vmatmul.mubr.f32.gmra.mrb[0].mxu0 %v777
      %v995 = vpop.f32.mrb[0].mxu0
      %v996 = vadd.f32 0.0, %v995
      %v997 = vpop.f32.mrb[0].mxu0
      %998 = vmatprep.mubr.f32.mxu0 0.0
      %999 = vmatmul.mubr.f32.gmra.mrb[0].mxu0 %v779
      %v1000 = vpop.f32.mrb[0].mxu0
      %v1001 = vadd.f32 0.0, %v1000
      %v1002 = vpop.f32.mrb[0].mxu0
      %1003 = vmatprep.mubr.f32.mxu0 0.0
      %1004 = vmatmul.mubr.f32.gmra.mrb[0].mxu0 %v781
      %v1005 = vpop.f32.mrb[0].mxu0
      %v1006 = vadd.f32 0.0, %v1005
      %v1007 = vpop.f32.mrb[0].mxu0
      %1008 = vmatprep.mubr.f32.mxu0 0.0
      %1009 = vmatmul.mubr.f32.gmra.mrb[0].mxu0 %v783
      %v1010 = vpop.f32.mrb[0].mxu0
      %v1011 = vadd.f32 0.0, %v1010
      %v1012 = vpop.f32.mrb[0].mxu0
      %1013 = vdwg.mxu0
      %v1014 = vsel %vm720, %v568, 0
      %v1016 = vsel %vm720, %v480, 0
      %v1018 = vsel %vm720, %v569, 0
      %v1020 = vsel %vm720, %v483, 0
      %v1022 = vsel %vm720, %v570, 0
      %v1024 = vsel %vm720, %v486, 0
      %v1026 = vsel %vm720, %v571, 0
      %v1028 = vsel %vm720, %v489, 0
      %v1030 = vsel %vm720, %v572, 0
      %v1032 = vsel %vm720, %v492, 0
      %v1034 = vsel %vm720, %v573, 0
      %v1036 = vsel %vm720, %v495, 0
      %v1038 = vsel %vm720, %v574, 0
      %v1040 = vsel %vm720, %v498, 0
      %v1042 = vsel %vm720, %v575, 0
      %v1044 = vsel %vm720, %v501, 0
      %v1046 = vsel %vm720, %v576, 0
      %v1048 = vsel %vm720, %v504, 0
      %v1050 = vsel %vm720, %v577, 0
      %v1052 = vsel %vm720, %v507, 0
      %v1054 = vsel %vm720, %v578, 0
      %v1056 = vsel %vm720, %v510, 0
      %v1058 = vsel %vm720, %v579, 0
      %v1060 = vsel %vm720, %v513, 0
      %v1062 = vsel %vm720, %v580, 0
      %v1064 = vsel %vm720, %v516, 0
      %v1066 = vsel %vm720, %v581, 0
      %v1068 = vsel %vm720, %v519, 0
      %v1070 = vsel %vm720, %v582, 0
      %v1072 = vsel %vm720, %v522, 0
      %v1074 = vsel %vm720, %v583, 0
      %v1076 = vsel %vm720, %v525, 0
      %v1079 = vsel %vm785, %v604, 0
      %1081 = vmatprep.subr.mxu0 0.0
      %1082 = vmatpush1.msra.mxu0 %v1079
      %1083 = vmatprep.subr.mxu0 0.0
      %1084 = vmatpush1.msra.mxu0 0.0
      %1085 = vmatprep.subr.mxu0 0.0
      %1086 = vmatpush1.msra.mxu0 0.0
      %1087 = vmatprep.subr.mxu0 0.0
      %1088 = vmatpush1.msra.mxu0 0.0
      %1089 = vmatprep.subr.mxu0 0.0
      %1090 = vmatpush1.msra.mxu0 0.0
      %1091 = vmatprep.subr.mxu0 0.0
      %1092 = vmatpush1.msra.mxu0 0.0
      %1093 = vmatprep.subr.mxu0 0.0
      %1094 = vmatpush1.msra.mxu0 0.0
      %1095 = vmatprep.subr.mxu0 0.0
      %1096 = vmatpush1.msra.mxu0 0.0
      %1097 = vmatprep.subr.mxu0 0.0
      %1098 = vmatpush1.msra.mxu0 0.0
      %1099 = vmatprep.subr.mxu0 0.0
      %1100 = vmatpush1.msra.mxu0 0.0
      %1101 = vmatprep.subr.mxu0 0.0
      %1102 = vmatpush1.msra.mxu0 0.0
      %1103 = vmatprep.subr.mxu0 0.0
      %1104 = vmatpush1.msra.mxu0 0.0
      %1105 = vmatprep.subr.mxu0 0.0
      %1106 = vmatpush1.msra.mxu0 0.0
      %1107 = vmatprep.subr.mxu0 0.0
      %1108 = vmatpush1.msra.mxu0 0.0
      %1109 = vmatprep.subr.mxu0 0.0
      %1110 = vmatpush1.msra.mxu0 0.0
      %1111 = vmatprep.subr.mxu0 0.0
      %1112 = vmatpush1.msra.mxu0 0.0
      %1113 = vmatprep.subr.mxu0 0.0
      %1114 = vmatpush1.msra.mxu0 0.0
      %1115 = vmatprep.subr.mxu0 0.0
      %1116 = vmatpush1.msra.mxu0 0.0
      %1117 = vmatprep.subr.mxu0 0.0
      %1118 = vmatpush1.msra.mxu0 0.0
      %1119 = vmatprep.subr.mxu0 0.0
      %1120 = vmatpush1.msra.mxu0 0.0
      %1121 = vmatprep.subr.mxu0 0.0
      %1122 = vmatpush1.msra.mxu0 0.0
      %1123 = vmatprep.subr.mxu0 0.0
      %1124 = vmatpush1.msra.mxu0 0.0
      %1125 = vmatprep.subr.mxu0 0.0
      %1126 = vmatpush1.msra.mxu0 0.0
      %1127 = vmatprep.subr.mxu0 0.0
      %1128 = vmatpush1.msra.mxu0 0.0
      %1129 = vmatprep.subr.mxu0 0.0
      %1130 = vmatpush1.msra.mxu0 0.0
      %1131 = vmatprep.subr.mxu0 0.0
      %1132 = vmatpush1.msra.mxu0 0.0
      %1133 = vmatprep.subr.mxu0 0.0
      %1134 = vmatpush1.msra.mxu0 0.0
      %1135 = vmatprep.subr.mxu0 0.0
      %1136 = vmatpush1.msra.mxu0 0.0
      %1137 = vmatprep.subr.mxu0 0.0
      %1138 = vmatpush1.msra.mxu0 0.0
      %1139 = vmatprep.subr.mxu0 0.0
      %1140 = vmatpush1.msra.mxu0 0.0
      %1141 = vmatprep.subr.mxu0 0.0
      %1142 = vmatpush1.msra.mxu0 0.0
      %1143 = vmatprep.subr.mxu0 0.0
      %1144 = vmatpush1.msra.mxu0 0.0
      %1145 = vmatprep.mubr.f32.mxu0 0.0
      %1146 = vmatmul.mubr.f32.gmra.mrb[0].mxu0 %v1014
      %v1147 = vpop.f32.mrb[0].mxu0
      %v1148 = vadd.f32 %v856, %v1147
      %v1149 = vpop.f32.mrb[0].mxu0
      %1150 = vmatprep.mubr.f32.mxu0 0.0
      %1151 = vmatmul.mubr.f32.gmra.mrb[0].mxu0 %v1016
      %v1152 = vpop.f32.mrb[0].mxu0
      %v1153 = vadd.f32 %v861, %v1152
      %v1154 = vpop.f32.mrb[0].mxu0
      %1155 = vmatprep.mubr.f32.mxu0 0.0
      %1156 = vmatmul.mubr.f32.gmra.mrb[0].mxu0 %v1018
      %v1157 = vpop.f32.mrb[0].mxu0
      %v1158 = vadd.f32 %v866, %v1157
      %v1159 = vpop.f32.mrb[0].mxu0
      %1160 = vmatprep.mubr.f32.mxu0 0.0
      %1161 = vmatmul.mubr.f32.gmra.mrb[0].mxu0 %v1020
      %v1162 = vpop.f32.mrb[0].mxu0
      %v1163 = vadd.f32 %v871, %v1162
      %v1164 = vpop.f32.mrb[0].mxu0
      %1165 = vmatprep.mubr.f32.mxu0 0.0
      %1166 = vmatmul.mubr.f32.gmra.mrb[0].mxu0 %v1022
      %v1167 = vpop.f32.mrb[0].mxu0
      %v1168 = vadd.f32 %v876, %v1167
      %v1169 = vpop.f32.mrb[0].mxu0
      %1170 = vmatprep.mubr.f32.mxu0 0.0
      %1171 = vmatmul.mubr.f32.gmra.mrb[0].mxu0 %v1024
      %v1172 = vpop.f32.mrb[0].mxu0
      %v1173 = vadd.f32 %v881, %v1172
      %v1174 = vpop.f32.mrb[0].mxu0
      %1175 = vmatprep.mubr.f32.mxu0 0.0
      %1176 = vmatmul.mubr.f32.gmra.mrb[0].mxu0 %v1026
      %v1177 = vpop.f32.mrb[0].mxu0
      %v1178 = vadd.f32 %v886, %v1177
      %v1179 = vpop.f32.mrb[0].mxu0
      %1180 = vmatprep.mubr.f32.mxu0 0.0
      %1181 = vmatmul.mubr.f32.gmra.mrb[0].mxu0 %v1028
      %v1182 = vpop.f32.mrb[0].mxu0
      %v1183 = vadd.f32 %v891, %v1182
      %v1184 = vpop.f32.mrb[0].mxu0
      %1185 = vmatprep.mubr.f32.mxu0 0.0
      %1186 = vmatmul.mubr.f32.gmra.mrb[0].mxu0 %v1030
      %v1187 = vpop.f32.mrb[0].mxu0
      %v1188 = vadd.f32 %v896, %v1187
      %v1189 = vpop.f32.mrb[0].mxu0
      %1190 = vmatprep.mubr.f32.mxu0 0.0
      %1191 = vmatmul.mubr.f32.gmra.mrb[0].mxu0 %v1032
      %v1192 = vpop.f32.mrb[0].mxu0
      %v1193 = vadd.f32 %v901, %v1192
      %v1194 = vpop.f32.mrb[0].mxu0
      %1195 = vmatprep.mubr.f32.mxu0 0.0
      %1196 = vmatmul.mubr.f32.gmra.mrb[0].mxu0 %v1034
      %v1197 = vpop.f32.mrb[0].mxu0
      %v1198 = vadd.f32 %v906, %v1197
      %v1199 = vpop.f32.mrb[0].mxu0
      %1200 = vmatprep.mubr.f32.mxu0 0.0
      %1201 = vmatmul.mubr.f32.gmra.mrb[0].mxu0 %v1036
      %v1202 = vpop.f32.mrb[0].mxu0
      %v1203 = vadd.f32 %v911, %v1202
      %v1204 = vpop.f32.mrb[0].mxu0
      %1205 = vmatprep.mubr.f32.mxu0 0.0
      %1206 = vmatmul.mubr.f32.gmra.mrb[0].mxu0 %v1038
      %v1207 = vpop.f32.mrb[0].mxu0
      %v1208 = vadd.f32 %v916, %v1207
      %v1209 = vpop.f32.mrb[0].mxu0
      %1210 = vmatprep.mubr.f32.mxu0 0.0
      %1211 = vmatmul.mubr.f32.gmra.mrb[0].mxu0 %v1040
      %v1212 = vpop.f32.mrb[0].mxu0
      %v1213 = vadd.f32 %v921, %v1212
      %v1214 = vpop.f32.mrb[0].mxu0
      %1215 = vmatprep.mubr.f32.mxu0 0.0
      %1216 = vmatmul.mubr.f32.gmra.mrb[0].mxu0 %v1042
      %v1217 = vpop.f32.mrb[0].mxu0
      %v1218 = vadd.f32 %v926, %v1217
      %v1219 = vpop.f32.mrb[0].mxu0
      %1220 = vmatprep.mubr.f32.mxu0 0.0
      %1221 = vmatmul.mubr.f32.gmra.mrb[0].mxu0 %v1044
      %v1222 = vpop.f32.mrb[0].mxu0
      %v1223 = vadd.f32 %v931, %v1222
      %v1224 = vpop.f32.mrb[0].mxu0
      %1225 = vmatprep.mubr.f32.mxu0 0.0
      %1226 = vmatmul.mubr.f32.gmra.mrb[0].mxu0 %v1046
      %v1227 = vpop.f32.mrb[0].mxu0
      %v1228 = vadd.f32 %v936, %v1227
      %v1229 = vpop.f32.mrb[0].mxu0
      %1230 = vmatprep.mubr.f32.mxu0 0.0
      %1231 = vmatmul.mubr.f32.gmra.mrb[0].mxu0 %v1048
      %v1232 = vpop.f32.mrb[0].mxu0
      %v1233 = vadd.f32 %v941, %v1232
      %v1234 = vpop.f32.mrb[0].mxu0
      %1235 = vmatprep.mubr.f32.mxu0 0.0
      %1236 = vmatmul.mubr.f32.gmra.mrb[0].mxu0 %v1050
      %v1237 = vpop.f32.mrb[0].mxu0
      %v1238 = vadd.f32 %v946, %v1237
      %v1239 = vpop.f32.mrb[0].mxu0
      %1240 = vmatprep.mubr.f32.mxu0 0.0
      %1241 = vmatmul.mubr.f32.gmra.mrb[0].mxu0 %v1052
      %v1242 = vpop.f32.mrb[0].mxu0
      %v1243 = vadd.f32 %v951, %v1242
      %v1244 = vpop.f32.mrb[0].mxu0
      %1245 = vmatprep.mubr.f32.mxu0 0.0
      %1246 = vmatmul.mubr.f32.gmra.mrb[0].mxu0 %v1054
      %v1247 = vpop.f32.mrb[0].mxu0
      %v1248 = vadd.f32 %v956, %v1247
      %v1249 = vpop.f32.mrb[0].mxu0
      %1250 = vmatprep.mubr.f32.mxu0 0.0
      %1251 = vmatmul.mubr.f32.gmra.mrb[0].mxu0 %v1056
      %v1252 = vpop.f32.mrb[0].mxu0
      %v1253 = vadd.f32 %v961, %v1252
      %v1254 = vpop.f32.mrb[0].mxu0
      %1255 = vmatprep.mubr.f32.mxu0 0.0
      %1256 = vmatmul.mubr.f32.gmra.mrb[0].mxu0 %v1058
      %v1257 = vpop.f32.mrb[0].mxu0
      %v1258 = vadd.f32 %v966, %v1257
      %v1259 = vpop.f32.mrb[0].mxu0
      %1260 = vmatprep.mubr.f32.mxu0 0.0
      %1261 = vmatmul.mubr.f32.gmra.mrb[0].mxu0 %v1060
      %v1262 = vpop.f32.mrb[0].mxu0
      %v1263 = vadd.f32 %v971, %v1262
      %v1264 = vpop.f32.mrb[0].mxu0
      %1265 = vmatprep.mubr.f32.mxu0 0.0
      %1266 = vmatmul.mubr.f32.gmra.mrb[0].mxu0 %v1062
      %v1267 = vpop.f32.mrb[0].mxu0
      %v1268 = vadd.f32 %v976, %v1267
      %v1269 = vpop.f32.mrb[0].mxu0
      %1270 = vmatprep.mubr.f32.mxu0 0.0
      %1271 = vmatmul.mubr.f32.gmra.mrb[0].mxu0 %v1064
      %v1272 = vpop.f32.mrb[0].mxu0
      %v1273 = vadd.f32 %v981, %v1272
      %v1274 = vpop.f32.mrb[0].mxu0
      %1275 = vmatprep.mubr.f32.mxu0 0.0
      %1276 = vmatmul.mubr.f32.gmra.mrb[0].mxu0 %v1066
      %v1277 = vpop.f32.mrb[0].mxu0
      %v1278 = vadd.f32 %v986, %v1277
      %v1279 = vpop.f32.mrb[0].mxu0
      %1280 = vmatprep.mubr.f32.mxu0 0.0
      %1281 = vmatmul.mubr.f32.gmra.mrb[0].mxu0 %v1068
      %v1282 = vpop.f32.mrb[0].mxu0
      %v1283 = vadd.f32 %v991, %v1282
      %v1284 = vpop.f32.mrb[0].mxu0
      %1285 = vmatprep.mubr.f32.mxu0 0.0
      %1286 = vmatmul.mubr.f32.gmra.mrb[0].mxu0 %v1070
      %v1287 = vpop.f32.mrb[0].mxu0
      %v1288 = vadd.f32 %v996, %v1287
      %v1289 = vpop.f32.mrb[0].mxu0
      %1290 = vmatprep.mubr.f32.mxu0 0.0
      %1291 = vmatmul.mubr.f32.gmra.mrb[0].mxu0 %v1072
      %v1292 = vpop.f32.mrb[0].mxu0
      %v1293 = vadd.f32 %v1001, %v1292
      %v1294 = vpop.f32.mrb[0].mxu0
      %1295 = vmatprep.mubr.f32.mxu0 0.0
      %1296 = vmatmul.mubr.f32.gmra.mrb[0].mxu0 %v1074
      %v1297 = vpop.f32.mrb[0].mxu0
      %v1298 = vadd.f32 %v1006, %v1297
      %v1299 = vpop.f32.mrb[0].mxu0
      %1300 = vmatprep.mubr.f32.mxu0 0.0
      %1301 = vmatmul.mubr.f32.gmra.mrb[0].mxu0 %v1076
      %v1302 = vpop.f32.mrb[0].mxu0
      %v1303 = vadd.f32 %v1011, %v1302
      %v1304 = vpop.f32.mrb[0].mxu0
      %1305 = vdwg.mxu0
      %vm1306 = vcmask 1045504
      %v1307 = vrot.slane %v568, 2
      %v1308 = vrot.slane %v480, 2
      %v1309 = vsel %vm1306, %v1307, %v1308
      %v1310 = vrot.slane %v586, 2
      %v1311 = vsel %vm1306, %v1308, %v1310
      %v1312 = vrot.slane %v569, 2
      %v1313 = vrot.slane %v483, 2
      %v1314 = vsel %vm1306, %v1312, %v1313
      %v1315 = vrot.slane %v587, 2
      %v1316 = vsel %vm1306, %v1313, %v1315
      %v1317 = vrot.slane %v570, 2
      %v1318 = vrot.slane %v486, 2
      %v1319 = vsel %vm1306, %v1317, %v1318
      %v1320 = vrot.slane %v588, 2
      %v1321 = vsel %vm1306, %v1318, %v1320
      %v1322 = vrot.slane %v571, 2
      %v1323 = vrot.slane %v489, 2
      %v1324 = vsel %vm1306, %v1322, %v1323
      %v1325 = vrot.slane %v589, 2
      %v1326 = vsel %vm1306, %v1323, %v1325
      %v1327 = vrot.slane %v572, 2
      %v1328 = vrot.slane %v492, 2
      %v1329 = vsel %vm1306, %v1327, %v1328
      %v1330 = vrot.slane %v590, 2
      %v1331 = vsel %vm1306, %v1328, %v1330
      %v1332 = vrot.slane %v573, 2
      %v1333 = vrot.slane %v495, 2
      %v1334 = vsel %vm1306, %v1332, %v1333
      %v1335 = vrot.slane %v591, 2
      %v1336 = vsel %vm1306, %v1333, %v1335
      %v1337 = vrot.slane %v574, 2
      %v1338 = vrot.slane %v498, 2
      %v1339 = vsel %vm1306, %v1337, %v1338
      %v1340 = vrot.slane %v592, 2
      %v1341 = vsel %vm1306, %v1338, %v1340
      %v1342 = vrot.slane %v575, 2
      %v1343 = vrot.slane %v501, 2
      %v1344 = vsel %vm1306, %v1342, %v1343
      %v1345 = vrot.slane %v593, 2
      %v1346 = vsel %vm1306, %v1343, %v1345
      %v1347 = vrot.slane %v576, 2
      %v1348 = vrot.slane %v504, 2
      %v1349 = vsel %vm1306, %v1347, %v1348
      %v1350 = vrot.slane %v594, 2
      %v1351 = vsel %vm1306, %v1348, %v1350
      %v1352 = vrot.slane %v577, 2
      %v1353 = vrot.slane %v507, 2
      %v1354 = vsel %vm1306, %v1352, %v1353
      %v1355 = vrot.slane %v595, 2
      %v1356 = vsel %vm1306, %v1353, %v1355
      %v1357 = vrot.slane %v578, 2
      %v1358 = vrot.slane %v510, 2
      %v1359 = vsel %vm1306, %v1357, %v1358
      %v1360 = vrot.slane %v596, 2
      %v1361 = vsel %vm1306, %v1358, %v1360
      %v1362 = vrot.slane %v579, 2
      %v1363 = vrot.slane %v513, 2
      %v1364 = vsel %vm1306, %v1362, %v1363
      %v1365 = vrot.slane %v597, 2
      %v1366 = vsel %vm1306, %v1363, %v1365
      %v1367 = vrot.slane %v580, 2
      %v1368 = vrot.slane %v516, 2
      %v1369 = vsel %vm1306, %v1367, %v1368
      %v1370 = vrot.slane %v598, 2
      %v1371 = vsel %vm1306, %v1368, %v1370
      %v1372 = vrot.slane %v581, 2
      %v1373 = vrot.slane %v519, 2
      %v1374 = vsel %vm1306, %v1372, %v1373
      %v1375 = vrot.slane %v599, 2
      %v1376 = vsel %vm1306, %v1373, %v1375
      %v1377 = vrot.slane %v582, 2
      %v1378 = vrot.slane %v522, 2
      %v1379 = vsel %vm1306, %v1377, %v1378
      %v1380 = vrot.slane %v600, 2
      %v1381 = vsel %vm1306, %v1378, %v1380
      %v1382 = vrot.slane %v583, 2
      %v1383 = vrot.slane %v525, 2
      %v1384 = vsel %vm1306, %v1382, %v1383
      %v1385 = vrot.slane %v601, 2
      %v1386 = vsel %vm1306, %v1383, %v1385
      %s1387 = scalar_lea.vmem %s3, 8
      %v1388 = vld [vmem:[%s1387] sm:$0xf]
      %v1389 = vsel %vm720, %v1309, 0
      %v1391 = vsel %vm720, %v1311, 0
      %v1393 = vsel %vm720, %v1314, 0
      %v1395 = vsel %vm720, %v1316, 0
      %v1397 = vsel %vm720, %v1319, 0
      %v1399 = vsel %vm720, %v1321, 0
      %v1401 = vsel %vm720, %v1324, 0
      %v1403 = vsel %vm720, %v1326, 0
      %v1405 = vsel %vm720, %v1329, 0
      %v1407 = vsel %vm720, %v1331, 0
      %v1409 = vsel %vm720, %v1334, 0
      %v1411 = vsel %vm720, %v1336, 0
      %v1413 = vsel %vm720, %v1339, 0
      %v1415 = vsel %vm720, %v1341, 0
      %v1417 = vsel %vm720, %v1344, 0
      %v1419 = vsel %vm720, %v1346, 0
      %v1421 = vsel %vm720, %v1349, 0
      %v1423 = vsel %vm720, %v1351, 0
      %v1425 = vsel %vm720, %v1354, 0
      %v1427 = vsel %vm720, %v1356, 0
      %v1429 = vsel %vm720, %v1359, 0
      %v1431 = vsel %vm720, %v1361, 0
      %v1433 = vsel %vm720, %v1364, 0
      %v1435 = vsel %vm720, %v1366, 0
      %v1437 = vsel %vm720, %v1369, 0
      %v1439 = vsel %vm720, %v1371, 0
      %v1441 = vsel %vm720, %v1374, 0
      %v1443 = vsel %vm720, %v1376, 0
      %v1445 = vsel %vm720, %v1379, 0
      %v1447 = vsel %vm720, %v1381, 0
      %v1449 = vsel %vm720, %v1384, 0
      %v1451 = vsel %vm720, %v1386, 0
      %v1454 = vsel %vm785, %v1388, 0
      %1456 = vmatprep.subr.mxu0 0.0
      %1457 = vmatpush1.msra.mxu0 %v1454
      %1458 = vmatprep.subr.mxu0 0.0
      %1459 = vmatpush1.msra.mxu0 0.0
      %1460 = vmatprep.subr.mxu0 0.0
      %1461 = vmatpush1.msra.mxu0 0.0
      %1462 = vmatprep.subr.mxu0 0.0
      %1463 = vmatpush1.msra.mxu0 0.0
      %1464 = vmatprep.subr.mxu0 0.0
      %1465 = vmatpush1.msra.mxu0 0.0
      %1466 = vmatprep.subr.mxu0 0.0
      %1467 = vmatpush1.msra.mxu0 0.0
      %1468 = vmatprep.subr.mxu0 0.0
      %1469 = vmatpush1.msra.mxu0 0.0
      %1470 = vmatprep.subr.mxu0 0.0
      %1471 = vmatpush1.msra.mxu0 0.0
      %1472 = vmatprep.subr.mxu0 0.0
      %1473 = vmatpush1.msra.mxu0 0.0
      %1474 = vmatprep.subr.mxu0 0.0
      %1475 = vmatpush1.msra.mxu0 0.0
      %1476 = vmatprep.subr.mxu0 0.0
      %1477 = vmatpush1.msra.mxu0 0.0
      %1478 = vmatprep.subr.mxu0 0.0
      %1479 = vmatpush1.msra.mxu0 0.0
      %1480 = vmatprep.subr.mxu0 0.0
      %1481 = vmatpush1.msra.mxu0 0.0
      %1482 = vmatprep.subr.mxu0 0.0
      %1483 = vmatpush1.msra.mxu0 0.0
      %1484 = vmatprep.subr.mxu0 0.0
      %1485 = vmatpush1.msra.mxu0 0.0
      %1486 = vmatprep.subr.mxu0 0.0
      %1487 = vmatpush1.msra.mxu0 0.0
      %1488 = vmatprep.subr.mxu0 0.0
      %1489 = vmatpush1.msra.mxu0 0.0
      %1490 = vmatprep.subr.mxu0 0.0
      %1491 = vmatpush1.msra.mxu0 0.0
      %1492 = vmatprep.subr.mxu0 0.0
      %1493 = vmatpush1.msra.mxu0 0.0
      %1494 = vmatprep.subr.mxu0 0.0
      %1495 = vmatpush1.msra.mxu0 0.0
      %1496 = vmatprep.subr.mxu0 0.0
      %1497 = vmatpush1.msra.mxu0 0.0
      %1498 = vmatprep.subr.mxu0 0.0
      %1499 = vmatpush1.msra.mxu0 0.0
      %1500 = vmatprep.subr.mxu0 0.0
      %1501 = vmatpush1.msra.mxu0 0.0
      %1502 = vmatprep.subr.mxu0 0.0
      %1503 = vmatpush1.msra.mxu0 0.0
      %1504 = vmatprep.subr.mxu0 0.0
      %1505 = vmatpush1.msra.mxu0 0.0
      %1506 = vmatprep.subr.mxu0 0.0
      %1507 = vmatpush1.msra.mxu0 0.0
      %1508 = vmatprep.subr.mxu0 0.0
      %1509 = vmatpush1.msra.mxu0 0.0
      %1510 = vmatprep.subr.mxu0 0.0
      %1511 = vmatpush1.msra.mxu0 0.0
      %1512 = vmatprep.subr.mxu0 0.0
      %1513 = vmatpush1.msra.mxu0 0.0
      %1514 = vmatprep.subr.mxu0 0.0
      %1515 = vmatpush1.msra.mxu0 0.0
      %1516 = vmatprep.subr.mxu0 0.0
      %1517 = vmatpush1.msra.mxu0 0.0
      %1518 = vmatprep.subr.mxu0 0.0
      %1519 = vmatpush1.msra.mxu0 0.0
      %1520 = vmatprep.mubr.f32.mxu0 0.0
      %1521 = vmatmul.mubr.f32.gmra.mrb[0].mxu0 %v1389
      %v1522 = vpop.f32.mrb[0].mxu0
      %v1523 = vadd.f32 0.0, %v1522
      %v1524 = vpop.f32.mrb[0].mxu0
      %1525 = vmatprep.mubr.f32.mxu0 0.0
      %1526 = vmatmul.mubr.f32.gmra.mrb[0].mxu0 %v1391
      %v1527 = vpop.f32.mrb[0].mxu0
      %v1528 = vadd.f32 0.0, %v1527
      %v1529 = vpop.f32.mrb[0].mxu0
      %1530 = vmatprep.mubr.f32.mxu0 0.0
      %1531 = vmatmul.mubr.f32.gmra.mrb[0].mxu0 %v1393
      %v1532 = vpop.f32.mrb[0].mxu0
      %v1533 = vadd.f32 0.0, %v1532
      %v1534 = vpop.f32.mrb[0].mxu0
      %1535 = vmatprep.mubr.f32.mxu0 0.0
      %1536 = vmatmul.mubr.f32.gmra.mrb[0].mxu0 %v1395
      %v1537 = vpop.f32.mrb[0].mxu0
      %v1538 = vadd.f32 0.0, %v1537
      %v1539 = vpop.f32.mrb[0].mxu0
      %1540 = vmatprep.mubr.f32.mxu0 0.0
      %1541 = vmatmul.mubr.f32.gmra.mrb[0].mxu0 %v1397
      %v1542 = vpop.f32.mrb[0].mxu0
      %v1543 = vadd.f32 0.0, %v1542
      %v1544 = vpop.f32.mrb[0].mxu0
      %1545 = vmatprep.mubr.f32.mxu0 0.0
      %1546 = vmatmul.mubr.f32.gmra.mrb[0].mxu0 %v1399
      %v1547 = vpop.f32.mrb[0].mxu0
      %v1548 = vadd.f32 0.0, %v1547
      %v1549 = vpop.f32.mrb[0].mxu0
      %1550 = vmatprep.mubr.f32.mxu0 0.0
      %1551 = vmatmul.mubr.f32.gmra.mrb[0].mxu0 %v1401
      %v1552 = vpop.f32.mrb[0].mxu0
      %v1553 = vadd.f32 0.0, %v1552
      %v1554 = vpop.f32.mrb[0].mxu0
      %1555 = vmatprep.mubr.f32.mxu0 0.0
      %1556 = vmatmul.mubr.f32.gmra.mrb[0].mxu0 %v1403
      %v1557 = vpop.f32.mrb[0].mxu0
      %v1558 = vadd.f32 0.0, %v1557
      %v1559 = vpop.f32.mrb[0].mxu0
      %1560 = vmatprep.mubr.f32.mxu0 0.0
      %1561 = vmatmul.mubr.f32.gmra.mrb[0].mxu0 %v1405
      %v1562 = vpop.f32.mrb[0].mxu0
      %v1563 = vadd.f32 0.0, %v1562
      %v1564 = vpop.f32.mrb[0].mxu0
      %1565 = vmatprep.mubr.f32.mxu0 0.0
      %1566 = vmatmul.mubr.f32.gmra.mrb[0].mxu0 %v1407
      %v1567 = vpop.f32.mrb[0].mxu0
      %v1568 = vadd.f32 0.0, %v1567
      %v1569 = vpop.f32.mrb[0].mxu0
      %1570 = vmatprep.mubr.f32.mxu0 0.0
      %1571 = vmatmul.mubr.f32.gmra.mrb[0].mxu0 %v1409
      %v1572 = vpop.f32.mrb[0].mxu0
      %v1573 = vadd.f32 0.0, %v1572
      %v1574 = vpop.f32.mrb[0].mxu0
      %1575 = vmatprep.mubr.f32.mxu0 0.0
      %1576 = vmatmul.mubr.f32.gmra.mrb[0].mxu0 %v1411
      %v1577 = vpop.f32.mrb[0].mxu0
      %v1578 = vadd.f32 0.0, %v1577
      %v1579 = vpop.f32.mrb[0].mxu0
      %1580 = vmatprep.mubr.f32.mxu0 0.0
      %1581 = vmatmul.mubr.f32.gmra.mrb[0].mxu0 %v1413
      %v1582 = vpop.f32.mrb[0].mxu0
      %v1583 = vadd.f32 0.0, %v1582
      %v1584 = vpop.f32.mrb[0].mxu0
      %1585 = vmatprep.mubr.f32.mxu0 0.0
      %1586 = vmatmul.mubr.f32.gmra.mrb[0].mxu0 %v1415
      %v1587 = vpop.f32.mrb[0].mxu0
      %v1588 = vadd.f32 0.0, %v1587
      %v1589 = vpop.f32.mrb[0].mxu0
      %1590 = vmatprep.mubr.f32.mxu0 0.0
      %1591 = vmatmul.mubr.f32.gmra.mrb[0].mxu0 %v1417
      %v1592 = vpop.f32.mrb[0].mxu0
      %v1593 = vadd.f32 0.0, %v1592
      %v1594 = vpop.f32.mrb[0].mxu0
      %1595 = vmatprep.mubr.f32.mxu0 0.0
      %1596 = vmatmul.mubr.f32.gmra.mrb[0].mxu0 %v1419
      %v1597 = vpop.f32.mrb[0].mxu0
      %v1598 = vadd.f32 0.0, %v1597
      %v1599 = vpop.f32.mrb[0].mxu0
      %1600 = vmatprep.mubr.f32.mxu0 0.0
      %1601 = vmatmul.mubr.f32.gmra.mrb[0].mxu0 %v1421
      %v1602 = vpop.f32.mrb[0].mxu0
      %v1603 = vadd.f32 0.0, %v1602
      %v1604 = vpop.f32.mrb[0].mxu0
      %1605 = vmatprep.mubr.f32.mxu0 0.0
      %1606 = vmatmul.mubr.f32.gmra.mrb[0].mxu0 %v1423
      %v1607 = vpop.f32.mrb[0].mxu0
      %v1608 = vadd.f32 0.0, %v1607
      %v1609 = vpop.f32.mrb[0].mxu0
      %1610 = vmatprep.mubr.f32.mxu0 0.0
      %1611 = vmatmul.mubr.f32.gmra.mrb[0].mxu0 %v1425
      %v1612 = vpop.f32.mrb[0].mxu0
      %v1613 = vadd.f32 0.0, %v1612
      %v1614 = vpop.f32.mrb[0].mxu0
      %1615 = vmatprep.mubr.f32.mxu0 0.0
      %1616 = vmatmul.mubr.f32.gmra.mrb[0].mxu0 %v1427
      %v1617 = vpop.f32.mrb[0].mxu0
      %v1618 = vadd.f32 0.0, %v1617
      %v1619 = vpop.f32.mrb[0].mxu0
      %1620 = vmatprep.mubr.f32.mxu0 0.0
      %1621 = vmatmul.mubr.f32.gmra.mrb[0].mxu0 %v1429
      %v1622 = vpop.f32.mrb[0].mxu0
      %v1623 = vadd.f32 0.0, %v1622
      %v1624 = vpop.f32.mrb[0].mxu0
      %1625 = vmatprep.mubr.f32.mxu0 0.0
      %1626 = vmatmul.mubr.f32.gmra.mrb[0].mxu0 %v1431
      %v1627 = vpop.f32.mrb[0].mxu0
      %v1628 = vadd.f32 0.0, %v1627
      %v1629 = vpop.f32.mrb[0].mxu0
      %1630 = vmatprep.mubr.f32.mxu0 0.0
      %1631 = vmatmul.mubr.f32.gmra.mrb[0].mxu0 %v1433
      %v1632 = vpop.f32.mrb[0].mxu0
      %v1633 = vadd.f32 0.0, %v1632
      %v1634 = vpop.f32.mrb[0].mxu0
      %1635 = vmatprep.mubr.f32.mxu0 0.0
      %1636 = vmatmul.mubr.f32.gmra.mrb[0].mxu0 %v1435
      %v1637 = vpop.f32.mrb[0].mxu0
      %v1638 = vadd.f32 0.0, %v1637
      %v1639 = vpop.f32.mrb[0].mxu0
      %1640 = vmatprep.mubr.f32.mxu0 0.0
      %1641 = vmatmul.mubr.f32.gmra.mrb[0].mxu0 %v1437
      %v1642 = vpop.f32.mrb[0].mxu0
      %v1643 = vadd.f32 0.0, %v1642
      %v1644 = vpop.f32.mrb[0].mxu0
      %1645 = vmatprep.mubr.f32.mxu0 0.0
      %1646 = vmatmul.mubr.f32.gmra.mrb[0].mxu0 %v1439
      %v1647 = vpop.f32.mrb[0].mxu0
      %v1648 = vadd.f32 0.0, %v1647
      %v1649 = vpop.f32.mrb[0].mxu0
      %1650 = vmatprep.mubr.f32.mxu0 0.0
      %1651 = vmatmul.mubr.f32.gmra.mrb[0].mxu0 %v1441
      %v1652 = vpop.f32.mrb[0].mxu0
      %v1653 = vadd.f32 0.0, %v1652
      %v1654 = vpop.f32.mrb[0].mxu0
      %1655 = vmatprep.mubr.f32.mxu0 0.0
      %1656 = vmatmul.mubr.f32.gmra.mrb[0].mxu0 %v1443
      %v1657 = vpop.f32.mrb[0].mxu0
      %v1658 = vadd.f32 0.0, %v1657
      %v1659 = vpop.f32.mrb[0].mxu0
      %1660 = vmatprep.mubr.f32.mxu0 0.0
      %1661 = vmatmul.mubr.f32.gmra.mrb[0].mxu0 %v1445
      %v1662 = vpop.f32.mrb[0].mxu0
      %v1663 = vadd.f32 0.0, %v1662
      %v1664 = vpop.f32.mrb[0].mxu0
      %1665 = vmatprep.mubr.f32.mxu0 0.0
      %1666 = vmatmul.mubr.f32.gmra.mrb[0].mxu0 %v1447
      %v1667 = vpop.f32.mrb[0].mxu0
      %v1668 = vadd.f32 0.0, %v1667
      %v1669 = vpop.f32.mrb[0].mxu0
      %1670 = vmatprep.mubr.f32.mxu0 0.0
      %1671 = vmatmul.mubr.f32.gmra.mrb[0].mxu0 %v1449
      %v1672 = vpop.f32.mrb[0].mxu0
      %v1673 = vadd.f32 0.0, %v1672
      %v1674 = vpop.f32.mrb[0].mxu0
      %1675 = vmatprep.mubr.f32.mxu0 0.0
      %1676 = vmatmul.mubr.f32.gmra.mrb[0].mxu0 %v1451
      %v1677 = vpop.f32.mrb[0].mxu0
      %v1678 = vadd.f32 0.0, %v1677
      %v1679 = vpop.f32.mrb[0].mxu0
      %1680 = vdwg.mxu0
      %v1681 = vadd.f32 %v1148, %v1523
      %v1682 = vadd.f32 %v1153, %v1528
      %v1683 = vadd.f32 %v1158, %v1533
      %v1684 = vadd.f32 %v1163, %v1538
      %v1685 = vadd.f32 %v1168, %v1543
      %v1686 = vadd.f32 %v1173, %v1548
      %v1687 = vadd.f32 %v1178, %v1553
      %v1688 = vadd.f32 %v1183, %v1558
      %v1689 = vadd.f32 %v1188, %v1563
      %v1690 = vadd.f32 %v1193, %v1568
      %v1691 = vadd.f32 %v1198, %v1573
      %v1692 = vadd.f32 %v1203, %v1578
      %v1693 = vadd.f32 %v1208, %v1583
      %v1694 = vadd.f32 %v1213, %v1588
      %v1695 = vadd.f32 %v1218, %v1593
      %v1696 = vadd.f32 %v1223, %v1598
      %v1697 = vadd.f32 %v1228, %v1603
      %v1698 = vadd.f32 %v1233, %v1608
      %v1699 = vadd.f32 %v1238, %v1613
      %v1700 = vadd.f32 %v1243, %v1618
      %v1701 = vadd.f32 %v1248, %v1623
      %v1702 = vadd.f32 %v1253, %v1628
      %v1703 = vadd.f32 %v1258, %v1633
      %v1704 = vadd.f32 %v1263, %v1638
      %v1705 = vadd.f32 %v1268, %v1643
      %v1706 = vadd.f32 %v1273, %v1648
      %v1707 = vadd.f32 %v1278, %v1653
      %v1708 = vadd.f32 %v1283, %v1658
      %v1709 = vadd.f32 %v1288, %v1663
      %v1710 = vadd.f32 %v1293, %v1668
      %v1711 = vadd.f32 %v1298, %v1673
      %v1712 = vadd.f32 %v1303, %v1678
      %s1713 = scalar_lea.vmem %s3, 12
      %v1714 = vld [vmem:[%s1713] sm:$0xf]
      %v1716 = vsel %vm720, %v584, 0
      %v1718 = vsel %vm720, %v528, 0
      %v1721 = vsel %vm785, %v1714, 0
      %1723 = vmatprep.subr.mxu0 0.0
      %1724 = vmatpush1.msra.mxu0 %v1721
      %1725 = vmatprep.subr.mxu0 0.0
      %1726 = vmatpush1.msra.mxu0 0.0
      %1727 = vmatprep.subr.mxu0 0.0
      %1728 = vmatpush1.msra.mxu0 0.0
      %1729 = vmatprep.subr.mxu0 0.0
      %1730 = vmatpush1.msra.mxu0 0.0
      %1731 = vmatprep.subr.mxu0 0.0
      %1732 = vmatpush1.msra.mxu0 0.0
      %1733 = vmatprep.subr.mxu0 0.0
      %1734 = vmatpush1.msra.mxu0 0.0
      %1735 = vmatprep.subr.mxu0 0.0
      %1736 = vmatpush1.msra.mxu0 0.0
      %1737 = vmatprep.subr.mxu0 0.0
      %1738 = vmatpush1.msra.mxu0 0.0
      %1739 = vmatprep.subr.mxu0 0.0
      %1740 = vmatpush1.msra.mxu0 0.0
      %1741 = vmatprep.subr.mxu0 0.0
      %1742 = vmatpush1.msra.mxu0 0.0
      %1743 = vmatprep.subr.mxu0 0.0
      %1744 = vmatpush1.msra.mxu0 0.0
      %1745 = vmatprep.subr.mxu0 0.0
      %1746 = vmatpush1.msra.mxu0 0.0
      %1747 = vmatprep.subr.mxu0 0.0
      %1748 = vmatpush1.msra.mxu0 0.0
      %1749 = vmatprep.subr.mxu0 0.0
      %1750 = vmatpush1.msra.mxu0 0.0
      %1751 = vmatprep.subr.mxu0 0.0
      %1752 = vmatpush1.msra.mxu0 0.0
      %1753 = vmatprep.subr.mxu0 0.0
      %1754 = vmatpush1.msra.mxu0 0.0
      %1755 = vmatprep.subr.mxu0 0.0
      %1756 = vmatpush1.msra.mxu0 0.0
      %1757 = vmatprep.subr.mxu0 0.0
      %1758 = vmatpush1.msra.mxu0 0.0
      %1759 = vmatprep.subr.mxu0 0.0
      %1760 = vmatpush1.msra.mxu0 0.0
      %1761 = vmatprep.subr.mxu0 0.0
      %1762 = vmatpush1.msra.mxu0 0.0
      %1763 = vmatprep.subr.mxu0 0.0
      %1764 = vmatpush1.msra.mxu0 0.0
      %1765 = vmatprep.subr.mxu0 0.0
      %1766 = vmatpush1.msra.mxu0 0.0
      %1767 = vmatprep.subr.mxu0 0.0
      %1768 = vmatpush1.msra.mxu0 0.0
      %1769 = vmatprep.subr.mxu0 0.0
      %1770 = vmatpush1.msra.mxu0 0.0
      %1771 = vmatprep.subr.mxu0 0.0
      %1772 = vmatpush1.msra.mxu0 0.0
      %1773 = vmatprep.subr.mxu0 0.0
      %1774 = vmatpush1.msra.mxu0 0.0
      %1775 = vmatprep.subr.mxu0 0.0
      %1776 = vmatpush1.msra.mxu0 0.0
      %1777 = vmatprep.subr.mxu0 0.0
      %1778 = vmatpush1.msra.mxu0 0.0
      %1779 = vmatprep.subr.mxu0 0.0
      %1780 = vmatpush1.msra.mxu0 0.0
      %1781 = vmatprep.subr.mxu0 0.0
      %1782 = vmatpush1.msra.mxu0 0.0
      %1783 = vmatprep.subr.mxu0 0.0
      %1784 = vmatpush1.msra.mxu0 0.0
      %1785 = vmatprep.subr.mxu0 0.0
      %1786 = vmatpush1.msra.mxu0 0.0
      %1787 = vmatprep.mubr.f32.mxu0 0.0
      %1788 = vmatmul.mubr.f32.gmra.mrb[0].mxu0 %v1018
      %v1789 = vpop.f32.mrb[0].mxu0
      %v1790 = vadd.f32 0.0, %v1789
      %v1791 = vpop.f32.mrb[0].mxu0
      %1792 = vmatprep.mubr.f32.mxu0 0.0
      %1793 = vmatmul.mubr.f32.gmra.mrb[0].mxu0 %v1020
      %v1794 = vpop.f32.mrb[0].mxu0
      %v1795 = vadd.f32 0.0, %v1794
      %v1796 = vpop.f32.mrb[0].mxu0
      %1797 = vmatprep.mubr.f32.mxu0 0.0
      %1798 = vmatmul.mubr.f32.gmra.mrb[0].mxu0 %v1022
      %v1799 = vpop.f32.mrb[0].mxu0
      %v1800 = vadd.f32 0.0, %v1799
      %v1801 = vpop.f32.mrb[0].mxu0
      %1802 = vmatprep.mubr.f32.mxu0 0.0
      %1803 = vmatmul.mubr.f32.gmra.mrb[0].mxu0 %v1024
      %v1804 = vpop.f32.mrb[0].mxu0
      %v1805 = vadd.f32 0.0, %v1804
      %v1806 = vpop.f32.mrb[0].mxu0
      %1807 = vmatprep.mubr.f32.mxu0 0.0
      %1808 = vmatmul.mubr.f32.gmra.mrb[0].mxu0 %v1026
      %v1809 = vpop.f32.mrb[0].mxu0
      %v1810 = vadd.f32 0.0, %v1809
      %v1811 = vpop.f32.mrb[0].mxu0
      %1812 = vmatprep.mubr.f32.mxu0 0.0
      %1813 = vmatmul.mubr.f32.gmra.mrb[0].mxu0 %v1028
      %v1814 = vpop.f32.mrb[0].mxu0
      %v1815 = vadd.f32 0.0, %v1814
      %v1816 = vpop.f32.mrb[0].mxu0
      %1817 = vmatprep.mubr.f32.mxu0 0.0
      %1818 = vmatmul.mubr.f32.gmra.mrb[0].mxu0 %v1030
      %v1819 = vpop.f32.mrb[0].mxu0
      %v1820 = vadd.f32 0.0, %v1819
      %v1821 = vpop.f32.mrb[0].mxu0
      %1822 = vmatprep.mubr.f32.mxu0 0.0
      %1823 = vmatmul.mubr.f32.gmra.mrb[0].mxu0 %v1032
      %v1824 = vpop.f32.mrb[0].mxu0
      %v1825 = vadd.f32 0.0, %v1824
      %v1826 = vpop.f32.mrb[0].mxu0
      %1827 = vmatprep.mubr.f32.mxu0 0.0
      %1828 = vmatmul.mubr.f32.gmra.mrb[0].mxu0 %v1034
      %v1829 = vpop.f32.mrb[0].mxu0
      %v1830 = vadd.f32 0.0, %v1829
      %v1831 = vpop.f32.mrb[0].mxu0
      %1832 = vmatprep.mubr.f32.mxu0 0.0
      %1833 = vmatmul.mubr.f32.gmra.mrb[0].mxu0 %v1036
      %v1834 = vpop.f32.mrb[0].mxu0
      %v1835 = vadd.f32 0.0, %v1834
      %v1836 = vpop.f32.mrb[0].mxu0
      %1837 = vmatprep.mubr.f32.mxu0 0.0
      %1838 = vmatmul.mubr.f32.gmra.mrb[0].mxu0 %v1038
      %v1839 = vpop.f32.mrb[0].mxu0
      %v1840 = vadd.f32 0.0, %v1839
      %v1841 = vpop.f32.mrb[0].mxu0
      %1842 = vmatprep.mubr.f32.mxu0 0.0
      %1843 = vmatmul.mubr.f32.gmra.mrb[0].mxu0 %v1040
      %v1844 = vpop.f32.mrb[0].mxu0
      %v1845 = vadd.f32 0.0, %v1844
      %v1846 = vpop.f32.mrb[0].mxu0
      %1847 = vmatprep.mubr.f32.mxu0 0.0
      %1848 = vmatmul.mubr.f32.gmra.mrb[0].mxu0 %v1042
      %v1849 = vpop.f32.mrb[0].mxu0
      %v1850 = vadd.f32 0.0, %v1849
      %v1851 = vpop.f32.mrb[0].mxu0
      %1852 = vmatprep.mubr.f32.mxu0 0.0
      %1853 = vmatmul.mubr.f32.gmra.mrb[0].mxu0 %v1044
      %v1854 = vpop.f32.mrb[0].mxu0
      %v1855 = vadd.f32 0.0, %v1854
      %v1856 = vpop.f32.mrb[0].mxu0
      %1857 = vmatprep.mubr.f32.mxu0 0.0
      %1858 = vmatmul.mubr.f32.gmra.mrb[0].mxu0 %v1046
      %v1859 = vpop.f32.mrb[0].mxu0
      %v1860 = vadd.f32 0.0, %v1859
      %v1861 = vpop.f32.mrb[0].mxu0
      %1862 = vmatprep.mubr.f32.mxu0 0.0
      %1863 = vmatmul.mubr.f32.gmra.mrb[0].mxu0 %v1048
      %v1864 = vpop.f32.mrb[0].mxu0
      %v1865 = vadd.f32 0.0, %v1864
      %v1866 = vpop.f32.mrb[0].mxu0
      %1867 = vmatprep.mubr.f32.mxu0 0.0
      %1868 = vmatmul.mubr.f32.gmra.mrb[0].mxu0 %v1050
      %v1869 = vpop.f32.mrb[0].mxu0
      %v1870 = vadd.f32 0.0, %v1869
      %v1871 = vpop.f32.mrb[0].mxu0
      %1872 = vmatprep.mubr.f32.mxu0 0.0
      %1873 = vmatmul.mubr.f32.gmra.mrb[0].mxu0 %v1052
      %v1874 = vpop.f32.mrb[0].mxu0
      %v1875 = vadd.f32 0.0, %v1874
      %v1876 = vpop.f32.mrb[0].mxu0
      %1877 = vmatprep.mubr.f32.mxu0 0.0
      %1878 = vmatmul.mubr.f32.gmra.mrb[0].mxu0 %v1054
      %v1879 = vpop.f32.mrb[0].mxu0
      %v1880 = vadd.f32 0.0, %v1879
      %v1881 = vpop.f32.mrb[0].mxu0
      %1882 = vmatprep.mubr.f32.mxu0 0.0
      %1883 = vmatmul.mubr.f32.gmra.mrb[0].mxu0 %v1056
      %v1884 = vpop.f32.mrb[0].mxu0
      %v1885 = vadd.f32 0.0, %v1884
      %v1886 = vpop.f32.mrb[0].mxu0
      %1887 = vmatprep.mubr.f32.mxu0 0.0
      %1888 = vmatmul.mubr.f32.gmra.mrb[0].mxu0 %v1058
      %v1889 = vpop.f32.mrb[0].mxu0
      %v1890 = vadd.f32 0.0, %v1889
      %v1891 = vpop.f32.mrb[0].mxu0
      %1892 = vmatprep.mubr.f32.mxu0 0.0
      %1893 = vmatmul.mubr.f32.gmra.mrb[0].mxu0 %v1060
      %v1894 = vpop.f32.mrb[0].mxu0
      %v1895 = vadd.f32 0.0, %v1894
      %v1896 = vpop.f32.mrb[0].mxu0
      %1897 = vmatprep.mubr.f32.mxu0 0.0
      %1898 = vmatmul.mubr.f32.gmra.mrb[0].mxu0 %v1062
      %v1899 = vpop.f32.mrb[0].mxu0
      %v1900 = vadd.f32 0.0, %v1899
      %v1901 = vpop.f32.mrb[0].mxu0
      %1902 = vmatprep.mubr.f32.mxu0 0.0
      %1903 = vmatmul.mubr.f32.gmra.mrb[0].mxu0 %v1064
      %v1904 = vpop.f32.mrb[0].mxu0
      %v1905 = vadd.f32 0.0, %v1904
      %v1906 = vpop.f32.mrb[0].mxu0
      %1907 = vmatprep.mubr.f32.mxu0 0.0
      %1908 = vmatmul.mubr.f32.gmra.mrb[0].mxu0 %v1066
      %v1909 = vpop.f32.mrb[0].mxu0
      %v1910 = vadd.f32 0.0, %v1909
      %v1911 = vpop.f32.mrb[0].mxu0
      %1912 = vmatprep.mubr.f32.mxu0 0.0
      %1913 = vmatmul.mubr.f32.gmra.mrb[0].mxu0 %v1068
      %v1914 = vpop.f32.mrb[0].mxu0
      %v1915 = vadd.f32 0.0, %v1914
      %v1916 = vpop.f32.mrb[0].mxu0
      %1917 = vmatprep.mubr.f32.mxu0 0.0
      %1918 = vmatmul.mubr.f32.gmra.mrb[0].mxu0 %v1070
      %v1919 = vpop.f32.mrb[0].mxu0
      %v1920 = vadd.f32 0.0, %v1919
      %v1921 = vpop.f32.mrb[0].mxu0
      %1922 = vmatprep.mubr.f32.mxu0 0.0
      %1923 = vmatmul.mubr.f32.gmra.mrb[0].mxu0 %v1072
      %v1924 = vpop.f32.mrb[0].mxu0
      %v1925 = vadd.f32 0.0, %v1924
      %v1926 = vpop.f32.mrb[0].mxu0
      %1927 = vmatprep.mubr.f32.mxu0 0.0
      %1928 = vmatmul.mubr.f32.gmra.mrb[0].mxu0 %v1074
      %v1929 = vpop.f32.mrb[0].mxu0
      %v1930 = vadd.f32 0.0, %v1929
      %v1931 = vpop.f32.mrb[0].mxu0
      %1932 = vmatprep.mubr.f32.mxu0 0.0
      %1933 = vmatmul.mubr.f32.gmra.mrb[0].mxu0 %v1076
      %v1934 = vpop.f32.mrb[0].mxu0
      %v1935 = vadd.f32 0.0, %v1934
      %v1936 = vpop.f32.mrb[0].mxu0
      %1937 = vmatprep.mubr.f32.mxu0 0.0
      %1938 = vmatmul.mubr.f32.gmra.mrb[0].mxu0 %v1716
      %v1939 = vpop.f32.mrb[0].mxu0
      %v1940 = vadd.f32 0.0, %v1939
      %v1941 = vpop.f32.mrb[0].mxu0
      %1942 = vmatprep.mubr.f32.mxu0 0.0
      %1943 = vmatmul.mubr.f32.gmra.mrb[0].mxu0 %v1718
      %v1944 = vpop.f32.mrb[0].mxu0
      %v1945 = vadd.f32 0.0, %v1944
      %v1946 = vpop.f32.mrb[0].mxu0
      %1947 = vdwg.mxu0
      %v1948 = vadd.f32 %v1681, %v1790
      %v1949 = vadd.f32 %v1682, %v1795
      %v1950 = vadd.f32 %v1683, %v1800
      %v1951 = vadd.f32 %v1684, %v1805
      %v1952 = vadd.f32 %v1685, %v1810
      %v1953 = vadd.f32 %v1686, %v1815
      %v1954 = vadd.f32 %v1687, %v1820
      %v1955 = vadd.f32 %v1688, %v1825
      %v1956 = vadd.f32 %v1689, %v1830
      %v1957 = vadd.f32 %v1690, %v1835
      %v1958 = vadd.f32 %v1691, %v1840
      %v1959 = vadd.f32 %v1692, %v1845
      %v1960 = vadd.f32 %v1693, %v1850
      %v1961 = vadd.f32 %v1694, %v1855
      %v1962 = vadd.f32 %v1695, %v1860
      %v1963 = vadd.f32 %v1696, %v1865
      %v1964 = vadd.f32 %v1697, %v1870
      %v1965 = vadd.f32 %v1698, %v1875
      %v1966 = vadd.f32 %v1699, %v1880
      %v1967 = vadd.f32 %v1700, %v1885
      %v1968 = vadd.f32 %v1701, %v1890
      %v1969 = vadd.f32 %v1702, %v1895
      %v1970 = vadd.f32 %v1703, %v1900
      %v1971 = vadd.f32 %v1704, %v1905
      %v1972 = vadd.f32 %v1705, %v1910
      %v1973 = vadd.f32 %v1706, %v1915
      %v1974 = vadd.f32 %v1707, %v1920
      %v1975 = vadd.f32 %v1708, %v1925
      %v1976 = vadd.f32 %v1709, %v1930
      %v1977 = vadd.f32 %v1710, %v1935
      %v1978 = vadd.f32 %v1711, %v1940
      %v1979 = vadd.f32 %v1712, %v1945
      %v1981 = vrot.slane %v584, 1
      %v1982 = vrot.slane %v528, 1
      %v1983 = vsel %vm637, %v1981, %v1982
      %v1984 = vrot.slane %v602, 1
      %v1985 = vsel %vm637, %v1982, %v1984
      %s1986 = scalar_lea.vmem %s3, 16
      %v1987 = vld [vmem:[%s1986] sm:$0xf]
      %v1988 = vsel %vm720, %v1983, 0
      %v1990 = vsel %vm720, %v1985, 0
      %v1993 = vsel %vm785, %v1987, 0
      %1995 = vmatprep.subr.mxu0 0.0
      %1996 = vmatpush1.msra.mxu0 %v1993
      %1997 = vmatprep.subr.mxu0 0.0
      %1998 = vmatpush1.msra.mxu0 0.0
      %1999 = vmatprep.subr.mxu0 0.0
      %2000 = vmatpush1.msra.mxu0 0.0
      %2001 = vmatprep.subr.mxu0 0.0
      %2002 = vmatpush1.msra.mxu0 0.0
      %2003 = vmatprep.subr.mxu0 0.0
      %2004 = vmatpush1.msra.mxu0 0.0
      %2005 = vmatprep.subr.mxu0 0.0
      %2006 = vmatpush1.msra.mxu0 0.0
      %2007 = vmatprep.subr.mxu0 0.0
      %2008 = vmatpush1.msra.mxu0 0.0
      %2009 = vmatprep.subr.mxu0 0.0
      %2010 = vmatpush1.msra.mxu0 0.0
      %2011 = vmatprep.subr.mxu0 0.0
      %2012 = vmatpush1.msra.mxu0 0.0
      %2013 = vmatprep.subr.mxu0 0.0
      %2014 = vmatpush1.msra.mxu0 0.0
      %2015 = vmatprep.subr.mxu0 0.0
      %2016 = vmatpush1.msra.mxu0 0.0
      %2017 = vmatprep.subr.mxu0 0.0
      %2018 = vmatpush1.msra.mxu0 0.0
      %2019 = vmatprep.subr.mxu0 0.0
      %2020 = vmatpush1.msra.mxu0 0.0
      %2021 = vmatprep.subr.mxu0 0.0
      %2022 = vmatpush1.msra.mxu0 0.0
      %2023 = vmatprep.subr.mxu0 0.0
      %2024 = vmatpush1.msra.mxu0 0.0
      %2025 = vmatprep.subr.mxu0 0.0
      %2026 = vmatpush1.msra.mxu0 0.0
      %2027 = vmatprep.subr.mxu0 0.0
      %2028 = vmatpush1.msra.mxu0 0.0
      %2029 = vmatprep.subr.mxu0 0.0
      %2030 = vmatpush1.msra.mxu0 0.0
      %2031 = vmatprep.subr.mxu0 0.0
      %2032 = vmatpush1.msra.mxu0 0.0
      %2033 = vmatprep.subr.mxu0 0.0
      %2034 = vmatpush1.msra.mxu0 0.0
      %2035 = vmatprep.subr.mxu0 0.0
      %2036 = vmatpush1.msra.mxu0 0.0
      %2037 = vmatprep.subr.mxu0 0.0
      %2038 = vmatpush1.msra.mxu0 0.0
      %2039 = vmatprep.subr.mxu0 0.0
      %2040 = vmatpush1.msra.mxu0 0.0
      %2041 = vmatprep.subr.mxu0 0.0
      %2042 = vmatpush1.msra.mxu0 0.0
      %2043 = vmatprep.subr.mxu0 0.0
      %2044 = vmatpush1.msra.mxu0 0.0
      %2045 = vmatprep.subr.mxu0 0.0
      %2046 = vmatpush1.msra.mxu0 0.0
      %2047 = vmatprep.subr.mxu0 0.0
      %2048 = vmatpush1.msra.mxu0 0.0
      %2049 = vmatprep.subr.mxu0 0.0
      %2050 = vmatpush1.msra.mxu0 0.0
      %2051 = vmatprep.subr.mxu0 0.0
      %2052 = vmatpush1.msra.mxu0 0.0
      %2053 = vmatprep.subr.mxu0 0.0
      %2054 = vmatpush1.msra.mxu0 0.0
      %2055 = vmatprep.subr.mxu0 0.0
      %2056 = vmatpush1.msra.mxu0 0.0
      %2057 = vmatprep.subr.mxu0 0.0
      %2058 = vmatpush1.msra.mxu0 0.0
      %2059 = vmatprep.mubr.f32.mxu0 0.0
      %2060 = vmatmul.mubr.f32.gmra.mrb[0].mxu0 %v725
      %v2061 = vpop.f32.mrb[0].mxu0
      %v2062 = vadd.f32 0.0, %v2061
      %v2063 = vpop.f32.mrb[0].mxu0
      %2064 = vmatprep.mubr.f32.mxu0 0.0
      %2065 = vmatmul.mubr.f32.gmra.mrb[0].mxu0 %v727
      %v2066 = vpop.f32.mrb[0].mxu0
      %v2067 = vadd.f32 0.0, %v2066
      %v2068 = vpop.f32.mrb[0].mxu0
      %2069 = vmatprep.mubr.f32.mxu0 0.0
      %2070 = vmatmul.mubr.f32.gmra.mrb[0].mxu0 %v729
      %v2071 = vpop.f32.mrb[0].mxu0
      %v2072 = vadd.f32 0.0, %v2071
      %v2073 = vpop.f32.mrb[0].mxu0
      %2074 = vmatprep.mubr.f32.mxu0 0.0
      %2075 = vmatmul.mubr.f32.gmra.mrb[0].mxu0 %v731
      %v2076 = vpop.f32.mrb[0].mxu0
      %v2077 = vadd.f32 0.0, %v2076
      %v2078 = vpop.f32.mrb[0].mxu0
      %2079 = vmatprep.mubr.f32.mxu0 0.0
      %2080 = vmatmul.mubr.f32.gmra.mrb[0].mxu0 %v733
      %v2081 = vpop.f32.mrb[0].mxu0
      %v2082 = vadd.f32 0.0, %v2081
      %v2083 = vpop.f32.mrb[0].mxu0
      %2084 = vmatprep.mubr.f32.mxu0 0.0
      %2085 = vmatmul.mubr.f32.gmra.mrb[0].mxu0 %v735
      %v2086 = vpop.f32.mrb[0].mxu0
      %v2087 = vadd.f32 0.0, %v2086
      %v2088 = vpop.f32.mrb[0].mxu0
      %2089 = vmatprep.mubr.f32.mxu0 0.0
      %2090 = vmatmul.mubr.f32.gmra.mrb[0].mxu0 %v737
      %v2091 = vpop.f32.mrb[0].mxu0
      %v2092 = vadd.f32 0.0, %v2091
      %v2093 = vpop.f32.mrb[0].mxu0
      %2094 = vmatprep.mubr.f32.mxu0 0.0
      %2095 = vmatmul.mubr.f32.gmra.mrb[0].mxu0 %v739
      %v2096 = vpop.f32.mrb[0].mxu0
      %v2097 = vadd.f32 0.0, %v2096
      %v2098 = vpop.f32.mrb[0].mxu0
      %2099 = vmatprep.mubr.f32.mxu0 0.0
      %2100 = vmatmul.mubr.f32.gmra.mrb[0].mxu0 %v741
      %v2101 = vpop.f32.mrb[0].mxu0
      %v2102 = vadd.f32 0.0, %v2101
      %v2103 = vpop.f32.mrb[0].mxu0
      %2104 = vmatprep.mubr.f32.mxu0 0.0
      %2105 = vmatmul.mubr.f32.gmra.mrb[0].mxu0 %v743
      %v2106 = vpop.f32.mrb[0].mxu0
      %v2107 = vadd.f32 0.0, %v2106
      %v2108 = vpop.f32.mrb[0].mxu0
      %2109 = vmatprep.mubr.f32.mxu0 0.0
      %2110 = vmatmul.mubr.f32.gmra.mrb[0].mxu0 %v745
      %v2111 = vpop.f32.mrb[0].mxu0
      %v2112 = vadd.f32 0.0, %v2111
      %v2113 = vpop.f32.mrb[0].mxu0
      %2114 = vmatprep.mubr.f32.mxu0 0.0
      %2115 = vmatmul.mubr.f32.gmra.mrb[0].mxu0 %v747
      %v2116 = vpop.f32.mrb[0].mxu0
      %v2117 = vadd.f32 0.0, %v2116
      %v2118 = vpop.f32.mrb[0].mxu0
      %2119 = vmatprep.mubr.f32.mxu0 0.0
      %2120 = vmatmul.mubr.f32.gmra.mrb[0].mxu0 %v749
      %v2121 = vpop.f32.mrb[0].mxu0
      %v2122 = vadd.f32 0.0, %v2121
      %v2123 = vpop.f32.mrb[0].mxu0
      %2124 = vmatprep.mubr.f32.mxu0 0.0
      %2125 = vmatmul.mubr.f32.gmra.mrb[0].mxu0 %v751
      %v2126 = vpop.f32.mrb[0].mxu0
      %v2127 = vadd.f32 0.0, %v2126
      %v2128 = vpop.f32.mrb[0].mxu0
      %2129 = vmatprep.mubr.f32.mxu0 0.0
      %2130 = vmatmul.mubr.f32.gmra.mrb[0].mxu0 %v753
      %v2131 = vpop.f32.mrb[0].mxu0
      %v2132 = vadd.f32 0.0, %v2131
      %v2133 = vpop.f32.mrb[0].mxu0
      %2134 = vmatprep.mubr.f32.mxu0 0.0
      %2135 = vmatmul.mubr.f32.gmra.mrb[0].mxu0 %v755
      %v2136 = vpop.f32.mrb[0].mxu0
      %v2137 = vadd.f32 0.0, %v2136
      %v2138 = vpop.f32.mrb[0].mxu0
      %2139 = vmatprep.mubr.f32.mxu0 0.0
      %2140 = vmatmul.mubr.f32.gmra.mrb[0].mxu0 %v757
      %v2141 = vpop.f32.mrb[0].mxu0
      %v2142 = vadd.f32 0.0, %v2141
      %v2143 = vpop.f32.mrb[0].mxu0
      %2144 = vmatprep.mubr.f32.mxu0 0.0
      %2145 = vmatmul.mubr.f32.gmra.mrb[0].mxu0 %v759
      %v2146 = vpop.f32.mrb[0].mxu0
      %v2147 = vadd.f32 0.0, %v2146
      %v2148 = vpop.f32.mrb[0].mxu0
      %2149 = vmatprep.mubr.f32.mxu0 0.0
      %2150 = vmatmul.mubr.f32.gmra.mrb[0].mxu0 %v761
      %v2151 = vpop.f32.mrb[0].mxu0
      %v2152 = vadd.f32 0.0, %v2151
      %v2153 = vpop.f32.mrb[0].mxu0
      %2154 = vmatprep.mubr.f32.mxu0 0.0
      %2155 = vmatmul.mubr.f32.gmra.mrb[0].mxu0 %v763
      %v2156 = vpop.f32.mrb[0].mxu0
      %v2157 = vadd.f32 0.0, %v2156
      %v2158 = vpop.f32.mrb[0].mxu0
      %2159 = vmatprep.mubr.f32.mxu0 0.0
      %2160 = vmatmul.mubr.f32.gmra.mrb[0].mxu0 %v765
      %v2161 = vpop.f32.mrb[0].mxu0
      %v2162 = vadd.f32 0.0, %v2161
      %v2163 = vpop.f32.mrb[0].mxu0
      %2164 = vmatprep.mubr.f32.mxu0 0.0
      %2165 = vmatmul.mubr.f32.gmra.mrb[0].mxu0 %v767
      %v2166 = vpop.f32.mrb[0].mxu0
      %v2167 = vadd.f32 0.0, %v2166
      %v2168 = vpop.f32.mrb[0].mxu0
      %2169 = vmatprep.mubr.f32.mxu0 0.0
      %2170 = vmatmul.mubr.f32.gmra.mrb[0].mxu0 %v769
      %v2171 = vpop.f32.mrb[0].mxu0
      %v2172 = vadd.f32 0.0, %v2171
      %v2173 = vpop.f32.mrb[0].mxu0
      %2174 = vmatprep.mubr.f32.mxu0 0.0
      %2175 = vmatmul.mubr.f32.gmra.mrb[0].mxu0 %v771
      %v2176 = vpop.f32.mrb[0].mxu0
      %v2177 = vadd.f32 0.0, %v2176
      %v2178 = vpop.f32.mrb[0].mxu0
      %2179 = vmatprep.mubr.f32.mxu0 0.0
      %2180 = vmatmul.mubr.f32.gmra.mrb[0].mxu0 %v773
      %v2181 = vpop.f32.mrb[0].mxu0
      %v2182 = vadd.f32 0.0, %v2181
      %v2183 = vpop.f32.mrb[0].mxu0
      %2184 = vmatprep.mubr.f32.mxu0 0.0
      %2185 = vmatmul.mubr.f32.gmra.mrb[0].mxu0 %v775
      %v2186 = vpop.f32.mrb[0].mxu0
      %v2187 = vadd.f32 0.0, %v2186
      %v2188 = vpop.f32.mrb[0].mxu0
      %2189 = vmatprep.mubr.f32.mxu0 0.0
      %2190 = vmatmul.mubr.f32.gmra.mrb[0].mxu0 %v777
      %v2191 = vpop.f32.mrb[0].mxu0
      %v2192 = vadd.f32 0.0, %v2191
      %v2193 = vpop.f32.mrb[0].mxu0
      %2194 = vmatprep.mubr.f32.mxu0 0.0
      %2195 = vmatmul.mubr.f32.gmra.mrb[0].mxu0 %v779
      %v2196 = vpop.f32.mrb[0].mxu0
      %v2197 = vadd.f32 0.0, %v2196
      %v2198 = vpop.f32.mrb[0].mxu0
      %2199 = vmatprep.mubr.f32.mxu0 0.0
      %2200 = vmatmul.mubr.f32.gmra.mrb[0].mxu0 %v781
      %v2201 = vpop.f32.mrb[0].mxu0
      %v2202 = vadd.f32 0.0, %v2201
      %v2203 = vpop.f32.mrb[0].mxu0
      %2204 = vmatprep.mubr.f32.mxu0 0.0
      %2205 = vmatmul.mubr.f32.gmra.mrb[0].mxu0 %v783
      %v2206 = vpop.f32.mrb[0].mxu0
      %v2207 = vadd.f32 0.0, %v2206
      %v2208 = vpop.f32.mrb[0].mxu0
      %2209 = vmatprep.mubr.f32.mxu0 0.0
      %2210 = vmatmul.mubr.f32.gmra.mrb[0].mxu0 %v1988
      %v2211 = vpop.f32.mrb[0].mxu0
      %v2212 = vadd.f32 0.0, %v2211
      %v2213 = vpop.f32.mrb[0].mxu0
      %2214 = vmatprep.mubr.f32.mxu0 0.0
      %2215 = vmatmul.mubr.f32.gmra.mrb[0].mxu0 %v1990
      %v2216 = vpop.f32.mrb[0].mxu0
      %v2217 = vadd.f32 0.0, %v2216
      %v2218 = vpop.f32.mrb[0].mxu0
      %2219 = vdwg.mxu0
      %v2220 = vadd.f32 %v1948, %v2062
      %v2221 = vadd.f32 %v1949, %v2067
      %v2222 = vadd.f32 %v1950, %v2072
      %v2223 = vadd.f32 %v1951, %v2077
      %v2224 = vadd.f32 %v1952, %v2082
      %v2225 = vadd.f32 %v1953, %v2087
      %v2226 = vadd.f32 %v1954, %v2092
      %v2227 = vadd.f32 %v1955, %v2097
      %v2228 = vadd.f32 %v1956, %v2102
      %v2229 = vadd.f32 %v1957, %v2107
      %v2230 = vadd.f32 %v1958, %v2112
      %v2231 = vadd.f32 %v1959, %v2117
      %v2232 = vadd.f32 %v1960, %v2122
      %v2233 = vadd.f32 %v1961, %v2127
      %v2234 = vadd.f32 %v1962, %v2132
      %v2235 = vadd.f32 %v1963, %v2137
      %v2236 = vadd.f32 %v1964, %v2142
      %v2237 = vadd.f32 %v1965, %v2147
      %v2238 = vadd.f32 %v1966, %v2152
      %v2239 = vadd.f32 %v1967, %v2157
      %v2240 = vadd.f32 %v1968, %v2162
      %v2241 = vadd.f32 %v1969, %v2167
      %v2242 = vadd.f32 %v1970, %v2172
      %v2243 = vadd.f32 %v1971, %v2177
      %v2244 = vadd.f32 %v1972, %v2182
      %v2245 = vadd.f32 %v1973, %v2187
      %v2246 = vadd.f32 %v1974, %v2192
      %v2247 = vadd.f32 %v1975, %v2197
      %v2248 = vadd.f32 %v1976, %v2202
      %v2249 = vadd.f32 %v1977, %v2207
      %v2250 = vadd.f32 %v1978, %v2212
      %v2251 = vadd.f32 %v1979, %v2217
      %v2252 = vrot.slane %v584, 2
      %v2253 = vrot.slane %v528, 2
      %v2254 = vsel %vm1306, %v2252, %v2253
      %v2255 = vrot.slane %v602, 2
      %v2256 = vsel %vm1306, %v2253, %v2255
      %s2257 = scalar_lea.vmem %s3, 20
      %v2258 = vld [vmem:[%s2257] sm:$0xf]
      %v2259 = vsel %vm720, %v2254, 0
      %v2261 = vsel %vm720, %v2256, 0
      %v2264 = vsel %vm785, %v2258, 0
      %2266 = vmatprep.subr.mxu0 0.0
      %2267 = vmatpush1.msra.mxu0 %v2264
      %2268 = vmatprep.subr.mxu0 0.0
      %2269 = vmatpush1.msra.mxu0 0.0
      %2270 = vmatprep.subr.mxu0 0.0
      %2271 = vmatpush1.msra.mxu0 0.0
      %2272 = vmatprep.subr.mxu0 0.0
      %2273 = vmatpush1.msra.mxu0 0.0
      %2274 = vmatprep.subr.mxu0 0.0
      %2275 = vmatpush1.msra.mxu0 0.0
      %2276 = vmatprep.subr.mxu0 0.0
      %2277 = vmatpush1.msra.mxu0 0.0
      %2278 = vmatprep.subr.mxu0 0.0
      %2279 = vmatpush1.msra.mxu0 0.0
      %2280 = vmatprep.subr.mxu0 0.0
      %2281 = vmatpush1.msra.mxu0 0.0
      %2282 = vmatprep.subr.mxu0 0.0
      %2283 = vmatpush1.msra.mxu0 0.0
      %2284 = vmatprep.subr.mxu0 0.0
      %2285 = vmatpush1.msra.mxu0 0.0
      %2286 = vmatprep.subr.mxu0 0.0
      %2287 = vmatpush1.msra.mxu0 0.0
      %2288 = vmatprep.subr.mxu0 0.0
      %2289 = vmatpush1.msra.mxu0 0.0
      %2290 = vmatprep.subr.mxu0 0.0
      %2291 = vmatpush1.msra.mxu0 0.0
      %2292 = vmatprep.subr.mxu0 0.0
      %2293 = vmatpush1.msra.mxu0 0.0
      %2294 = vmatprep.subr.mxu0 0.0
      %2295 = vmatpush1.msra.mxu0 0.0
      %2296 = vmatprep.subr.mxu0 0.0
      %2297 = vmatpush1.msra.mxu0 0.0
      %2298 = vmatprep.subr.mxu0 0.0
      %2299 = vmatpush1.msra.mxu0 0.0
      %2300 = vmatprep.subr.mxu0 0.0
      %2301 = vmatpush1.msra.mxu0 0.0
      %2302 = vmatprep.subr.mxu0 0.0
      %2303 = vmatpush1.msra.mxu0 0.0
      %2304 = vmatprep.subr.mxu0 0.0
      %2305 = vmatpush1.msra.mxu0 0.0
      %2306 = vmatprep.subr.mxu0 0.0
      %2307 = vmatpush1.msra.mxu0 0.0
      %2308 = vmatprep.subr.mxu0 0.0
      %2309 = vmatpush1.msra.mxu0 0.0
      %2310 = vmatprep.subr.mxu0 0.0
      %2311 = vmatpush1.msra.mxu0 0.0
      %2312 = vmatprep.subr.mxu0 0.0
      %2313 = vmatpush1.msra.mxu0 0.0
      %2314 = vmatprep.subr.mxu0 0.0
      %2315 = vmatpush1.msra.mxu0 0.0
      %2316 = vmatprep.subr.mxu0 0.0
      %2317 = vmatpush1.msra.mxu0 0.0
      %2318 = vmatprep.subr.mxu0 0.0
      %2319 = vmatpush1.msra.mxu0 0.0
      %2320 = vmatprep.subr.mxu0 0.0
      %2321 = vmatpush1.msra.mxu0 0.0
      %2322 = vmatprep.subr.mxu0 0.0
      %2323 = vmatpush1.msra.mxu0 0.0
      %2324 = vmatprep.subr.mxu0 0.0
      %2325 = vmatpush1.msra.mxu0 0.0
      %2326 = vmatprep.subr.mxu0 0.0
      %2327 = vmatpush1.msra.mxu0 0.0
      %2328 = vmatprep.subr.mxu0 0.0
      %2329 = vmatpush1.msra.mxu0 0.0
      %2330 = vmatprep.mubr.f32.mxu0 0.0
      %2331 = vmatmul.mubr.f32.gmra.mrb[0].mxu0 %v1393
      %v2332 = vpop.f32.mrb[0].mxu0
      %v2333 = vadd.f32 0.0, %v2332
      %v2334 = vpop.f32.mrb[0].mxu0
      %2335 = vmatprep.mubr.f32.mxu0 0.0
      %2336 = vmatmul.mubr.f32.gmra.mrb[0].mxu0 %v1395
      %v2337 = vpop.f32.mrb[0].mxu0
      %v2338 = vadd.f32 0.0, %v2337
      %v2339 = vpop.f32.mrb[0].mxu0
      %2340 = vmatprep.mubr.f32.mxu0 0.0
      %2341 = vmatmul.mubr.f32.gmra.mrb[0].mxu0 %v1397
      %v2342 = vpop.f32.mrb[0].mxu0
      %v2343 = vadd.f32 0.0, %v2342
      %v2344 = vpop.f32.mrb[0].mxu0
      %2345 = vmatprep.mubr.f32.mxu0 0.0
      %2346 = vmatmul.mubr.f32.gmra.mrb[0].mxu0 %v1399
      %v2347 = vpop.f32.mrb[0].mxu0
      %v2348 = vadd.f32 0.0, %v2347
      %v2349 = vpop.f32.mrb[0].mxu0
      %2350 = vmatprep.mubr.f32.mxu0 0.0
      %2351 = vmatmul.mubr.f32.gmra.mrb[0].mxu0 %v1401
      %v2352 = vpop.f32.mrb[0].mxu0
      %v2353 = vadd.f32 0.0, %v2352
      %v2354 = vpop.f32.mrb[0].mxu0
      %2355 = vmatprep.mubr.f32.mxu0 0.0
      %2356 = vmatmul.mubr.f32.gmra.mrb[0].mxu0 %v1403
      %v2357 = vpop.f32.mrb[0].mxu0
      %v2358 = vadd.f32 0.0, %v2357
      %v2359 = vpop.f32.mrb[0].mxu0
      %2360 = vmatprep.mubr.f32.mxu0 0.0
      %2361 = vmatmul.mubr.f32.gmra.mrb[0].mxu0 %v1405
      %v2362 = vpop.f32.mrb[0].mxu0
      %v2363 = vadd.f32 0.0, %v2362
      %v2364 = vpop.f32.mrb[0].mxu0
      %2365 = vmatprep.mubr.f32.mxu0 0.0
      %2366 = vmatmul.mubr.f32.gmra.mrb[0].mxu0 %v1407
      %v2367 = vpop.f32.mrb[0].mxu0
      %v2368 = vadd.f32 0.0, %v2367
      %v2369 = vpop.f32.mrb[0].mxu0
      %2370 = vmatprep.mubr.f32.mxu0 0.0
      %2371 = vmatmul.mubr.f32.gmra.mrb[0].mxu0 %v1409
      %v2372 = vpop.f32.mrb[0].mxu0
      %v2373 = vadd.f32 0.0, %v2372
      %v2374 = vpop.f32.mrb[0].mxu0
      %2375 = vmatprep.mubr.f32.mxu0 0.0
      %2376 = vmatmul.mubr.f32.gmra.mrb[0].mxu0 %v1411
      %v2377 = vpop.f32.mrb[0].mxu0
      %v2378 = vadd.f32 0.0, %v2377
      %v2379 = vpop.f32.mrb[0].mxu0
      %2380 = vmatprep.mubr.f32.mxu0 0.0
      %2381 = vmatmul.mubr.f32.gmra.mrb[0].mxu0 %v1413
      %v2382 = vpop.f32.mrb[0].mxu0
      %v2383 = vadd.f32 0.0, %v2382
      %v2384 = vpop.f32.mrb[0].mxu0
      %2385 = vmatprep.mubr.f32.mxu0 0.0
      %2386 = vmatmul.mubr.f32.gmra.mrb[0].mxu0 %v1415
      %v2387 = vpop.f32.mrb[0].mxu0
      %v2388 = vadd.f32 0.0, %v2387
      %v2389 = vpop.f32.mrb[0].mxu0
      %2390 = vmatprep.mubr.f32.mxu0 0.0
      %2391 = vmatmul.mubr.f32.gmra.mrb[0].mxu0 %v1417
      %v2392 = vpop.f32.mrb[0].mxu0
      %v2393 = vadd.f32 0.0, %v2392
      %v2394 = vpop.f32.mrb[0].mxu0
      %2395 = vmatprep.mubr.f32.mxu0 0.0
      %2396 = vmatmul.mubr.f32.gmra.mrb[0].mxu0 %v1419
      %v2397 = vpop.f32.mrb[0].mxu0
      %v2398 = vadd.f32 0.0, %v2397
      %v2399 = vpop.f32.mrb[0].mxu0
      %2400 = vmatprep.mubr.f32.mxu0 0.0
      %2401 = vmatmul.mubr.f32.gmra.mrb[0].mxu0 %v1421
      %v2402 = vpop.f32.mrb[0].mxu0
      %v2403 = vadd.f32 0.0, %v2402
      %v2404 = vpop.f32.mrb[0].mxu0
      %2405 = vmatprep.mubr.f32.mxu0 0.0
      %2406 = vmatmul.mubr.f32.gmra.mrb[0].mxu0 %v1423
      %v2407 = vpop.f32.mrb[0].mxu0
      %v2408 = vadd.f32 0.0, %v2407
      %v2409 = vpop.f32.mrb[0].mxu0
      %2410 = vmatprep.mubr.f32.mxu0 0.0
      %2411 = vmatmul.mubr.f32.gmra.mrb[0].mxu0 %v1425
      %v2412 = vpop.f32.mrb[0].mxu0
      %v2413 = vadd.f32 0.0, %v2412
      %v2414 = vpop.f32.mrb[0].mxu0
      %2415 = vmatprep.mubr.f32.mxu0 0.0
      %2416 = vmatmul.mubr.f32.gmra.mrb[0].mxu0 %v1427
      %v2417 = vpop.f32.mrb[0].mxu0
      %v2418 = vadd.f32 0.0, %v2417
      %v2419 = vpop.f32.mrb[0].mxu0
      %2420 = vmatprep.mubr.f32.mxu0 0.0
      %2421 = vmatmul.mubr.f32.gmra.mrb[0].mxu0 %v1429
      %v2422 = vpop.f32.mrb[0].mxu0
      %v2423 = vadd.f32 0.0, %v2422
      %v2424 = vpop.f32.mrb[0].mxu0
      %2425 = vmatprep.mubr.f32.mxu0 0.0
      %2426 = vmatmul.mubr.f32.gmra.mrb[0].mxu0 %v1431
      %v2427 = vpop.f32.mrb[0].mxu0
      %v2428 = vadd.f32 0.0, %v2427
      %v2429 = vpop.f32.mrb[0].mxu0
      %2430 = vmatprep.mubr.f32.mxu0 0.0
      %2431 = vmatmul.mubr.f32.gmra.mrb[0].mxu0 %v1433
      %v2432 = vpop.f32.mrb[0].mxu0
      %v2433 = vadd.f32 0.0, %v2432
      %v2434 = vpop.f32.mrb[0].mxu0
      %2435 = vmatprep.mubr.f32.mxu0 0.0
      %2436 = vmatmul.mubr.f32.gmra.mrb[0].mxu0 %v1435
      %v2437 = vpop.f32.mrb[0].mxu0
      %v2438 = vadd.f32 0.0, %v2437
      %v2439 = vpop.f32.mrb[0].mxu0
      %2440 = vmatprep.mubr.f32.mxu0 0.0
      %2441 = vmatmul.mubr.f32.gmra.mrb[0].mxu0 %v1437
      %v2442 = vpop.f32.mrb[0].mxu0
      %v2443 = vadd.f32 0.0, %v2442
      %v2444 = vpop.f32.mrb[0].mxu0
      %2445 = vmatprep.mubr.f32.mxu0 0.0
      %2446 = vmatmul.mubr.f32.gmra.mrb[0].mxu0 %v1439
      %v2447 = vpop.f32.mrb[0].mxu0
      %v2448 = vadd.f32 0.0, %v2447
      %v2449 = vpop.f32.mrb[0].mxu0
      %2450 = vmatprep.mubr.f32.mxu0 0.0
      %2451 = vmatmul.mubr.f32.gmra.mrb[0].mxu0 %v1441
      %v2452 = vpop.f32.mrb[0].mxu0
      %v2453 = vadd.f32 0.0, %v2452
      %v2454 = vpop.f32.mrb[0].mxu0
      %2455 = vmatprep.mubr.f32.mxu0 0.0
      %2456 = vmatmul.mubr.f32.gmra.mrb[0].mxu0 %v1443
      %v2457 = vpop.f32.mrb[0].mxu0
      %v2458 = vadd.f32 0.0, %v2457
      %v2459 = vpop.f32.mrb[0].mxu0
      %2460 = vmatprep.mubr.f32.mxu0 0.0
      %2461 = vmatmul.mubr.f32.gmra.mrb[0].mxu0 %v1445
      %v2462 = vpop.f32.mrb[0].mxu0
      %v2463 = vadd.f32 0.0, %v2462
      %v2464 = vpop.f32.mrb[0].mxu0
      %2465 = vmatprep.mubr.f32.mxu0 0.0
      %2466 = vmatmul.mubr.f32.gmra.mrb[0].mxu0 %v1447
      %v2467 = vpop.f32.mrb[0].mxu0
      %v2468 = vadd.f32 0.0, %v2467
      %v2469 = vpop.f32.mrb[0].mxu0
      %2470 = vmatprep.mubr.f32.mxu0 0.0
      %2471 = vmatmul.mubr.f32.gmra.mrb[0].mxu0 %v1449
      %v2472 = vpop.f32.mrb[0].mxu0
      %v2473 = vadd.f32 0.0, %v2472
      %v2474 = vpop.f32.mrb[0].mxu0
      %2475 = vmatprep.mubr.f32.mxu0 0.0
      %2476 = vmatmul.mubr.f32.gmra.mrb[0].mxu0 %v1451
      %v2477 = vpop.f32.mrb[0].mxu0
      %v2478 = vadd.f32 0.0, %v2477
      %v2479 = vpop.f32.mrb[0].mxu0
      %2480 = vmatprep.mubr.f32.mxu0 0.0
      %2481 = vmatmul.mubr.f32.gmra.mrb[0].mxu0 %v2259
      %v2482 = vpop.f32.mrb[0].mxu0
      %v2483 = vadd.f32 0.0, %v2482
      %v2484 = vpop.f32.mrb[0].mxu0
      %2485 = vmatprep.mubr.f32.mxu0 0.0
      %2486 = vmatmul.mubr.f32.gmra.mrb[0].mxu0 %v2261
      %v2487 = vpop.f32.mrb[0].mxu0
      %v2488 = vadd.f32 0.0, %v2487
      %v2489 = vpop.f32.mrb[0].mxu0
      %2490 = vdwg.mxu0
      %v2491 = vadd.f32 %v2220, %v2333
      %v2492 = vadd.f32 %v2221, %v2338
      %v2493 = vadd.f32 %v2222, %v2343
      %v2494 = vadd.f32 %v2223, %v2348
      %v2495 = vadd.f32 %v2224, %v2353
      %v2496 = vadd.f32 %v2225, %v2358
      %v2497 = vadd.f32 %v2226, %v2363
      %v2498 = vadd.f32 %v2227, %v2368
      %v2499 = vadd.f32 %v2228, %v2373
      %v2500 = vadd.f32 %v2229, %v2378
      %v2501 = vadd.f32 %v2230, %v2383
      %v2502 = vadd.f32 %v2231, %v2388
      %v2503 = vadd.f32 %v2232, %v2393
      %v2504 = vadd.f32 %v2233, %v2398
      %v2505 = vadd.f32 %v2234, %v2403
      %v2506 = vadd.f32 %v2235, %v2408
      %v2507 = vadd.f32 %v2236, %v2413
      %v2508 = vadd.f32 %v2237, %v2418
      %v2509 = vadd.f32 %v2238, %v2423
      %v2510 = vadd.f32 %v2239, %v2428
      %v2511 = vadd.f32 %v2240, %v2433
      %v2512 = vadd.f32 %v2241, %v2438
      %v2513 = vadd.f32 %v2242, %v2443
      %v2514 = vadd.f32 %v2243, %v2448
      %v2515 = vadd.f32 %v2244, %v2453
      %v2516 = vadd.f32 %v2245, %v2458
      %v2517 = vadd.f32 %v2246, %v2463
      %v2518 = vadd.f32 %v2247, %v2468
      %v2519 = vadd.f32 %v2248, %v2473
      %v2520 = vadd.f32 %v2249, %v2478
      %v2521 = vadd.f32 %v2250, %v2483
      %v2522 = vadd.f32 %v2251, %v2488
      %s2523 = scalar_lea.vmem %s3, 24
      %v2524 = vld [vmem:[%s2523] sm:$0xf]
      %v2526 = vsel %vm720, %v585, 0
      %v2528 = vsel %vm720, %v531, 0
      %v2531 = vsel %vm785, %v2524, 0
      %2533 = vmatprep.subr.mxu0 0.0
      %2534 = vmatpush1.msra.mxu0 %v2531
      %2535 = vmatprep.subr.mxu0 0.0
      %2536 = vmatpush1.msra.mxu0 0.0
      %2537 = vmatprep.subr.mxu0 0.0
      %2538 = vmatpush1.msra.mxu0 0.0
      %2539 = vmatprep.subr.mxu0 0.0
      %2540 = vmatpush1.msra.mxu0 0.0
      %2541 = vmatprep.subr.mxu0 0.0
      %2542 = vmatpush1.msra.mxu0 0.0
      %2543 = vmatprep.subr.mxu0 0.0
      %2544 = vmatpush1.msra.mxu0 0.0
      %2545 = vmatprep.subr.mxu0 0.0
      %2546 = vmatpush1.msra.mxu0 0.0
      %2547 = vmatprep.subr.mxu0 0.0
      %2548 = vmatpush1.msra.mxu0 0.0
      %2549 = vmatprep.subr.mxu0 0.0
      %2550 = vmatpush1.msra.mxu0 0.0
      %2551 = vmatprep.subr.mxu0 0.0
      %2552 = vmatpush1.msra.mxu0 0.0
      %2553 = vmatprep.subr.mxu0 0.0
      %2554 = vmatpush1.msra.mxu0 0.0
      %2555 = vmatprep.subr.mxu0 0.0
      %2556 = vmatpush1.msra.mxu0 0.0
      %2557 = vmatprep.subr.mxu0 0.0
      %2558 = vmatpush1.msra.mxu0 0.0
      %2559 = vmatprep.subr.mxu0 0.0
      %2560 = vmatpush1.msra.mxu0 0.0
      %2561 = vmatprep.subr.mxu0 0.0
      %2562 = vmatpush1.msra.mxu0 0.0
      %2563 = vmatprep.subr.mxu0 0.0
      %2564 = vmatpush1.msra.mxu0 0.0
      %2565 = vmatprep.subr.mxu0 0.0
      %2566 = vmatpush1.msra.mxu0 0.0
      %2567 = vmatprep.subr.mxu0 0.0
      %2568 = vmatpush1.msra.mxu0 0.0
      %2569 = vmatprep.subr.mxu0 0.0
      %2570 = vmatpush1.msra.mxu0 0.0
      %2571 = vmatprep.subr.mxu0 0.0
      %2572 = vmatpush1.msra.mxu0 0.0
      %2573 = vmatprep.subr.mxu0 0.0
      %2574 = vmatpush1.msra.mxu0 0.0
      %2575 = vmatprep.subr.mxu0 0.0
      %2576 = vmatpush1.msra.mxu0 0.0
      %2577 = vmatprep.subr.mxu0 0.0
      %2578 = vmatpush1.msra.mxu0 0.0
      %2579 = vmatprep.subr.mxu0 0.0
      %2580 = vmatpush1.msra.mxu0 0.0
      %2581 = vmatprep.subr.mxu0 0.0
      %2582 = vmatpush1.msra.mxu0 0.0
      %2583 = vmatprep.subr.mxu0 0.0
      %2584 = vmatpush1.msra.mxu0 0.0
      %2585 = vmatprep.subr.mxu0 0.0
      %2586 = vmatpush1.msra.mxu0 0.0
      %2587 = vmatprep.subr.mxu0 0.0
      %2588 = vmatpush1.msra.mxu0 0.0
      %2589 = vmatprep.subr.mxu0 0.0
      %2590 = vmatpush1.msra.mxu0 0.0
      %2591 = vmatprep.subr.mxu0 0.0
      %2592 = vmatpush1.msra.mxu0 0.0
      %2593 = vmatprep.subr.mxu0 0.0
      %2594 = vmatpush1.msra.mxu0 0.0
      %2595 = vmatprep.subr.mxu0 0.0
      %2596 = vmatpush1.msra.mxu0 0.0
      %2597 = vmatprep.mubr.f32.mxu0 0.0
      %2598 = vmatmul.mubr.f32.gmra.mrb[0].mxu0 %v1022
      %v2599 = vpop.f32.mrb[0].mxu0
      %v2600 = vadd.f32 0.0, %v2599
      %v2601 = vpop.f32.mrb[0].mxu0
      %2602 = vmatprep.mubr.f32.mxu0 0.0
      %2603 = vmatmul.mubr.f32.gmra.mrb[0].mxu0 %v1024
      %v2604 = vpop.f32.mrb[0].mxu0
      %v2605 = vadd.f32 0.0, %v2604
      %v2606 = vpop.f32.mrb[0].mxu0
      %2607 = vmatprep.mubr.f32.mxu0 0.0
      %2608 = vmatmul.mubr.f32.gmra.mrb[0].mxu0 %v1026
      %v2609 = vpop.f32.mrb[0].mxu0
      %v2610 = vadd.f32 0.0, %v2609
      %v2611 = vpop.f32.mrb[0].mxu0
      %2612 = vmatprep.mubr.f32.mxu0 0.0
      %2613 = vmatmul.mubr.f32.gmra.mrb[0].mxu0 %v1028
      %v2614 = vpop.f32.mrb[0].mxu0
      %v2615 = vadd.f32 0.0, %v2614
      %v2616 = vpop.f32.mrb[0].mxu0
      %2617 = vmatprep.mubr.f32.mxu0 0.0
      %2618 = vmatmul.mubr.f32.gmra.mrb[0].mxu0 %v1030
      %v2619 = vpop.f32.mrb[0].mxu0
      %v2620 = vadd.f32 0.0, %v2619
      %v2621 = vpop.f32.mrb[0].mxu0
      %2622 = vmatprep.mubr.f32.mxu0 0.0
      %2623 = vmatmul.mubr.f32.gmra.mrb[0].mxu0 %v1032
      %v2624 = vpop.f32.mrb[0].mxu0
      %v2625 = vadd.f32 0.0, %v2624
      %v2626 = vpop.f32.mrb[0].mxu0
      %2627 = vmatprep.mubr.f32.mxu0 0.0
      %2628 = vmatmul.mubr.f32.gmra.mrb[0].mxu0 %v1034
      %v2629 = vpop.f32.mrb[0].mxu0
      %v2630 = vadd.f32 0.0, %v2629
      %v2631 = vpop.f32.mrb[0].mxu0
      %2632 = vmatprep.mubr.f32.mxu0 0.0
      %2633 = vmatmul.mubr.f32.gmra.mrb[0].mxu0 %v1036
      %v2634 = vpop.f32.mrb[0].mxu0
      %v2635 = vadd.f32 0.0, %v2634
      %v2636 = vpop.f32.mrb[0].mxu0
      %2637 = vmatprep.mubr.f32.mxu0 0.0
      %2638 = vmatmul.mubr.f32.gmra.mrb[0].mxu0 %v1038
      %v2639 = vpop.f32.mrb[0].mxu0
      %v2640 = vadd.f32 0.0, %v2639
      %v2641 = vpop.f32.mrb[0].mxu0
      %2642 = vmatprep.mubr.f32.mxu0 0.0
      %2643 = vmatmul.mubr.f32.gmra.mrb[0].mxu0 %v1040
      %v2644 = vpop.f32.mrb[0].mxu0
      %v2645 = vadd.f32 0.0, %v2644
      %v2646 = vpop.f32.mrb[0].mxu0
      %2647 = vmatprep.mubr.f32.mxu0 0.0
      %2648 = vmatmul.mubr.f32.gmra.mrb[0].mxu0 %v1042
      %v2649 = vpop.f32.mrb[0].mxu0
      %v2650 = vadd.f32 0.0, %v2649
      %v2651 = vpop.f32.mrb[0].mxu0
      %2652 = vmatprep.mubr.f32.mxu0 0.0
      %2653 = vmatmul.mubr.f32.gmra.mrb[0].mxu0 %v1044
      %v2654 = vpop.f32.mrb[0].mxu0
      %v2655 = vadd.f32 0.0, %v2654
      %v2656 = vpop.f32.mrb[0].mxu0
      %2657 = vmatprep.mubr.f32.mxu0 0.0
      %2658 = vmatmul.mubr.f32.gmra.mrb[0].mxu0 %v1046
      %v2659 = vpop.f32.mrb[0].mxu0
      %v2660 = vadd.f32 0.0, %v2659
      %v2661 = vpop.f32.mrb[0].mxu0
      %2662 = vmatprep.mubr.f32.mxu0 0.0
      %2663 = vmatmul.mubr.f32.gmra.mrb[0].mxu0 %v1048
      %v2664 = vpop.f32.mrb[0].mxu0
      %v2665 = vadd.f32 0.0, %v2664
      %v2666 = vpop.f32.mrb[0].mxu0
      %2667 = vmatprep.mubr.f32.mxu0 0.0
      %2668 = vmatmul.mubr.f32.gmra.mrb[0].mxu0 %v1050
      %v2669 = vpop.f32.mrb[0].mxu0
      %v2670 = vadd.f32 0.0, %v2669
      %v2671 = vpop.f32.mrb[0].mxu0
      %2672 = vmatprep.mubr.f32.mxu0 0.0
      %2673 = vmatmul.mubr.f32.gmra.mrb[0].mxu0 %v1052
      %v2674 = vpop.f32.mrb[0].mxu0
      %v2675 = vadd.f32 0.0, %v2674
      %v2676 = vpop.f32.mrb[0].mxu0
      %2677 = vmatprep.mubr.f32.mxu0 0.0
      %2678 = vmatmul.mubr.f32.gmra.mrb[0].mxu0 %v1054
      %v2679 = vpop.f32.mrb[0].mxu0
      %v2680 = vadd.f32 0.0, %v2679
      %v2681 = vpop.f32.mrb[0].mxu0
      %2682 = vmatprep.mubr.f32.mxu0 0.0
      %2683 = vmatmul.mubr.f32.gmra.mrb[0].mxu0 %v1056
      %v2684 = vpop.f32.mrb[0].mxu0
      %v2685 = vadd.f32 0.0, %v2684
      %v2686 = vpop.f32.mrb[0].mxu0
      %2687 = vmatprep.mubr.f32.mxu0 0.0
      %2688 = vmatmul.mubr.f32.gmra.mrb[0].mxu0 %v1058
      %v2689 = vpop.f32.mrb[0].mxu0
      %v2690 = vadd.f32 0.0, %v2689
      %v2691 = vpop.f32.mrb[0].mxu0
      %2692 = vmatprep.mubr.f32.mxu0 0.0
      %2693 = vmatmul.mubr.f32.gmra.mrb[0].mxu0 %v1060
      %v2694 = vpop.f32.mrb[0].mxu0
      %v2695 = vadd.f32 0.0, %v2694
      %v2696 = vpop.f32.mrb[0].mxu0
      %2697 = vmatprep.mubr.f32.mxu0 0.0
      %2698 = vmatmul.mubr.f32.gmra.mrb[0].mxu0 %v1062
      %v2699 = vpop.f32.mrb[0].mxu0
      %v2700 = vadd.f32 0.0, %v2699
      %v2701 = vpop.f32.mrb[0].mxu0
      %2702 = vmatprep.mubr.f32.mxu0 0.0
      %2703 = vmatmul.mubr.f32.gmra.mrb[0].mxu0 %v1064
      %v2704 = vpop.f32.mrb[0].mxu0
      %v2705 = vadd.f32 0.0, %v2704
      %v2706 = vpop.f32.mrb[0].mxu0
      %2707 = vmatprep.mubr.f32.mxu0 0.0
      %2708 = vmatmul.mubr.f32.gmra.mrb[0].mxu0 %v1066
      %v2709 = vpop.f32.mrb[0].mxu0
      %v2710 = vadd.f32 0.0, %v2709
      %v2711 = vpop.f32.mrb[0].mxu0
      %2712 = vmatprep.mubr.f32.mxu0 0.0
      %2713 = vmatmul.mubr.f32.gmra.mrb[0].mxu0 %v1068
      %v2714 = vpop.f32.mrb[0].mxu0
      %v2715 = vadd.f32 0.0, %v2714
      %v2716 = vpop.f32.mrb[0].mxu0
      %2717 = vmatprep.mubr.f32.mxu0 0.0
      %2718 = vmatmul.mubr.f32.gmra.mrb[0].mxu0 %v1070
      %v2719 = vpop.f32.mrb[0].mxu0
      %v2720 = vadd.f32 0.0, %v2719
      %v2721 = vpop.f32.mrb[0].mxu0
      %2722 = vmatprep.mubr.f32.mxu0 0.0
      %2723 = vmatmul.mubr.f32.gmra.mrb[0].mxu0 %v1072
      %v2724 = vpop.f32.mrb[0].mxu0
      %v2725 = vadd.f32 0.0, %v2724
      %v2726 = vpop.f32.mrb[0].mxu0
      %2727 = vmatprep.mubr.f32.mxu0 0.0
      %2728 = vmatmul.mubr.f32.gmra.mrb[0].mxu0 %v1074
      %v2729 = vpop.f32.mrb[0].mxu0
      %v2730 = vadd.f32 0.0, %v2729
      %v2731 = vpop.f32.mrb[0].mxu0
      %2732 = vmatprep.mubr.f32.mxu0 0.0
      %2733 = vmatmul.mubr.f32.gmra.mrb[0].mxu0 %v1076
      %v2734 = vpop.f32.mrb[0].mxu0
      %v2735 = vadd.f32 0.0, %v2734
      %v2736 = vpop.f32.mrb[0].mxu0
      %2737 = vmatprep.mubr.f32.mxu0 0.0
      %2738 = vmatmul.mubr.f32.gmra.mrb[0].mxu0 %v1716
      %v2739 = vpop.f32.mrb[0].mxu0
      %v2740 = vadd.f32 0.0, %v2739
      %v2741 = vpop.f32.mrb[0].mxu0
      %2742 = vmatprep.mubr.f32.mxu0 0.0
      %2743 = vmatmul.mubr.f32.gmra.mrb[0].mxu0 %v1718
      %v2744 = vpop.f32.mrb[0].mxu0
      %v2745 = vadd.f32 0.0, %v2744
      %v2746 = vpop.f32.mrb[0].mxu0
      %2747 = vmatprep.mubr.f32.mxu0 0.0
      %2748 = vmatmul.mubr.f32.gmra.mrb[0].mxu0 %v2526
      %v2749 = vpop.f32.mrb[0].mxu0
      %v2750 = vadd.f32 0.0, %v2749
      %v2751 = vpop.f32.mrb[0].mxu0
      %2752 = vmatprep.mubr.f32.mxu0 0.0
      %2753 = vmatmul.mubr.f32.gmra.mrb[0].mxu0 %v2528
      %v2754 = vpop.f32.mrb[0].mxu0
      %v2755 = vadd.f32 0.0, %v2754
      %v2756 = vpop.f32.mrb[0].mxu0
      %2757 = vdwg.mxu0
      %v2758 = vadd.f32 %v2491, %v2600
      %v2759 = vadd.f32 %v2492, %v2605
      %v2760 = vadd.f32 %v2493, %v2610
      %v2761 = vadd.f32 %v2494, %v2615
      %v2762 = vadd.f32 %v2495, %v2620
      %v2763 = vadd.f32 %v2496, %v2625
      %v2764 = vadd.f32 %v2497, %v2630
      %v2765 = vadd.f32 %v2498, %v2635
      %v2766 = vadd.f32 %v2499, %v2640
      %v2767 = vadd.f32 %v2500, %v2645
      %v2768 = vadd.f32 %v2501, %v2650
      %v2769 = vadd.f32 %v2502, %v2655
      %v2770 = vadd.f32 %v2503, %v2660
      %v2771 = vadd.f32 %v2504, %v2665
      %v2772 = vadd.f32 %v2505, %v2670
      %v2773 = vadd.f32 %v2506, %v2675
      %v2774 = vadd.f32 %v2507, %v2680
      %v2775 = vadd.f32 %v2508, %v2685
      %v2776 = vadd.f32 %v2509, %v2690
      %v2777 = vadd.f32 %v2510, %v2695
      %v2778 = vadd.f32 %v2511, %v2700
      %v2779 = vadd.f32 %v2512, %v2705
      %v2780 = vadd.f32 %v2513, %v2710
      %v2781 = vadd.f32 %v2514, %v2715
      %v2782 = vadd.f32 %v2515, %v2720
      %v2783 = vadd.f32 %v2516, %v2725
      %v2784 = vadd.f32 %v2517, %v2730
      %v2785 = vadd.f32 %v2518, %v2735
      %v2786 = vadd.f32 %v2519, %v2740
      %v2787 = vadd.f32 %v2520, %v2745
      %v2788 = vadd.f32 %v2521, %v2750
      %v2789 = vadd.f32 %v2522, %v2755
      %v2791 = vrot.slane %v585, 1
      %v2792 = vrot.slane %v531, 1
      %v2793 = vsel %vm637, %v2791, %v2792
      %v2794 = vrot.slane %v603, 1
      %v2795 = vsel %vm637, %v2792, %v2794
      %s2796 = scalar_lea.vmem %s3, 28
      %v2797 = vld [vmem:[%s2796] sm:$0xf]
      %v2798 = vsel %vm720, %v2793, 0
      %v2800 = vsel %vm720, %v2795, 0
      %v2803 = vsel %vm785, %v2797, 0
      %2805 = vmatprep.subr.mxu0 0.0
      %2806 = vmatpush1.msra.mxu0 %v2803
      %2807 = vmatprep.subr.mxu0 0.0
      %2808 = vmatpush1.msra.mxu0 0.0
      %2809 = vmatprep.subr.mxu0 0.0
      %2810 = vmatpush1.msra.mxu0 0.0
      %2811 = vmatprep.subr.mxu0 0.0
      %2812 = vmatpush1.msra.mxu0 0.0
      %2813 = vmatprep.subr.mxu0 0.0
      %2814 = vmatpush1.msra.mxu0 0.0
      %2815 = vmatprep.subr.mxu0 0.0
      %2816 = vmatpush1.msra.mxu0 0.0
      %2817 = vmatprep.subr.mxu0 0.0
      %2818 = vmatpush1.msra.mxu0 0.0
      %2819 = vmatprep.subr.mxu0 0.0
      %2820 = vmatpush1.msra.mxu0 0.0
      %2821 = vmatprep.subr.mxu0 0.0
      %2822 = vmatpush1.msra.mxu0 0.0
      %2823 = vmatprep.subr.mxu0 0.0
      %2824 = vmatpush1.msra.mxu0 0.0
      %2825 = vmatprep.subr.mxu0 0.0
      %2826 = vmatpush1.msra.mxu0 0.0
      %2827 = vmatprep.subr.mxu0 0.0
      %2828 = vmatpush1.msra.mxu0 0.0
      %2829 = vmatprep.subr.mxu0 0.0
      %2830 = vmatpush1.msra.mxu0 0.0
      %2831 = vmatprep.subr.mxu0 0.0
      %2832 = vmatpush1.msra.mxu0 0.0
      %2833 = vmatprep.subr.mxu0 0.0
      %2834 = vmatpush1.msra.mxu0 0.0
      %2835 = vmatprep.subr.mxu0 0.0
      %2836 = vmatpush1.msra.mxu0 0.0
      %2837 = vmatprep.subr.mxu0 0.0
      %2838 = vmatpush1.msra.mxu0 0.0
      %2839 = vmatprep.subr.mxu0 0.0
      %2840 = vmatpush1.msra.mxu0 0.0
      %2841 = vmatprep.subr.mxu0 0.0
      %2842 = vmatpush1.msra.mxu0 0.0
      %2843 = vmatprep.subr.mxu0 0.0
      %2844 = vmatpush1.msra.mxu0 0.0
      %2845 = vmatprep.subr.mxu0 0.0
      %2846 = vmatpush1.msra.mxu0 0.0
      %2847 = vmatprep.subr.mxu0 0.0
      %2848 = vmatpush1.msra.mxu0 0.0
      %2849 = vmatprep.subr.mxu0 0.0
      %2850 = vmatpush1.msra.mxu0 0.0
      %2851 = vmatprep.subr.mxu0 0.0
      %2852 = vmatpush1.msra.mxu0 0.0
      %2853 = vmatprep.subr.mxu0 0.0
      %2854 = vmatpush1.msra.mxu0 0.0
      %2855 = vmatprep.subr.mxu0 0.0
      %2856 = vmatpush1.msra.mxu0 0.0
      %2857 = vmatprep.subr.mxu0 0.0
      %2858 = vmatpush1.msra.mxu0 0.0
      %2859 = vmatprep.subr.mxu0 0.0
      %2860 = vmatpush1.msra.mxu0 0.0
      %2861 = vmatprep.subr.mxu0 0.0
      %2862 = vmatpush1.msra.mxu0 0.0
      %2863 = vmatprep.subr.mxu0 0.0
      %2864 = vmatpush1.msra.mxu0 0.0
      %2865 = vmatprep.subr.mxu0 0.0
      %2866 = vmatpush1.msra.mxu0 0.0
      %2867 = vmatprep.subr.mxu0 0.0
      %2868 = vmatpush1.msra.mxu0 0.0
      %2869 = vmatprep.mubr.f32.mxu0 0.0
      %2870 = vmatmul.mubr.f32.gmra.mrb[0].mxu0 %v729
      %v2871 = vpop.f32.mrb[0].mxu0
      %v2872 = vadd.f32 0.0, %v2871
      %v2873 = vpop.f32.mrb[0].mxu0
      %2874 = vmatprep.mubr.f32.mxu0 0.0
      %2875 = vmatmul.mubr.f32.gmra.mrb[0].mxu0 %v731
      %v2876 = vpop.f32.mrb[0].mxu0
      %v2877 = vadd.f32 0.0, %v2876
      %v2878 = vpop.f32.mrb[0].mxu0
      %2879 = vmatprep.mubr.f32.mxu0 0.0
      %2880 = vmatmul.mubr.f32.gmra.mrb[0].mxu0 %v733
      %v2881 = vpop.f32.mrb[0].mxu0
      %v2882 = vadd.f32 0.0, %v2881
      %v2883 = vpop.f32.mrb[0].mxu0
      %2884 = vmatprep.mubr.f32.mxu0 0.0
      %2885 = vmatmul.mubr.f32.gmra.mrb[0].mxu0 %v735
      %v2886 = vpop.f32.mrb[0].mxu0
      %v2887 = vadd.f32 0.0, %v2886
      %v2888 = vpop.f32.mrb[0].mxu0
      %2889 = vmatprep.mubr.f32.mxu0 0.0
      %2890 = vmatmul.mubr.f32.gmra.mrb[0].mxu0 %v737
      %v2891 = vpop.f32.mrb[0].mxu0
      %v2892 = vadd.f32 0.0, %v2891
      %v2893 = vpop.f32.mrb[0].mxu0
      %2894 = vmatprep.mubr.f32.mxu0 0.0
      %2895 = vmatmul.mubr.f32.gmra.mrb[0].mxu0 %v739
      %v2896 = vpop.f32.mrb[0].mxu0
      %v2897 = vadd.f32 0.0, %v2896
      %v2898 = vpop.f32.mrb[0].mxu0
      %2899 = vmatprep.mubr.f32.mxu0 0.0
      %2900 = vmatmul.mubr.f32.gmra.mrb[0].mxu0 %v741
      %v2901 = vpop.f32.mrb[0].mxu0
      %v2902 = vadd.f32 0.0, %v2901
      %v2903 = vpop.f32.mrb[0].mxu0
      %2904 = vmatprep.mubr.f32.mxu0 0.0
      %2905 = vmatmul.mubr.f32.gmra.mrb[0].mxu0 %v743
      %v2906 = vpop.f32.mrb[0].mxu0
      %v2907 = vadd.f32 0.0, %v2906
      %v2908 = vpop.f32.mrb[0].mxu0
      %2909 = vmatprep.mubr.f32.mxu0 0.0
      %2910 = vmatmul.mubr.f32.gmra.mrb[0].mxu0 %v745
      %v2911 = vpop.f32.mrb[0].mxu0
      %v2912 = vadd.f32 0.0, %v2911
      %v2913 = vpop.f32.mrb[0].mxu0
      %2914 = vmatprep.mubr.f32.mxu0 0.0
      %2915 = vmatmul.mubr.f32.gmra.mrb[0].mxu0 %v747
      %v2916 = vpop.f32.mrb[0].mxu0
      %v2917 = vadd.f32 0.0, %v2916
      %v2918 = vpop.f32.mrb[0].mxu0
      %2919 = vmatprep.mubr.f32.mxu0 0.0
      %2920 = vmatmul.mubr.f32.gmra.mrb[0].mxu0 %v749
      %v2921 = vpop.f32.mrb[0].mxu0
      %v2922 = vadd.f32 0.0, %v2921
      %v2923 = vpop.f32.mrb[0].mxu0
      %2924 = vmatprep.mubr.f32.mxu0 0.0
      %2925 = vmatmul.mubr.f32.gmra.mrb[0].mxu0 %v751
      %v2926 = vpop.f32.mrb[0].mxu0
      %v2927 = vadd.f32 0.0, %v2926
      %v2928 = vpop.f32.mrb[0].mxu0
      %2929 = vmatprep.mubr.f32.mxu0 0.0
      %2930 = vmatmul.mubr.f32.gmra.mrb[0].mxu0 %v753
      %v2931 = vpop.f32.mrb[0].mxu0
      %v2932 = vadd.f32 0.0, %v2931
      %v2933 = vpop.f32.mrb[0].mxu0
      %2934 = vmatprep.mubr.f32.mxu0 0.0
      %2935 = vmatmul.mubr.f32.gmra.mrb[0].mxu0 %v755
      %v2936 = vpop.f32.mrb[0].mxu0
      %v2937 = vadd.f32 0.0, %v2936
      %v2938 = vpop.f32.mrb[0].mxu0
      %2939 = vmatprep.mubr.f32.mxu0 0.0
      %2940 = vmatmul.mubr.f32.gmra.mrb[0].mxu0 %v757
      %v2941 = vpop.f32.mrb[0].mxu0
      %v2942 = vadd.f32 0.0, %v2941
      %v2943 = vpop.f32.mrb[0].mxu0
      %2944 = vmatprep.mubr.f32.mxu0 0.0
      %2945 = vmatmul.mubr.f32.gmra.mrb[0].mxu0 %v759
      %v2946 = vpop.f32.mrb[0].mxu0
      %v2947 = vadd.f32 0.0, %v2946
      %v2948 = vpop.f32.mrb[0].mxu0
      %2949 = vmatprep.mubr.f32.mxu0 0.0
      %2950 = vmatmul.mubr.f32.gmra.mrb[0].mxu0 %v761
      %v2951 = vpop.f32.mrb[0].mxu0
      %v2952 = vadd.f32 0.0, %v2951
      %v2953 = vpop.f32.mrb[0].mxu0
      %2954 = vmatprep.mubr.f32.mxu0 0.0
      %2955 = vmatmul.mubr.f32.gmra.mrb[0].mxu0 %v763
      %v2956 = vpop.f32.mrb[0].mxu0
      %v2957 = vadd.f32 0.0, %v2956
      %v2958 = vpop.f32.mrb[0].mxu0
      %2959 = vmatprep.mubr.f32.mxu0 0.0
      %2960 = vmatmul.mubr.f32.gmra.mrb[0].mxu0 %v765
      %v2961 = vpop.f32.mrb[0].mxu0
      %v2962 = vadd.f32 0.0, %v2961
      %v2963 = vpop.f32.mrb[0].mxu0
      %2964 = vmatprep.mubr.f32.mxu0 0.0
      %2965 = vmatmul.mubr.f32.gmra.mrb[0].mxu0 %v767
      %v2966 = vpop.f32.mrb[0].mxu0
      %v2967 = vadd.f32 0.0, %v2966
      %v2968 = vpop.f32.mrb[0].mxu0
      %2969 = vmatprep.mubr.f32.mxu0 0.0
      %2970 = vmatmul.mubr.f32.gmra.mrb[0].mxu0 %v769
      %v2971 = vpop.f32.mrb[0].mxu0
      %v2972 = vadd.f32 0.0, %v2971
      %v2973 = vpop.f32.mrb[0].mxu0
      %2974 = vmatprep.mubr.f32.mxu0 0.0
      %2975 = vmatmul.mubr.f32.gmra.mrb[0].mxu0 %v771
      %v2976 = vpop.f32.mrb[0].mxu0
      %v2977 = vadd.f32 0.0, %v2976
      %v2978 = vpop.f32.mrb[0].mxu0
      %2979 = vmatprep.mubr.f32.mxu0 0.0
      %2980 = vmatmul.mubr.f32.gmra.mrb[0].mxu0 %v773
      %v2981 = vpop.f32.mrb[0].mxu0
      %v2982 = vadd.f32 0.0, %v2981
      %v2983 = vpop.f32.mrb[0].mxu0
      %2984 = vmatprep.mubr.f32.mxu0 0.0
      %2985 = vmatmul.mubr.f32.gmra.mrb[0].mxu0 %v775
      %v2986 = vpop.f32.mrb[0].mxu0
      %v2987 = vadd.f32 0.0, %v2986
      %v2988 = vpop.f32.mrb[0].mxu0
      %2989 = vmatprep.mubr.f32.mxu0 0.0
      %2990 = vmatmul.mubr.f32.gmra.mrb[0].mxu0 %v777
      %v2991 = vpop.f32.mrb[0].mxu0
      %v2992 = vadd.f32 0.0, %v2991
      %v2993 = vpop.f32.mrb[0].mxu0
      %2994 = vmatprep.mubr.f32.mxu0 0.0
      %2995 = vmatmul.mubr.f32.gmra.mrb[0].mxu0 %v779
      %v2996 = vpop.f32.mrb[0].mxu0
      %v2997 = vadd.f32 0.0, %v2996
      %v2998 = vpop.f32.mrb[0].mxu0
      %2999 = vmatprep.mubr.f32.mxu0 0.0
      %3000 = vmatmul.mubr.f32.gmra.mrb[0].mxu0 %v781
      %v3001 = vpop.f32.mrb[0].mxu0
      %v3002 = vadd.f32 0.0, %v3001
      %v3003 = vpop.f32.mrb[0].mxu0
      %3004 = vmatprep.mubr.f32.mxu0 0.0
      %3005 = vmatmul.mubr.f32.gmra.mrb[0].mxu0 %v783
      %v3006 = vpop.f32.mrb[0].mxu0
      %v3007 = vadd.f32 0.0, %v3006
      %v3008 = vpop.f32.mrb[0].mxu0
      %3009 = vmatprep.mubr.f32.mxu0 0.0
      %3010 = vmatmul.mubr.f32.gmra.mrb[0].mxu0 %v1988
      %v3011 = vpop.f32.mrb[0].mxu0
      %v3012 = vadd.f32 0.0, %v3011
      %v3013 = vpop.f32.mrb[0].mxu0
      %3014 = vmatprep.mubr.f32.mxu0 0.0
      %3015 = vmatmul.mubr.f32.gmra.mrb[0].mxu0 %v1990
      %v3016 = vpop.f32.mrb[0].mxu0
      %v3017 = vadd.f32 0.0, %v3016
      %v3018 = vpop.f32.mrb[0].mxu0
      %3019 = vmatprep.mubr.f32.mxu0 0.0
      %3020 = vmatmul.mubr.f32.gmra.mrb[0].mxu0 %v2798
      %v3021 = vpop.f32.mrb[0].mxu0
      %v3022 = vadd.f32 0.0, %v3021
      %v3023 = vpop.f32.mrb[0].mxu0
      %3024 = vmatprep.mubr.f32.mxu0 0.0
      %3025 = vmatmul.mubr.f32.gmra.mrb[0].mxu0 %v2800
      %v3026 = vpop.f32.mrb[0].mxu0
      %v3027 = vadd.f32 0.0, %v3026
      %v3028 = vpop.f32.mrb[0].mxu0
      %3029 = vdwg.mxu0
      %v3030 = vadd.f32 %v2758, %v2872
      %v3031 = vadd.f32 %v2759, %v2877
      %v3032 = vadd.f32 %v2760, %v2882
      %v3033 = vadd.f32 %v2761, %v2887
      %v3034 = vadd.f32 %v2762, %v2892
      %v3035 = vadd.f32 %v2763, %v2897
      %v3036 = vadd.f32 %v2764, %v2902
      %v3037 = vadd.f32 %v2765, %v2907
      %v3038 = vadd.f32 %v2766, %v2912
      %v3039 = vadd.f32 %v2767, %v2917
      %v3040 = vadd.f32 %v2768, %v2922
      %v3041 = vadd.f32 %v2769, %v2927
      %v3042 = vadd.f32 %v2770, %v2932
      %v3043 = vadd.f32 %v2771, %v2937
      %v3044 = vadd.f32 %v2772, %v2942
      %v3045 = vadd.f32 %v2773, %v2947
      %v3046 = vadd.f32 %v2774, %v2952
      %v3047 = vadd.f32 %v2775, %v2957
      %v3048 = vadd.f32 %v2776, %v2962
      %v3049 = vadd.f32 %v2777, %v2967
      %v3050 = vadd.f32 %v2778, %v2972
      %v3051 = vadd.f32 %v2779, %v2977
      %v3052 = vadd.f32 %v2780, %v2982
      %v3053 = vadd.f32 %v2781, %v2987
      %v3054 = vadd.f32 %v2782, %v2992
      %v3055 = vadd.f32 %v2783, %v2997
      %v3056 = vadd.f32 %v2784, %v3002
      %v3057 = vadd.f32 %v2785, %v3007
      %v3058 = vadd.f32 %v2786, %v3012
      %v3059 = vadd.f32 %v2787, %v3017
      %v3060 = vadd.f32 %v2788, %v3022
      %v3061 = vadd.f32 %v2789, %v3027
      %v3062 = vrot.slane %v585, 2
      %v3063 = vrot.slane %v531, 2
      %v3064 = vsel %vm1306, %v3062, %v3063
      %v3065 = vrot.slane %v603, 2
      %v3066 = vsel %vm1306, %v3063, %v3065
      %s3067 = scalar_lea.vmem %s3, 32
      %v3068 = vld [vmem:[%s3067] sm:$0xf]
      %v3069 = vsel %vm720, %v3064, 0
      %v3071 = vsel %vm720, %v3066, 0
      %v3074 = vsel %vm785, %v3068, 0
      %3076 = vmatprep.subr.mxu0 0.0
      %3077 = vmatpush1.msra.mxu0 %v3074
      %3078 = vmatprep.subr.mxu0 0.0
      %3079 = vmatpush1.msra.mxu0 0.0
      %3080 = vmatprep.subr.mxu0 0.0
      %3081 = vmatpush1.msra.mxu0 0.0
      %3082 = vmatprep.subr.mxu0 0.0
      %3083 = vmatpush1.msra.mxu0 0.0
      %3084 = vmatprep.subr.mxu0 0.0
      %3085 = vmatpush1.msra.mxu0 0.0
      %3086 = vmatprep.subr.mxu0 0.0
      %3087 = vmatpush1.msra.mxu0 0.0
      %3088 = vmatprep.subr.mxu0 0.0
      %3089 = vmatpush1.msra.mxu0 0.0
      %3090 = vmatprep.subr.mxu0 0.0
      %3091 = vmatpush1.msra.mxu0 0.0
      %3092 = vmatprep.subr.mxu0 0.0
      %3093 = vmatpush1.msra.mxu0 0.0
      %3094 = vmatprep.subr.mxu0 0.0
      %3095 = vmatpush1.msra.mxu0 0.0
      %3096 = vmatprep.subr.mxu0 0.0
      %3097 = vmatpush1.msra.mxu0 0.0
      %3098 = vmatprep.subr.mxu0 0.0
      %3099 = vmatpush1.msra.mxu0 0.0
      %3100 = vmatprep.subr.mxu0 0.0
      %3101 = vmatpush1.msra.mxu0 0.0
      %3102 = vmatprep.subr.mxu0 0.0
      %3103 = vmatpush1.msra.mxu0 0.0
      %3104 = vmatprep.subr.mxu0 0.0
      %3105 = vmatpush1.msra.mxu0 0.0
      %3106 = vmatprep.subr.mxu0 0.0
      %3107 = vmatpush1.msra.mxu0 0.0
      %3108 = vmatprep.subr.mxu0 0.0
      %3109 = vmatpush1.msra.mxu0 0.0
      %3110 = vmatprep.subr.mxu0 0.0
      %3111 = vmatpush1.msra.mxu0 0.0
      %3112 = vmatprep.subr.mxu0 0.0
      %3113 = vmatpush1.msra.mxu0 0.0
      %3114 = vmatprep.subr.mxu0 0.0
      %3115 = vmatpush1.msra.mxu0 0.0
      %3116 = vmatprep.subr.mxu0 0.0
      %3117 = vmatpush1.msra.mxu0 0.0
      %3118 = vmatprep.subr.mxu0 0.0
      %3119 = vmatpush1.msra.mxu0 0.0
      %3120 = vmatprep.subr.mxu0 0.0
      %3121 = vmatpush1.msra.mxu0 0.0
      %3122 = vmatprep.subr.mxu0 0.0
      %3123 = vmatpush1.msra.mxu0 0.0
      %3124 = vmatprep.subr.mxu0 0.0
      %3125 = vmatpush1.msra.mxu0 0.0
      %3126 = vmatprep.subr.mxu0 0.0
      %3127 = vmatpush1.msra.mxu0 0.0
      %3128 = vmatprep.subr.mxu0 0.0
      %3129 = vmatpush1.msra.mxu0 0.0
      %3130 = vmatprep.subr.mxu0 0.0
      %3131 = vmatpush1.msra.mxu0 0.0
      %3132 = vmatprep.subr.mxu0 0.0
      %3133 = vmatpush1.msra.mxu0 0.0
      %3134 = vmatprep.subr.mxu0 0.0
      %3135 = vmatpush1.msra.mxu0 0.0
      %3136 = vmatprep.subr.mxu0 0.0
      %3137 = vmatpush1.msra.mxu0 0.0
      %3138 = vmatprep.subr.mxu0 0.0
      %3139 = vmatpush1.msra.mxu0 0.0
      %3140 = vmatprep.mubr.f32.mxu0 0.0
      %3141 = vmatmul.mubr.f32.gmra.mrb[0].mxu0 %v1397
      %v3142 = vpop.f32.mrb[0].mxu0
      %v3143 = vadd.f32 0.0, %v3142
      %v3144 = vpop.f32.mrb[0].mxu0
      %3145 = vmatprep.mubr.f32.mxu0 0.0
      %3146 = vmatmul.mubr.f32.gmra.mrb[0].mxu0 %v1399
      %v3147 = vpop.f32.mrb[0].mxu0
      %v3148 = vadd.f32 0.0, %v3147
      %v3149 = vpop.f32.mrb[0].mxu0
      %3150 = vmatprep.mubr.f32.mxu0 0.0
      %3151 = vmatmul.mubr.f32.gmra.mrb[0].mxu0 %v1401
      %v3152 = vpop.f32.mrb[0].mxu0
      %v3153 = vadd.f32 0.0, %v3152
      %v3154 = vpop.f32.mrb[0].mxu0
      %3155 = vmatprep.mubr.f32.mxu0 0.0
      %3156 = vmatmul.mubr.f32.gmra.mrb[0].mxu0 %v1403
      %v3157 = vpop.f32.mrb[0].mxu0
      %v3158 = vadd.f32 0.0, %v3157
      %v3159 = vpop.f32.mrb[0].mxu0
      %3160 = vmatprep.mubr.f32.mxu0 0.0
      %3161 = vmatmul.mubr.f32.gmra.mrb[0].mxu0 %v1405
      %v3162 = vpop.f32.mrb[0].mxu0
      %v3163 = vadd.f32 0.0, %v3162
      %v3164 = vpop.f32.mrb[0].mxu0
      %3165 = vmatprep.mubr.f32.mxu0 0.0
      %3166 = vmatmul.mubr.f32.gmra.mrb[0].mxu0 %v1407
      %v3167 = vpop.f32.mrb[0].mxu0
      %v3168 = vadd.f32 0.0, %v3167
      %v3169 = vpop.f32.mrb[0].mxu0
      %3170 = vmatprep.mubr.f32.mxu0 0.0
      %3171 = vmatmul.mubr.f32.gmra.mrb[0].mxu0 %v1409
      %v3172 = vpop.f32.mrb[0].mxu0
      %v3173 = vadd.f32 0.0, %v3172
      %v3174 = vpop.f32.mrb[0].mxu0
      %3175 = vmatprep.mubr.f32.mxu0 0.0
      %3176 = vmatmul.mubr.f32.gmra.mrb[0].mxu0 %v1411
      %v3177 = vpop.f32.mrb[0].mxu0
      %v3178 = vadd.f32 0.0, %v3177
      %v3179 = vpop.f32.mrb[0].mxu0
      %3180 = vmatprep.mubr.f32.mxu0 0.0
      %3181 = vmatmul.mubr.f32.gmra.mrb[0].mxu0 %v1413
      %v3182 = vpop.f32.mrb[0].mxu0
      %v3183 = vadd.f32 0.0, %v3182
      %v3184 = vpop.f32.mrb[0].mxu0
      %3185 = vmatprep.mubr.f32.mxu0 0.0
      %3186 = vmatmul.mubr.f32.gmra.mrb[0].mxu0 %v1415
      %v3187 = vpop.f32.mrb[0].mxu0
      %v3188 = vadd.f32 0.0, %v3187
      %v3189 = vpop.f32.mrb[0].mxu0
      %3190 = vmatprep.mubr.f32.mxu0 0.0
      %3191 = vmatmul.mubr.f32.gmra.mrb[0].mxu0 %v1417
      %v3192 = vpop.f32.mrb[0].mxu0
      %v3193 = vadd.f32 0.0, %v3192
      %v3194 = vpop.f32.mrb[0].mxu0
      %3195 = vmatprep.mubr.f32.mxu0 0.0
      %3196 = vmatmul.mubr.f32.gmra.mrb[0].mxu0 %v1419
      %v3197 = vpop.f32.mrb[0].mxu0
      %v3198 = vadd.f32 0.0, %v3197
      %v3199 = vpop.f32.mrb[0].mxu0
      %3200 = vmatprep.mubr.f32.mxu0 0.0
      %3201 = vmatmul.mubr.f32.gmra.mrb[0].mxu0 %v1421
      %v3202 = vpop.f32.mrb[0].mxu0
      %v3203 = vadd.f32 0.0, %v3202
      %v3204 = vpop.f32.mrb[0].mxu0
      %3205 = vmatprep.mubr.f32.mxu0 0.0
      %3206 = vmatmul.mubr.f32.gmra.mrb[0].mxu0 %v1423
      %v3207 = vpop.f32.mrb[0].mxu0
      %v3208 = vadd.f32 0.0, %v3207
      %v3209 = vpop.f32.mrb[0].mxu0
      %3210 = vmatprep.mubr.f32.mxu0 0.0
      %3211 = vmatmul.mubr.f32.gmra.mrb[0].mxu0 %v1425
      %v3212 = vpop.f32.mrb[0].mxu0
      %v3213 = vadd.f32 0.0, %v3212
      %v3214 = vpop.f32.mrb[0].mxu0
      %3215 = vmatprep.mubr.f32.mxu0 0.0
      %3216 = vmatmul.mubr.f32.gmra.mrb[0].mxu0 %v1427
      %v3217 = vpop.f32.mrb[0].mxu0
      %v3218 = vadd.f32 0.0, %v3217
      %v3219 = vpop.f32.mrb[0].mxu0
      %3220 = vmatprep.mubr.f32.mxu0 0.0
      %3221 = vmatmul.mubr.f32.gmra.mrb[0].mxu0 %v1429
      %v3222 = vpop.f32.mrb[0].mxu0
      %v3223 = vadd.f32 0.0, %v3222
      %v3224 = vpop.f32.mrb[0].mxu0
      %3225 = vmatprep.mubr.f32.mxu0 0.0
      %3226 = vmatmul.mubr.f32.gmra.mrb[0].mxu0 %v1431
      %v3227 = vpop.f32.mrb[0].mxu0
      %v3228 = vadd.f32 0.0, %v3227
      %v3229 = vpop.f32.mrb[0].mxu0
      %3230 = vmatprep.mubr.f32.mxu0 0.0
      %3231 = vmatmul.mubr.f32.gmra.mrb[0].mxu0 %v1433
      %v3232 = vpop.f32.mrb[0].mxu0
      %v3233 = vadd.f32 0.0, %v3232
      %v3234 = vpop.f32.mrb[0].mxu0
      %3235 = vmatprep.mubr.f32.mxu0 0.0
      %3236 = vmatmul.mubr.f32.gmra.mrb[0].mxu0 %v1435
      %v3237 = vpop.f32.mrb[0].mxu0
      %v3238 = vadd.f32 0.0, %v3237
      %v3239 = vpop.f32.mrb[0].mxu0
      %3240 = vmatprep.mubr.f32.mxu0 0.0
      %3241 = vmatmul.mubr.f32.gmra.mrb[0].mxu0 %v1437
      %v3242 = vpop.f32.mrb[0].mxu0
      %v3243 = vadd.f32 0.0, %v3242
      %v3244 = vpop.f32.mrb[0].mxu0
      %3245 = vmatprep.mubr.f32.mxu0 0.0
      %3246 = vmatmul.mubr.f32.gmra.mrb[0].mxu0 %v1439
      %v3247 = vpop.f32.mrb[0].mxu0
      %v3248 = vadd.f32 0.0, %v3247
      %v3249 = vpop.f32.mrb[0].mxu0
      %3250 = vmatprep.mubr.f32.mxu0 0.0
      %3251 = vmatmul.mubr.f32.gmra.mrb[0].mxu0 %v1441
      %v3252 = vpop.f32.mrb[0].mxu0
      %v3253 = vadd.f32 0.0, %v3252
      %v3254 = vpop.f32.mrb[0].mxu0
      %3255 = vmatprep.mubr.f32.mxu0 0.0
      %3256 = vmatmul.mubr.f32.gmra.mrb[0].mxu0 %v1443
      %v3257 = vpop.f32.mrb[0].mxu0
      %v3258 = vadd.f32 0.0, %v3257
      %v3259 = vpop.f32.mrb[0].mxu0
      %3260 = vmatprep.mubr.f32.mxu0 0.0
      %3261 = vmatmul.mubr.f32.gmra.mrb[0].mxu0 %v1445
      %v3262 = vpop.f32.mrb[0].mxu0
      %v3263 = vadd.f32 0.0, %v3262
      %v3264 = vpop.f32.mrb[0].mxu0
      %3265 = vmatprep.mubr.f32.mxu0 0.0
      %3266 = vmatmul.mubr.f32.gmra.mrb[0].mxu0 %v1447
      %v3267 = vpop.f32.mrb[0].mxu0
      %v3268 = vadd.f32 0.0, %v3267
      %v3269 = vpop.f32.mrb[0].mxu0
      %3270 = vmatprep.mubr.f32.mxu0 0.0
      %3271 = vmatmul.mubr.f32.gmra.mrb[0].mxu0 %v1449
      %v3272 = vpop.f32.mrb[0].mxu0
      %v3273 = vadd.f32 0.0, %v3272
      %v3274 = vpop.f32.mrb[0].mxu0
      %3275 = vmatprep.mubr.f32.mxu0 0.0
      %3276 = vmatmul.mubr.f32.gmra.mrb[0].mxu0 %v1451
      %v3277 = vpop.f32.mrb[0].mxu0
      %v3278 = vadd.f32 0.0, %v3277
      %v3279 = vpop.f32.mrb[0].mxu0
      %3280 = vmatprep.mubr.f32.mxu0 0.0
      %3281 = vmatmul.mubr.f32.gmra.mrb[0].mxu0 %v2259
      %v3282 = vpop.f32.mrb[0].mxu0
      %v3283 = vadd.f32 0.0, %v3282
      %v3284 = vpop.f32.mrb[0].mxu0
      %3285 = vmatprep.mubr.f32.mxu0 0.0
      %3286 = vmatmul.mubr.f32.gmra.mrb[0].mxu0 %v2261
      %v3287 = vpop.f32.mrb[0].mxu0
      %v3288 = vadd.f32 0.0, %v3287
      %v3289 = vpop.f32.mrb[0].mxu0
      %3290 = vmatprep.mubr.f32.mxu0 0.0
      %3291 = vmatmul.mubr.f32.gmra.mrb[0].mxu0 %v3069
      %v3292 = vpop.f32.mrb[0].mxu0
      %v3293 = vadd.f32 0.0, %v3292
      %v3294 = vpop.f32.mrb[0].mxu0
      %3295 = vmatprep.mubr.f32.mxu0 0.0
      %3296 = vmatmul.mubr.f32.gmra.mrb[0].mxu0 %v3071
      %v3297 = vpop.f32.mrb[0].mxu0
      %v3298 = vadd.f32 0.0, %v3297
      %v3299 = vpop.f32.mrb[0].mxu0
      %3300 = vdwg.mxu0
      %v3301 = vadd.f32 %v3030, %v3143
      %v3302 = vadd.f32 %v3031, %v3148
      %v3303 = vadd.f32 %v3032, %v3153
      %v3304 = vadd.f32 %v3033, %v3158
      %v3305 = vadd.f32 %v3034, %v3163
      %v3306 = vadd.f32 %v3035, %v3168
      %v3307 = vadd.f32 %v3036, %v3173
      %v3308 = vadd.f32 %v3037, %v3178
      %v3309 = vadd.f32 %v3038, %v3183
      %v3310 = vadd.f32 %v3039, %v3188
      %v3311 = vadd.f32 %v3040, %v3193
      %v3312 = vadd.f32 %v3041, %v3198
      %v3313 = vadd.f32 %v3042, %v3203
      %v3314 = vadd.f32 %v3043, %v3208
      %v3315 = vadd.f32 %v3044, %v3213
      %v3316 = vadd.f32 %v3045, %v3218
      %v3317 = vadd.f32 %v3046, %v3223
      %v3318 = vadd.f32 %v3047, %v3228
      %v3319 = vadd.f32 %v3048, %v3233
      %v3320 = vadd.f32 %v3049, %v3238
      %v3321 = vadd.f32 %v3050, %v3243
      %v3322 = vadd.f32 %v3051, %v3248
      %v3323 = vadd.f32 %v3052, %v3253
      %v3324 = vadd.f32 %v3053, %v3258
      %v3325 = vadd.f32 %v3054, %v3263
      %v3326 = vadd.f32 %v3055, %v3268
      %v3327 = vadd.f32 %v3056, %v3273
      %v3328 = vadd.f32 %v3057, %v3278
      %v3329 = vadd.f32 %v3058, %v3283
      %v3330 = vadd.f32 %v3059, %v3288
      %v3331 = vadd.f32 %v3060, %v3293
      %v3332 = vadd.f32 %v3061, %v3298
      %v3333 = vld [vmem:[%s4] sm:$0x1]
      %v3335 = vlaneseq
      %v3336 = vshrl.u32 %v3335, 7
      %v3337 = vsub.s32 0, %v3336
      %v3338 = vrot.slane %v3333, %v3337
      %v3340 = vadd.f32 %v3301, %v3338
      %v3341 = vadd.f32 %v3302, %v3338
      %v3342 = vadd.f32 %v3303, %v3338
      %v3343 = vadd.f32 %v3304, %v3338
      %v3344 = vadd.f32 %v3305, %v3338
      %v3345 = vadd.f32 %v3306, %v3338
      %v3346 = vadd.f32 %v3307, %v3338
      %v3347 = vadd.f32 %v3308, %v3338
      %v3348 = vadd.f32 %v3309, %v3338
      %v3349 = vadd.f32 %v3310, %v3338
      %v3350 = vadd.f32 %v3311, %v3338
      %v3351 = vadd.f32 %v3312, %v3338
      %v3352 = vadd.f32 %v3313, %v3338
      %v3353 = vadd.f32 %v3314, %v3338
      %v3354 = vadd.f32 %v3315, %v3338
      %v3355 = vadd.f32 %v3316, %v3338
      %v3356 = vadd.f32 %v3317, %v3338
      %v3357 = vadd.f32 %v3318, %v3338
      %v3358 = vadd.f32 %v3319, %v3338
      %v3359 = vadd.f32 %v3320, %v3338
      %v3360 = vadd.f32 %v3321, %v3338
      %v3361 = vadd.f32 %v3322, %v3338
      %v3362 = vadd.f32 %v3323, %v3338
      %v3363 = vadd.f32 %v3324, %v3338
      %v3364 = vadd.f32 %v3325, %v3338
      %v3365 = vadd.f32 %v3326, %v3338
      %v3366 = vadd.f32 %v3327, %v3338
      %v3367 = vadd.f32 %v3328, %v3338
      %v3368 = vadd.f32 %v3329, %v3338
      %v3369 = vadd.f32 %v3330, %v3338
      %v3370 = vadd.f32 %v3331, %v3338
      %v3371 = vadd.f32 %v3332, %v3338
      %v3372 = vmax.f32 %v3340, 0.0
      %v3373 = vmax.f32 %v3341, 0.0
      %v3374 = vmax.f32 %v3342, 0.0
      %v3375 = vmax.f32 %v3343, 0.0
      %v3376 = vmax.f32 %v3344, 0.0
      %v3377 = vmax.f32 %v3345, 0.0
      %v3378 = vmax.f32 %v3346, 0.0
      %v3379 = vmax.f32 %v3347, 0.0
      %v3380 = vmax.f32 %v3348, 0.0
      %v3381 = vmax.f32 %v3349, 0.0
      %v3382 = vmax.f32 %v3350, 0.0
      %v3383 = vmax.f32 %v3351, 0.0
      %v3384 = vmax.f32 %v3352, 0.0
      %v3385 = vmax.f32 %v3353, 0.0
      %v3386 = vmax.f32 %v3354, 0.0
      %v3387 = vmax.f32 %v3355, 0.0
      %v3388 = vmax.f32 %v3356, 0.0
      %v3389 = vmax.f32 %v3357, 0.0
      %v3390 = vmax.f32 %v3358, 0.0
      %v3391 = vmax.f32 %v3359, 0.0
      %v3392 = vmax.f32 %v3360, 0.0
      %v3393 = vmax.f32 %v3361, 0.0
      %v3394 = vmax.f32 %v3362, 0.0
      %v3395 = vmax.f32 %v3363, 0.0
      %v3396 = vmax.f32 %v3364, 0.0
      %v3397 = vmax.f32 %v3365, 0.0
      %v3398 = vmax.f32 %v3366, 0.0
      %v3399 = vmax.f32 %v3367, 0.0
      %v3400 = vmax.f32 %v3368, 0.0
      %v3401 = vmax.f32 %v3369, 0.0
      %v3402 = vmax.f32 %v3370, 0.0
      %v3403 = vmax.f32 %v3371, 0.0
      %3404 = vst.msk [vmem:[%s391] sm:$0xff] %vm720, %v393
      %3405 = vst.msk [vmem:[%s391 + $0x8] sm:$0xff] %vm720, %v394
      %3406 = vst.msk [vmem:[%s391 + $0x10] sm:$0xff] %vm720, %v395
      %3407 = vst.msk [vmem:[%s391 + $0x18] sm:$0xff] %vm720, %v396
      %3408 = vst.msk [vmem:[%s391 + $0x20] sm:$0xff] %vm720, %v397
      %3409 = vst.msk [vmem:[%s391 + $0x28] sm:$0xff] %vm720, %v398
      %3410 = vst.msk [vmem:[%s391 + $0x30] sm:$0xff] %vm720, %v399
      %3411 = vst.msk [vmem:[%s391 + $0x38] sm:$0xff] %vm720, %v400
      %3412 = vst.msk [vmem:[%s391 + $0x40] sm:$0xff] %vm720, %v401
      %3413 = vst.msk [vmem:[%s391 + $0x48] sm:$0xff] %vm720, %v402
      %3414 = vst.msk [vmem:[%s391 + $0x50] sm:$0xff] %vm720, %v403
      %3415 = vst.msk [vmem:[%s391 + $0x58] sm:$0xff] %vm720, %v404
      %3416 = vst.msk [vmem:[%s391 + $0x60] sm:$0xff] %vm720, %v405
      %3417 = vst.msk [vmem:[%s391 + $0x68] sm:$0xff] %vm720, %v406
      %3418 = vst.msk [vmem:[%s391 + $0x70] sm:$0xff] %vm720, %v407
      %3419 = vst.msk [vmem:[%s391 + $0x78] sm:$0xff] %vm720, %v408
      %3420 = vst.msk [vmem:[%s391 + $0x80] sm:$0xff] %vm720, %v409
      %3421 = vst.msk [vmem:[%s391 + $0x88] sm:$0xff] %vm720, %v410
      %3422 = vst.msk [vmem:[%s391 + $0x90] sm:$0xff] %vm720, %v411
      %3423 = vst.msk [vmem:[%s391 + $0x98] sm:$0xff] %vm720, %v412
      %3424 = vst.msk [vmem:[%s391 + $0xa0] sm:$0xff] %vm720, %v413
      %3425 = vst.msk [vmem:[%s391 + $0xa8] sm:$0xff] %vm720, %v414
      %3426 = vst.msk [vmem:[%s391 + $0xb0] sm:$0xff] %vm720, %v415
      %3427 = vst.msk [vmem:[%s391 + $0xb8] sm:$0xff] %vm720, %v416
      %3428 = vst.msk [vmem:[%s391 + $0xc0] sm:$0xff] %vm720, %v417
      %3429 = vst.msk [vmem:[%s391 + $0xc8] sm:$0xff] %vm720, %v418
      %3430 = vst.msk [vmem:[%s391 + $0xd0] sm:$0xff] %vm720, %v419
      %3431 = vst.msk [vmem:[%s391 + $0xd8] sm:$0xff] %vm720, %v420
      %3432 = vst.msk [vmem:[%s391 + $0xe0] sm:$0xff] %vm720, %v421
      %3433 = vst.msk [vmem:[%s391 + $0xe8] sm:$0xff] %vm720, %v422
      %3434 = vst.msk [vmem:[%s391 + $0xf0] sm:$0xff] %vm720, %v423
      %3435 = vst.msk [vmem:[%s391 + $0xf8] sm:$0xff] %vm720, %v424
      %3468 = vrot.lane.b32.xlu0 %v3372, 4
      %v3469 = vpop.permute.xlu0 %3468
      %3470 = vrot.lane.b32.xlu0 %v3373, 4
      %v3471 = vpop.permute.xlu0 %3470
      %3472 = vrot.lane.b32.xlu0 %v3374, 4
      %v3473 = vpop.permute.xlu0 %3472
      %3474 = vrot.lane.b32.xlu0 %v3375, 4
      %v3475 = vpop.permute.xlu0 %3474
      %3476 = vrot.lane.b32.xlu0 %v3376, 4
      %v3477 = vpop.permute.xlu0 %3476
      %3478 = vrot.lane.b32.xlu0 %v3377, 4
      %v3479 = vpop.permute.xlu0 %3478
      %3480 = vrot.lane.b32.xlu0 %v3378, 4
      %v3481 = vpop.permute.xlu0 %3480
      %3482 = vrot.lane.b32.xlu0 %v3379, 4
      %v3483 = vpop.permute.xlu0 %3482
      %3484 = vrot.lane.b32.xlu0 %v3380, 4
      %v3485 = vpop.permute.xlu0 %3484
      %3486 = vrot.lane.b32.xlu0 %v3381, 4
      %v3487 = vpop.permute.xlu0 %3486
      %3488 = vrot.lane.b32.xlu0 %v3382, 4
      %v3489 = vpop.permute.xlu0 %3488
      %3490 = vrot.lane.b32.xlu0 %v3383, 4
      %v3491 = vpop.permute.xlu0 %3490
      %3492 = vrot.lane.b32.xlu0 %v3384, 4
      %v3493 = vpop.permute.xlu0 %3492
      %3494 = vrot.lane.b32.xlu0 %v3385, 4
      %v3495 = vpop.permute.xlu0 %3494
      %3496 = vrot.lane.b32.xlu0 %v3386, 4
      %v3497 = vpop.permute.xlu0 %3496
      %3498 = vrot.lane.b32.xlu0 %v3387, 4
      %v3499 = vpop.permute.xlu0 %3498
      %3500 = vrot.lane.b32.xlu0 %v3388, 4
      %v3501 = vpop.permute.xlu0 %3500
      %3502 = vrot.lane.b32.xlu0 %v3389, 4
      %v3503 = vpop.permute.xlu0 %3502
      %3504 = vrot.lane.b32.xlu0 %v3390, 4
      %v3505 = vpop.permute.xlu0 %3504
      %3506 = vrot.lane.b32.xlu0 %v3391, 4
      %v3507 = vpop.permute.xlu0 %3506
      %3508 = vrot.lane.b32.xlu0 %v3392, 4
      %v3509 = vpop.permute.xlu0 %3508
      %3510 = vrot.lane.b32.xlu0 %v3393, 4
      %v3511 = vpop.permute.xlu0 %3510
      %3512 = vrot.lane.b32.xlu0 %v3394, 4
      %v3513 = vpop.permute.xlu0 %3512
      %3514 = vrot.lane.b32.xlu0 %v3395, 4
      %v3515 = vpop.permute.xlu0 %3514
      %3516 = vrot.lane.b32.xlu0 %v3396, 4
      %v3517 = vpop.permute.xlu0 %3516
      %3518 = vrot.lane.b32.xlu0 %v3397, 4
      %v3519 = vpop.permute.xlu0 %3518
      %3520 = vrot.lane.b32.xlu0 %v3398, 4
      %v3521 = vpop.permute.xlu0 %3520
      %3522 = vrot.lane.b32.xlu0 %v3399, 4
      %v3523 = vpop.permute.xlu0 %3522
      %3524 = vrot.lane.b32.xlu0 %v3400, 4
      %v3525 = vpop.permute.xlu0 %3524
      %3526 = vrot.lane.b32.xlu0 %v3401, 4
      %v3527 = vpop.permute.xlu0 %3526
      %3528 = vrot.lane.b32.xlu0 %v3402, 4
      %v3529 = vpop.permute.xlu0 %3528
      %3530 = vrot.lane.b32.xlu0 %v3403, 4
      %v3531 = vpop.permute.xlu0 %3530
      %vm3564 = vcmask 97312
      %3565 = vst.msk [vmem:[%s391] sm:$0xff] %vm3564, %v3469
      %3566 = vst.msk [vmem:[%s391 + $0x8] sm:$0xff] %vm3564, %v3471
      %3567 = vst.msk [vmem:[%s391 + $0x10] sm:$0xff] %vm3564, %v3473
      %3568 = vst.msk [vmem:[%s391 + $0x18] sm:$0xff] %vm3564, %v3475
      %3569 = vst.msk [vmem:[%s391 + $0x20] sm:$0xff] %vm3564, %v3477
      %3570 = vst.msk [vmem:[%s391 + $0x28] sm:$0xff] %vm3564, %v3479
      %3571 = vst.msk [vmem:[%s391 + $0x30] sm:$0xff] %vm3564, %v3481
      %3572 = vst.msk [vmem:[%s391 + $0x38] sm:$0xff] %vm3564, %v3483
      %3573 = vst.msk [vmem:[%s391 + $0x40] sm:$0xff] %vm3564, %v3485
      %3574 = vst.msk [vmem:[%s391 + $0x48] sm:$0xff] %vm3564, %v3487
      %3575 = vst.msk [vmem:[%s391 + $0x50] sm:$0xff] %vm3564, %v3489
      %3576 = vst.msk [vmem:[%s391 + $0x58] sm:$0xff] %vm3564, %v3491
      %3577 = vst.msk [vmem:[%s391 + $0x60] sm:$0xff] %vm3564, %v3493
      %3578 = vst.msk [vmem:[%s391 + $0x68] sm:$0xff] %vm3564, %v3495
      %3579 = vst.msk [vmem:[%s391 + $0x70] sm:$0xff] %vm3564, %v3497
      %3580 = vst.msk [vmem:[%s391 + $0x78] sm:$0xff] %vm3564, %v3499
      %3581 = vst.msk [vmem:[%s391 + $0x80] sm:$0xff] %vm3564, %v3501
      %3582 = vst.msk [vmem:[%s391 + $0x88] sm:$0xff] %vm3564, %v3503
      %3583 = vst.msk [vmem:[%s391 + $0x90] sm:$0xff] %vm3564, %v3505
      %3584 = vst.msk [vmem:[%s391 + $0x98] sm:$0xff] %vm3564, %v3507
      %3585 = vst.msk [vmem:[%s391 + $0xa0] sm:$0xff] %vm3564, %v3509
      %3586 = vst.msk [vmem:[%s391 + $0xa8] sm:$0xff] %vm3564, %v3511
      %3587 = vst.msk [vmem:[%s391 + $0xb0] sm:$0xff] %vm3564, %v3513
      %3588 = vst.msk [vmem:[%s391 + $0xb8] sm:$0xff] %vm3564, %v3515
      %3589 = vst.msk [vmem:[%s391 + $0xc0] sm:$0xff] %vm3564, %v3517
      %3590 = vst.msk [vmem:[%s391 + $0xc8] sm:$0xff] %vm3564, %v3519
      %3591 = vst.msk [vmem:[%s391 + $0xd0] sm:$0xff] %vm3564, %v3521
      %3592 = vst.msk [vmem:[%s391 + $0xd8] sm:$0xff] %vm3564, %v3523
      %3593 = vst.msk [vmem:[%s391 + $0xe0] sm:$0xff] %vm3564, %v3525
      %3594 = vst.msk [vmem:[%s391 + $0xe8] sm:$0xff] %vm3564, %v3527
      %3595 = vst.msk [vmem:[%s391 + $0xf0] sm:$0xff] %vm3564, %v3529
      %3596 = vst.msk [vmem:[%s391 + $0xf8] sm:$0xff] %vm3564, %v3531
      %s3597 = smul.u32 16, %s21
      %p3598 = scmp.lt.s32.totalorder %s20, 1
      %s3599 = scalar_select %p3598, %s20, 1
      %p3600 = scmp.lt.s32.totalorder %s3597, 15
      %s3601 = scalar_select %p3600, %s3597, 15
      %s3602 = smul.addr %s3601, 2
      %s3603 = smul.addr %s3599, 32
      %s3604 = sadd.s32 %s3602, %s3603
      %s3605 = smul.addr %s3604, 8
      %s3606 = scalar_lea.vmem %s5, %s3605
      // Predicated region
      $region41: #{tpu_custom_call.1} parent=39 // pred_check
        %p3607 = pneg %p190
      $region42: #{tpu_custom_call.1} parent=39 // pred_check_branch
        %3609 = sbr.rel (%p3607) target = $region44
      $region43: #{tpu_custom_call.1} parent=39 // pred_region
        %s3610 = smul.u32 16, %s21
      $region44: #{tpu_custom_call.1} parent=39 // pred_fallthru
        _
    $region40: #{tpu_custom_call.1} parent=5 // pred_fallthru
      _
    %p3611 = scmp.le.s32.totalorder 2, %s11
    // Predicated region
    $region45: #{tpu_custom_call.1} parent=5 // pred_check
      %p3612 = pneg %p3611
    $region46: #{tpu_custom_call.1} parent=5 // pred_check_branch
      %3614 = sbr.rel (%p3612) target = $region48
    $region47: #{tpu_custom_call.1} parent=5 // pred_region
      %s3615 = ssub.s32 %s11, 2
      // Predicated region
      $region49: #{tpu_custom_call.1} parent=47 // pred_check
        %p3616 = pneg %p196
      $region50: #{tpu_custom_call.1} parent=47 // pred_check_branch
        %3618 = sbr.rel (%p3616) target = $region52
      $region51: #{tpu_custom_call.1} parent=47 // pred_region
        %s3619 = smul.u32 16, %s23
        %p3620 = scmp.lt.s32.totalorder %s22, 1
        %s3621 = scalar_select %p3620, %s22, 1
        %p3622 = scmp.lt.s32.totalorder %s3619, 15
        %s3623 = scalar_select %p3622, %s3619, 15
        %s3624 = smul.addr %s3623, 2
        %s3625 = smul.addr %s3621, 32
        %s3626 = sadd.s32 %s3624, %s3625
        %s3627 = smul.addr %s3626, 8
        %s3628 = scalar_lea.vmem %s5, %s3627
      $region52: #{tpu_custom_call.1} parent=47 // pred_fallthru
        _
    $region48: #{tpu_custom_call.1} parent=5 // pred_fallthru
      _
  $region6: #{tpu_custom_call.1} parent=0 // loop_footer
    %s15 = sadd.s32 1, %s11
  $region7: #{tpu_custom_call.1} parent=0 // loop_footer_branch
    %10 = sbr.rel target = $region3
  $region8: #{tpu_custom_call.1} parent=0 // loop_exit
    _

</llo_original>
